<compile_context>
chip_gen: v7x
topology: tpu7x:2x2x1
jax: 0.10.0
libtpu: 0.0.40
codegen_flags: <defaults>
</compile_context>

<pallas_src>
import functools

import jax
import jax.numpy as jnp
from jax.experimental import pallas as pl
from jax.experimental.pallas import tpu as pltpu


def _round_up(x, m):
    return ((x + m - 1) // m) * m


# ----------------------------------------------------------------------------
# Pallas kernel: both critic MLPs fused in a single kernel invocation.
# ----------------------------------------------------------------------------
def _twin_critic_kernel(
    s_ref, a_ref,                       # [Bt, S], [Bt, A]
    w1s_ref, w1a_ref, b1_ref,           # [S, 2*H1P], [A, 2*H1P], [1, 2*H1P]
    w2a_ref, b2a_ref,                   # [H1P, H2P], [1, H2P]
    w2b_ref, b2b_ref,                   # [H1P, H2P], [1, H2P]
    w3a_ref, w3b_ref, b3_ref,           # [H2P, 2], [H2P, 2], [1, 2]
    out_ref,                            # [Bt, 2]  (col 0 = q1, col 1 = q2)
):
    s = s_ref[...].astype(jnp.bfloat16)
    a = a_ref[...].astype(jnp.bfloat16)

    # Layer 1 for BOTH critics, fused along the lane axis (concat folded into
    # the kernel as two partial matmuls over the state / action rows of W1).
    h1 = jnp.dot(s, w1s_ref[...], preferred_element_type=jnp.float32)
    h1 = h1 + jnp.dot(a, w1a_ref[...], preferred_element_type=jnp.float32)
    h1 = jnp.maximum(h1 + b1_ref[...], 0.0)          # [Bt, 2*H1P], f32

    h1p = h1.shape[1] // 2
    h1a = h1[:, :h1p].astype(jnp.bfloat16)
    h1b = h1[:, h1p:].astype(jnp.bfloat16)

    # Layer 2 per critic (block-diagonal fusion would double weight DMA bytes).
    h2a = jnp.maximum(
        jnp.dot(h1a, w2a_ref[...], preferred_element_type=jnp.float32) + b2a_ref[...],
        0.0,
    ).astype(jnp.bfloat16)
    h2b = jnp.maximum(
        jnp.dot(h1b, w2b_ref[...], preferred_element_type=jnp.float32) + b2b_ref[...],
        0.0,
    ).astype(jnp.bfloat16)

    # Layer 3 fused: w3a_p carries q1 in column 0 (column 1 is zero), w3b_p
    # carries q2 in column 1, so summing the two dots gives both Q-values in
    # one [Bt, 2] tile (single lane-packed output store).
    q = (
        jnp.dot(h2a, w3a_ref[...], preferred_element_type=jnp.float32)
        + jnp.dot(h2b, w3b_ref[...], preferred_element_type=jnp.float32)
        + b3_ref[...]
    )
    out_ref[...] = q.astype(out_ref.dtype)


# ----------------------------------------------------------------------------
# One-time parameter packing: split W1 (state|action rows), fuse the twin
# critics' layer-1 / layer-3 weights, pad hidden dims to multiples of 128,
# cast weights to bf16 (biases stay f32).
# ----------------------------------------------------------------------------
def pack_params(params, dim_estados, weight_dtype=jnp.bfloat16):
    (w1a, b1a, w2a, b2a, w3a, b3a,
     w1b, b1b, w2b, b2b, w3b, b3b) = params

    D, H1 = w1a.shape
    H2 = w2a.shape[1]
    S = dim_estados
    H1P = _round_up(H1, 128)   # 400 -> 512
    H2P = _round_up(H2, 128)   # 300 -> 384

    def pad_to(x, shape):
        return jnp.pad(x, [(0, t - s) for s, t in zip(x.shape, shape)])

    # Layer 1: both critics fused along the output axis; rows split by input.
    w1a_p = pad_to(w1a, (D, H1P))
    w1b_p = pad_to(w1b, (D, H1P))
    w1_s = jnp.concatenate([w1a_p[:S], w1b_p[:S]], axis=1).astype(weight_dtype)
    w1_a = jnp.concatenate([w1a_p[S:], w1b_p[S:]], axis=1).astype(weight_dtype)
    b1 = jnp.concatenate([pad_to(b1a, (1, H1P)), pad_to(b1b, (1, H1P))], axis=1)

    # Layer 2: per critic, zero-padded (padding is inert: zero bias + ReLU).
    w2a_p = pad_to(w2a, (H1P, H2P)).astype(weight_dtype)
    w2b_p = pad_to(w2b, (H1P, H2P)).astype(weight_dtype)
    b2a_p = pad_to(b2a, (1, H2P))
    b2b_p = pad_to(b2b, (1, H2P))

    # Layer 3: q1 in column 0, q2 in column 1.
    zcol = jnp.zeros((H2P, 1), jnp.float32)
    w3a_p = jnp.concatenate([pad_to(w3a, (H2P, 1)), zcol], axis=1).astype(weight_dtype)
    w3b_p = jnp.concatenate([zcol, pad_to(w3b, (H2P, 1))], axis=1).astype(weight_dtype)
    b3 = jnp.concatenate([b3a, b3b], axis=1)          # (1, 2)

    return (w1_s, w1_a, b1, w2a_p, b2a_p, w2b_p, b2b_p, w3a_p, w3b_p, b3)


# ----------------------------------------------------------------------------
# Wrapper: batch tiled at 128 rows, weights resident in VMEM (~1.2 MiB).
# ----------------------------------------------------------------------------
@functools.partial(jax.jit, static_argnames=("batch_tile",))
def criticos_gemelos_forward(estado, accion, packed, batch_tile=128):
    B, S = estado.shape
    A = accion.shape[1]
    if B % batch_tile != 0:
        raise ValueError(f"batch ({B}) must be a multiple of batch_tile ({batch_tile})")

    (w1_s, w1_a, b1, w2a_p, b2a_p, w2b_p, b2b_p, w3a_p, w3b_p, b3) = packed

    def full2d(arr):
        return pl.BlockSpec(arr.shape, lambda i: (0, 0))

    grid = (B // batch_tile,)

    in_specs = [
        pl.BlockSpec((batch_tile, S), lambda i: (i, 0)),   # estado
        pl.BlockSpec((batch_tile, A), lambda i: (i, 0)),   # accion
        full2d(w1_s), full2d(w1_a), full2d(b1),
        full2d(w2a_p), full2d(b2a_p),
        full2d(w2b_p), full2d(b2b_p),
        full2d(w3a_p), full2d(w3b_p), full2d(b3),
    ]
    out_specs = pl.BlockSpec((batch_tile, 2), lambda i: (i, 0))

    q12 = pl.pallas_call(
        _twin_critic_kernel,
        out_shape=jax.ShapeDtypeStruct((B, 2), jnp.float32),
        grid_spec=pltpu.PrefetchScalarGridSpec(
            num_scalar_prefetch=0,
            grid=grid,
            in_specs=in_specs,
            out_specs=out_specs,
        ),
        compiler_params=pltpu.CompilerParams(
            dimension_semantics=("parallel",),
        ),
    )(estado, accion, w1_s, w1_a, b1, w2a_p, b2a_p, w2b_p, b2b_p, w3a_p, w3b_p, b3)

    return q12[:, 0:1], q12[:, 1:2]


# ----------------------------------------------------------------------------
# Parameter init matching the PyTorch module's shapes (weights stored as
# [in, out], biases as [1, out]); Uniform(-1/sqrt(fan_in), +1/sqrt(fan_in)).
# ----------------------------------------------------------------------------
def init_params(key, dim_estados, dim_acciones):
    d_in = dim_estados + dim_acciones
    sizes = [(d_in, 400), (400, 300), (300, 1)]  # per critic

    params = []
    for _critic in range(2):
        for (fan_in, fan_out) in sizes:
            key, kw, kb = jax.random.split(key, 3)
            bound = 1.0 / jnp.sqrt(jnp.float32(fan_in))
            w = jax.random.uniform(kw, (fan_in, fan_out), jnp.float32, -bound, bound)
            b = jax.random.uniform(kb, (1, fan_out), jnp.float32, -bound, bound)
            params.extend([w, b])
    return tuple(params)


# Pure-JAX reference. With compute_dtype=jnp.float32 this is exactly the
# PyTorch module; with jnp.bfloat16 it matches the kernel's quantization
# (bf16 matmul operands, f32 accumulation) for a tight correctness check.
def reference_forward(estado, accion, params, compute_dtype=jnp.float32):
    xa = jnp.concatenate([estado, accion], axis=1)
    (w1a, b1a, w2a, b2a, w3a, b3a,
     w1b, b1b, w2b, b2b, w3b, b3b) = params

    def lin(x, w, b):
        return jnp.dot(
            x.astype(compute_dtype), w.astype(compute_dtype),
            preferred_element_type=jnp.float32,
        ) + b

    def mlp(w1, b1, w2, b2, w3, b3):
        h1 = jax.nn.relu(lin(xa, w1, b1))
        h2 = jax.nn.relu(lin(h1, w2, b2))
        return lin(h2, w3, b3)

    return (mlp(w1a, b1a, w2a, b2a, w3a, b3a),
            mlp(w1b, b1b, w2b, b2b, w3b, b3b))


if __name__ == "__main__":
    key = jax.random.PRNGKey(0)

    # TD3-style shapes; batch=256 -> grid of 2x128-row tiles (both TCs on v7x).
    batch = 256
    dim_estados = 24
    dim_acciones = 8

    key, k_params, k_s, k_a = jax.random.split(key, 4)
    params = init_params(k_params, dim_estados, dim_acciones)
    packed = pack_params(params, dim_estados)

    estado = jax.random.normal(k_s, (batch, dim_estados), jnp.float32)
    accion = jax.random.normal(k_a, (batch, dim_acciones), jnp.float32)

    q1, q2 = criticos_gemelos_forward(estado, accion, packed)
    jax.block_until_ready((q1, q2))

    # Quantization-matched reference: only accumulation order differs.
    r1, r2 = reference_forward(estado, accion, params, compute_dtype=jnp.bfloat16)
    assert q1.shape == (batch, 1) and q2.shape == (batch, 1)
    assert jnp.allclose(q1, r1, atol=1e-2, rtol=1e-2)
    assert jnp.allclose(q2, r2, atol=1e-2, rtol=1e-2)

    print("KERNEL_OK")
</pallas_src>

<mosaic_0001>
module attributes {stable_mosaic.version = 11 : i64} {
  func.func @_twin_critic_kernel(%arg0: i32, %arg1: memref<128x24xf32, #tpu.memory_space<vmem>>, %arg2: memref<128x8xf32, #tpu.memory_space<vmem>>, %arg3: memref<24x1024xbf16, #tpu.memory_space<vmem>>, %arg4: memref<8x1024xbf16, #tpu.memory_space<vmem>>, %arg5: memref<1x1024xf32, #tpu.memory_space<vmem>>, %arg6: memref<512x384xbf16, #tpu.memory_space<vmem>>, %arg7: memref<1x384xf32, #tpu.memory_space<vmem>>, %arg8: memref<512x384xbf16, #tpu.memory_space<vmem>>, %arg9: memref<1x384xf32, #tpu.memory_space<vmem>>, %arg10: memref<384x2xbf16, #tpu.memory_space<vmem>>, %arg11: memref<384x2xbf16, #tpu.memory_space<vmem>>, %arg12: memref<1x2xf32, #tpu.memory_space<vmem>>, %arg13: memref<128x2xf32, #tpu.memory_space<vmem>>) attributes {dimension_semantics = [#tpu.dimension_semantics<parallel>], iteration_bounds = array<i64: 2>, scalar_prefetch = 0 : i64, scratch_operands = 0 : i64, tpu.core_type = #tpu.core_type<tc>, window_params = [{transform_indices = @transform_0, window_bounds = array<i64: 128, 24>}, {transform_indices = @transform_1, window_bounds = array<i64: 128, 8>}, {pipeline_mode = #tpu.pipeline_mode<synchronous>, transform_indices = @transform_2, window_bounds = array<i64: 24, 1024>}, {pipeline_mode = #tpu.pipeline_mode<synchronous>, transform_indices = @transform_3, window_bounds = array<i64: 8, 1024>}, {pipeline_mode = #tpu.pipeline_mode<synchronous>, transform_indices = @transform_4, window_bounds = array<i64: 1, 1024>}, {pipeline_mode = #tpu.pipeline_mode<synchronous>, transform_indices = @transform_5, window_bounds = array<i64: 512, 384>}, {pipeline_mode = #tpu.pipeline_mode<synchronous>, transform_indices = @transform_6, window_bounds = array<i64: 1, 384>}, {pipeline_mode = #tpu.pipeline_mode<synchronous>, transform_indices = @transform_7, window_bounds = array<i64: 512, 384>}, {pipeline_mode = #tpu.pipeline_mode<synchronous>, transform_indices = @transform_8, window_bounds = array<i64: 1, 384>}, {pipeline_mode = #tpu.pipeline_mode<synchronous>, transform_indices = @transform_9, window_bounds = array<i64: 384, 2>}, {pipeline_mode = #tpu.pipeline_mode<synchronous>, transform_indices = @transform_10, window_bounds = array<i64: 384, 2>}, {pipeline_mode = #tpu.pipeline_mode<synchronous>, transform_indices = @transform_11, window_bounds = array<i64: 1, 2>}, {transform_indices = @transform_12, window_bounds = array<i64: 128, 2>}]} {
    %c0 = arith.constant 0 : index
    %c0_0 = arith.constant 0 : index
    %0 = vector.load %arg1[%c0, %c0_0] : memref<128x24xf32, #tpu.memory_space<vmem>>, vector<128x24xf32>
    %1 = arith.truncf %0 : vector<128x24xf32> to vector<128x24xbf16>
    %c0_1 = arith.constant 0 : index
    %c0_2 = arith.constant 0 : index
    %2 = vector.load %arg2[%c0_1, %c0_2] : memref<128x8xf32, #tpu.memory_space<vmem>>, vector<128x8xf32>
    %3 = arith.truncf %2 : vector<128x8xf32> to vector<128x8xbf16>
    %c0_3 = arith.constant 0 : index
    %c0_4 = arith.constant 0 : index
    %4 = vector.load %arg3[%c0_3, %c0_4] : memref<24x1024xbf16, #tpu.memory_space<vmem>>, vector<24x1024xbf16>
    %cst = arith.constant dense<0.000000e+00> : vector<128x1024xf32>
    %5 = tpu.matmul %1, %4, %cst {dimension_numbers = #tpu.dot_dimension_numbers<[1], [0], [0], [1], [0, 0, 1, 1], [], []>} : vector<128x24xbf16>, vector<24x1024xbf16>, vector<128x1024xf32> -> vector<128x1024xf32>
    %c0_5 = arith.constant 0 : index
    %c0_6 = arith.constant 0 : index
    %6 = vector.load %arg4[%c0_5, %c0_6] : memref<8x1024xbf16, #tpu.memory_space<vmem>>, vector<8x1024xbf16>
    %cst_7 = arith.constant dense<0.000000e+00> : vector<128x1024xf32>
    %7 = tpu.matmul %3, %6, %cst_7 {dimension_numbers = #tpu.dot_dimension_numbers<[1], [0], [0], [1], [0, 0, 1, 1], [], []>} : vector<128x8xbf16>, vector<8x1024xbf16>, vector<128x1024xf32> -> vector<128x1024xf32>
    %8 = arith.addf %5, %7 : vector<128x1024xf32>
    %c0_8 = arith.constant 0 : index
    %c0_9 = arith.constant 0 : index
    %9 = vector.load %arg5[%c0_8, %c0_9] : memref<1x1024xf32, #tpu.memory_space<vmem>>, vector<1x1024xf32>
    %10 = vector.broadcast %9 : vector<1x1024xf32> to vector<128x1024xf32>
    %11 = arith.addf %8, %10 : vector<128x1024xf32>
    %cst_10 = arith.constant 0.000000e+00 : f32
    %12 = vector.broadcast %cst_10 : f32 to vector<128x1024xf32>
    %13 = arith.maximumf %11, %12 : vector<128x1024xf32>
    %14 = vector.extract_strided_slice %13 {offsets = [0, 0], sizes = [128, 512], strides = [1, 1]} : vector<128x1024xf32> to vector<128x512xf32>
    %15 = arith.truncf %14 : vector<128x512xf32> to vector<128x512xbf16>
    %16 = vector.extract_strided_slice %13 {offsets = [0, 512], sizes = [128, 512], strides = [1, 1]} : vector<128x1024xf32> to vector<128x512xf32>
    %17 = arith.truncf %16 : vector<128x512xf32> to vector<128x512xbf16>
    %c0_11 = arith.constant 0 : index
    %c0_12 = arith.constant 0 : index
    %18 = vector.load %arg6[%c0_11, %c0_12] : memref<512x384xbf16, #tpu.memory_space<vmem>>, vector<512x384xbf16>
    %cst_13 = arith.constant dense<0.000000e+00> : vector<128x384xf32>
    %19 = tpu.matmul %15, %18, %cst_13 {dimension_numbers = #tpu.dot_dimension_numbers<[1], [0], [0], [1], [0, 0, 1, 1], [], []>} : vector<128x512xbf16>, vector<512x384xbf16>, vector<128x384xf32> -> vector<128x384xf32>
    %c0_14 = arith.constant 0 : index
    %c0_15 = arith.constant 0 : index
    %20 = vector.load %arg7[%c0_14, %c0_15] : memref<1x384xf32, #tpu.memory_space<vmem>>, vector<1x384xf32>
    %21 = vector.broadcast %20 : vector<1x384xf32> to vector<128x384xf32>
    %22 = arith.addf %19, %21 : vector<128x384xf32>
    %cst_16 = arith.constant 0.000000e+00 : f32
    %23 = vector.broadcast %cst_16 : f32 to vector<128x384xf32>
    %24 = arith.maximumf %22, %23 : vector<128x384xf32>
    %25 = arith.truncf %24 : vector<128x384xf32> to vector<128x384xbf16>
    %c0_17 = arith.constant 0 : index
    %c0_18 = arith.constant 0 : index
    %26 = vector.load %arg8[%c0_17, %c0_18] : memref<512x384xbf16, #tpu.memory_space<vmem>>, vector<512x384xbf16>
    %cst_19 = arith.constant dense<0.000000e+00> : vector<128x384xf32>
    %27 = tpu.matmul %17, %26, %cst_19 {dimension_numbers = #tpu.dot_dimension_numbers<[1], [0], [0], [1], [0, 0, 1, 1], [], []>} : vector<128x512xbf16>, vector<512x384xbf16>, vector<128x384xf32> -> vector<128x384xf32>
    %c0_20 = arith.constant 0 : index
    %c0_21 = arith.constant 0 : index
    %28 = vector.load %arg9[%c0_20, %c0_21] : memref<1x384xf32, #tpu.memory_space<vmem>>, vector<1x384xf32>
    %29 = vector.broadcast %28 : vector<1x384xf32> to vector<128x384xf32>
    %30 = arith.addf %27, %29 : vector<128x384xf32>
    %cst_22 = arith.constant 0.000000e+00 : f32
    %31 = vector.broadcast %cst_22 : f32 to vector<128x384xf32>
    %32 = arith.maximumf %30, %31 : vector<128x384xf32>
    %33 = arith.truncf %32 : vector<128x384xf32> to vector<128x384xbf16>
    %c0_23 = arith.constant 0 : index
    %c0_24 = arith.constant 0 : index
    %34 = vector.load %arg10[%c0_23, %c0_24] : memref<384x2xbf16, #tpu.memory_space<vmem>>, vector<384x2xbf16>
    %cst_25 = arith.constant dense<0.000000e+00> : vector<128x2xf32>
    %35 = tpu.matmul %25, %34, %cst_25 {dimension_numbers = #tpu.dot_dimension_numbers<[1], [0], [0], [1], [0, 0, 1, 1], [], []>} : vector<128x384xbf16>, vector<384x2xbf16>, vector<128x2xf32> -> vector<128x2xf32>
    %c0_26 = arith.constant 0 : index
    %c0_27 = arith.constant 0 : index
    %36 = vector.load %arg11[%c0_26, %c0_27] : memref<384x2xbf16, #tpu.memory_space<vmem>>, vector<384x2xbf16>
    %cst_28 = arith.constant dense<0.000000e+00> : vector<128x2xf32>
    %37 = tpu.matmul %33, %36, %cst_28 {dimension_numbers = #tpu.dot_dimension_numbers<[1], [0], [0], [1], [0, 0, 1, 1], [], []>} : vector<128x384xbf16>, vector<384x2xbf16>, vector<128x2xf32> -> vector<128x2xf32>
    %38 = arith.addf %35, %37 : vector<128x2xf32>
    %c0_29 = arith.constant 0 : index
    %c0_30 = arith.constant 0 : index
    %39 = vector.load %arg12[%c0_29, %c0_30] : memref<1x2xf32, #tpu.memory_space<vmem>>, vector<1x2xf32>
    %40 = vector.broadcast %39 : vector<1x2xf32> to vector<128x2xf32>
    %41 = arith.addf %38, %40 : vector<128x2xf32>
    %c0_31 = arith.constant 0 : index
    %c0_32 = arith.constant 0 : index
    %42 = vector.load %arg13[%c0_31, %c0_32] : memref<128x2xf32, #tpu.memory_space<vmem>>, vector<128x2xf32>
    tpu.vector_store %arg13[%c0_31, %c0_32], %41 {strides = array<i32>} : memref<128x2xf32, #tpu.memory_space<vmem>>, vector<128x2xf32>,
    return
  }
  func.func @transform_0(%arg0: i32) -> (i32, i32) {
    %c0_i32 = arith.constant 0 : i32
    %c0_i32_0 = arith.constant 0 : i32
    return %arg0, %c0_i32 : i32, i32
  }
  func.func @transform_1(%arg0: i32) -> (i32, i32) {
    %c0_i32 = arith.constant 0 : i32
    %c0_i32_0 = arith.constant 0 : i32
    return %arg0, %c0_i32 : i32, i32
  }
  func.func @transform_2(%arg0: i32) -> (i32, i32) {
    %c0_i32 = arith.constant 0 : i32
    %c0_i32_0 = arith.constant 0 : i32
    %c0_i32_1 = arith.constant 0 : i32
    return %c0_i32, %c0_i32_0 : i32, i32
  }
  func.func @transform_3(%arg0: i32) -> (i32, i32) {
    %c0_i32 = arith.constant 0 : i32
    %c0_i32_0 = arith.constant 0 : i32
    %c0_i32_1 = arith.constant 0 : i32
    return %c0_i32, %c0_i32_0 : i32, i32
  }
  func.func @transform_4(%arg0: i32) -> (i32, i32) {
    %c0_i32 = arith.constant 0 : i32
    %c0_i32_0 = arith.constant 0 : i32
    %c0_i32_1 = arith.constant 0 : i32
    return %c0_i32, %c0_i32_0 : i32, i32
  }
  func.func @transform_5(%arg0: i32) -> (i32, i32) {
    %c0_i32 = arith.constant 0 : i32
    %c0_i32_0 = arith.constant 0 : i32
    %c0_i32_1 = arith.constant 0 : i32
    return %c0_i32, %c0_i32_0 : i32, i32
  }
  func.func @transform_6(%arg0: i32) -> (i32, i32) {
    %c0_i32 = arith.constant 0 : i32
    %c0_i32_0 = arith.constant 0 : i32
    %c0_i32_1 = arith.constant 0 : i32
    return %c0_i32, %c0_i32_0 : i32, i32
  }
  func.func @transform_7(%arg0: i32) -> (i32, i32) {
    %c0_i32 = arith.constant 0 : i32
    %c0_i32_0 = arith.constant 0 : i32
    %c0_i32_1 = arith.constant 0 : i32
    return %c0_i32, %c0_i32_0 : i32, i32
  }
  func.func @transform_8(%arg0: i32) -> (i32, i32) {
    %c0_i32 = arith.constant 0 : i32
    %c0_i32_0 = arith.constant 0 : i32
    %c0_i32_1 = arith.constant 0 : i32
    return %c0_i32, %c0_i32_0 : i32, i32
  }
  func.func @transform_9(%arg0: i32) -> (i32, i32) {
    %c0_i32 = arith.constant 0 : i32
    %c0_i32_0 = arith.constant 0 : i32
    %c0_i32_1 = arith.constant 0 : i32
    return %c0_i32, %c0_i32_0 : i32, i32
  }
  func.func @transform_10(%arg0: i32) -> (i32, i32) {
    %c0_i32 = arith.constant 0 : i32
    %c0_i32_0 = arith.constant 0 : i32
    %c0_i32_1 = arith.constant 0 : i32
    return %c0_i32, %c0_i32_0 : i32, i32
  }
  func.func @transform_11(%arg0: i32) -> (i32, i32) {
    %c0_i32 = arith.constant 0 : i32
    %c0_i32_0 = arith.constant 0 : i32
    %c0_i32_1 = arith.constant 0 : i32
    return %c0_i32, %c0_i32_0 : i32, i32
  }
  func.func @transform_12(%arg0: i32) -> (i32, i32) {
    %c0_i32 = arith.constant 0 : i32
    %c0_i32_0 = arith.constant 0 : i32
    return %arg0, %c0_i32 : i32, i32
  }
}

</mosaic_0001>

<llo_original>
// kernel: criticos_gemelos_forward.1
$region0: #{criticos_gemelos_forward.1}
  #allocation0 [shape = 'u32[]', space=smem, size = 0x4, offset = 0x4, fixed_abs, tag = 'smem constant byte address 0x4 - core index']
  #allocation1 [shape = 'u32[144,128]{1,0:T(1,128)}', space=vmem, size = 0x12000, scoped, tag = 'internal scratch']
  %s0 = inlined_call_operand.vmem [shape: f32[256,24], index: 0, kind: input, shape index: {}]
  %s1 = inlined_call_operand.vmem [shape: f32[256,8], index: 1, kind: input, shape index: {}]
  %s2 = inlined_call_operand.vmem [shape: bf16[24,1024], index: 2, kind: input, shape index: {}]
  %s3 = inlined_call_operand.vmem [shape: bf16[8,1024], index: 3, kind: input, shape index: {}]
  %s4 = inlined_call_operand.vmem [shape: f32[1,1024], index: 4, kind: input, shape index: {}]
  %s5 = inlined_call_operand.vmem [shape: bf16[512,384], index: 5, kind: input, shape index: {}]
  %s6 = inlined_call_operand.vmem [shape: f32[1,384], index: 6, kind: input, shape index: {}]
  %s7 = inlined_call_operand.hbm [shape: bf16[512,384], index: 7, kind: input, shape index: {}]
  %s8 = inlined_call_operand.vmem [shape: f32[1,384], index: 8, kind: input, shape index: {}]
  %s9 = inlined_call_operand.vmem [shape: bf16[384,2], index: 9, kind: input, shape index: {}]
  %s10 = inlined_call_operand.vmem [shape: bf16[384,2], index: 10, kind: input, shape index: {}]
  %s11 = inlined_call_operand.vmem [shape: f32[1,2], index: 11, kind: input, shape index: {}]
  %s12 = inlined_call_operand.vmem [shape: f32[256,2], index: 12, kind: output, shape index: {}]
  %s13 = sld [smem:[#allocation0]]
  $region85: #{criticos_gemelos_forward.1} parent=0
    _
  %s15 = ssub.s32 1, %s13
  %s16 = scalar_select 0, %s15, %s13
  $region1: #{criticos_gemelos_forward.1} parent=0
    #allocation2 [shape = 'u8[393216]{0}', space=vmem, size = 0x60000, scoped, tag = 'input window, operand 7, single buffered']
    #allocation3 [shape = 's32[2]{0}', space=sflag, size = 0x8, scoped, tag = 'scoped memory for criticos_gemelos_forward.1']
    %17 = vsyncpa [#allocation3], 0
    loop: start=0, step=1, limit=4
    $region2: #{criticos_gemelos_forward.1} parent=1 // loop_pre_header
      _
    $region3: #{criticos_gemelos_forward.1} parent=1 // loop_header
      %s19 = sphi 0, %s23
      %p20 = scmp.ge.s32.totalorder %s19, 4
      %s29 = sphi 0, %s31
      %s32 = sphi 0, %s29
      %s33 = sphi 0, %s32
      %s49 = sphi 0, %s33
      %s55 = sphi 0, %s57
      %s58 = sphi 0, %s55
      %s59 = sphi 0, %s58
      %s75 = sphi 0, %s59
      %s79 = sphi 0, %s79
      %s81 = sphi 0, %s79
      %s82 = sphi 0, %s81
      %s96 = sphi 0, %s82
      %s100 = sphi 0, %s100
      %s102 = sphi 0, %s100
      %s103 = sphi 0, %s102
      %s117 = sphi 0, %s103
      %s121 = sphi 0, %s121
      %s123 = sphi 0, %s121
      %s124 = sphi 0, %s123
      %s138 = sphi 0, %s124
      %s142 = sphi 0, %s142
      %s144 = sphi 0, %s142
      %s145 = sphi 0, %s144
      %s159 = sphi 0, %s145
      %s163 = sphi 0, %s163
      %s165 = sphi 0, %s163
      %s166 = sphi 0, %s165
      %s180 = sphi 0, %s166
      %s184 = sphi 0, %s184
      %s186 = sphi 0, %s184
      %s187 = sphi 0, %s186
      %s201 = sphi 0, %s187
      %s205 = sphi 0, %s205
      %s207 = sphi 0, %s205
      %s208 = sphi 0, %s207
      %s222 = sphi 0, %s208
      %s226 = sphi 0, %s226
      %s228 = sphi 0, %s226
      %s229 = sphi 0, %s228
      %s243 = sphi 0, %s229
      %s247 = sphi 0, %s247
      %s249 = sphi 0, %s247
      %s250 = sphi 0, %s249
      %s264 = sphi 0, %s250
      %s268 = sphi 0, %s268
      %s270 = sphi 0, %s268
      %s271 = sphi 0, %s270
      %s285 = sphi 0, %s271
      %s291 = sphi 0, %s293
      %s294 = sphi 0, %s291
      %s295 = sphi 0, %s294
      %s311 = sphi 0, %s295
    $region4: #{criticos_gemelos_forward.1} parent=1 // loop_header_branch
      %22 = sbr.rel (%p20) target = $region8
    $region5: #{criticos_gemelos_forward.1} parent=1 // loop_body
      %s24 = ssub.s32 %s19, 1
      %s25 = ssub.s32 %s19, 2
      %s26 = sadd.s32 %s19, 1
      %s27 = ssub.s32 %s19, %s26
      %p28 = scmp.eq.s32.totalorder %s27, 0
      %s30 = sadd.s32 %s29, 1
      %s31 = scalar_select %p28, %s29, %s30
      %p34 = pneg %p28
      %p35 = scmp.eq.s32.totalorder %s19, 1
      %p36 = por %p34, %p35
      %p37 = scmp.ne.s32.totalorder %s29, %s32
      %p38 = scmp.eq.s32.totalorder %s19, 0
      %p39 = por %p37, %p38
      %p40 = scmp.ne.s32.totalorder %s29, %s32
      %p41 = scmp.eq.s32.totalorder %s24, 1
      %p42 = por %p40, %p41
      %p43 = scmp.ne.s32.totalorder %s32, %s33
      %p44 = scmp.eq.s32.totalorder %s24, 0
      %p45 = por %p43, %p44
      %p46 = scmp.ne.s32.totalorder %s32, %s33
      %p47 = scmp.eq.s32.totalorder %s25, 1
      %p48 = por %p46, %p47
      %p50 = scmp.ne.s32.totalorder %s33, %s49
      %p51 = scmp.eq.s32.totalorder %s25, 0
      %p52 = por %p50, %p51
      %s53 = ssub.s32 %s19, %s26
      %p54 = scmp.eq.s32.totalorder %s53, 0
      %s56 = sadd.s32 %s55, 1
      %s57 = scalar_select %p54, %s55, %s56
      %p60 = pneg %p54
      %p61 = scmp.eq.s32.totalorder %s19, 1
      %p62 = por %p60, %p61
      %p63 = scmp.ne.s32.totalorder %s55, %s58
      %p64 = scmp.eq.s32.totalorder %s19, 0
      %p65 = por %p63, %p64
      %p66 = scmp.ne.s32.totalorder %s55, %s58
      %p67 = scmp.eq.s32.totalorder %s24, 1
      %p68 = por %p66, %p67
      %p69 = scmp.ne.s32.totalorder %s58, %s59
      %p70 = scmp.eq.s32.totalorder %s24, 0
      %p71 = por %p69, %p70
      %p72 = scmp.ne.s32.totalorder %s58, %s59
      %p73 = scmp.eq.s32.totalorder %s25, 1
      %p74 = por %p72, %p73
      %p76 = scmp.ne.s32.totalorder %s59, %s75
      %p77 = scmp.eq.s32.totalorder %s25, 0
      %p78 = por %p76, %p77
      %s80 = sadd.s32 %s79, 1
      %p83 = scmp.eq.s32.totalorder %s19, 1
      %p84 = scmp.ne.s32.totalorder %s79, %s81
      %p85 = scmp.eq.s32.totalorder %s19, 0
      %p86 = por %p84, %p85
      %p87 = scmp.ne.s32.totalorder %s79, %s81
      %p88 = scmp.eq.s32.totalorder %s24, 1
      %p89 = por %p87, %p88
      %p90 = scmp.ne.s32.totalorder %s81, %s82
      %p91 = scmp.eq.s32.totalorder %s24, 0
      %p92 = por %p90, %p91
      %p93 = scmp.ne.s32.totalorder %s81, %s82
      %p94 = scmp.eq.s32.totalorder %s25, 1
      %p95 = por %p93, %p94
      %p97 = scmp.ne.s32.totalorder %s82, %s96
      %p98 = scmp.eq.s32.totalorder %s25, 0
      %p99 = por %p97, %p98
      %s101 = sadd.s32 %s100, 1
      %p104 = scmp.eq.s32.totalorder %s19, 1
      %p105 = scmp.ne.s32.totalorder %s100, %s102
      %p106 = scmp.eq.s32.totalorder %s19, 0
      %p107 = por %p105, %p106
      %p108 = scmp.ne.s32.totalorder %s100, %s102
      %p109 = scmp.eq.s32.totalorder %s24, 1
      %p110 = por %p108, %p109
      %p111 = scmp.ne.s32.totalorder %s102, %s103
      %p112 = scmp.eq.s32.totalorder %s24, 0
      %p113 = por %p111, %p112
      %p114 = scmp.ne.s32.totalorder %s102, %s103
      %p115 = scmp.eq.s32.totalorder %s25, 1
      %p116 = por %p114, %p115
      %p118 = scmp.ne.s32.totalorder %s103, %s117
      %p119 = scmp.eq.s32.totalorder %s25, 0
      %p120 = por %p118, %p119
      %s122 = sadd.s32 %s121, 1
      %p125 = scmp.eq.s32.totalorder %s19, 1
      %p126 = scmp.ne.s32.totalorder %s121, %s123
      %p127 = scmp.eq.s32.totalorder %s19, 0
      %p128 = por %p126, %p127
      %p129 = scmp.ne.s32.totalorder %s121, %s123
      %p130 = scmp.eq.s32.totalorder %s24, 1
      %p131 = por %p129, %p130
      %p132 = scmp.ne.s32.totalorder %s123, %s124
      %p133 = scmp.eq.s32.totalorder %s24, 0
      %p134 = por %p132, %p133
      %p135 = scmp.ne.s32.totalorder %s123, %s124
      %p136 = scmp.eq.s32.totalorder %s25, 1
      %p137 = por %p135, %p136
      %p139 = scmp.ne.s32.totalorder %s124, %s138
      %p140 = scmp.eq.s32.totalorder %s25, 0
      %p141 = por %p139, %p140
      %s143 = sadd.s32 %s142, 1
      %p146 = scmp.eq.s32.totalorder %s19, 1
      %p147 = scmp.ne.s32.totalorder %s142, %s144
      %p148 = scmp.eq.s32.totalorder %s19, 0
      %p149 = por %p147, %p148
      %p150 = scmp.ne.s32.totalorder %s142, %s144
      %p151 = scmp.eq.s32.totalorder %s24, 1
      %p152 = por %p150, %p151
      %p153 = scmp.ne.s32.totalorder %s144, %s145
      %p154 = scmp.eq.s32.totalorder %s24, 0
      %p155 = por %p153, %p154
      %p156 = scmp.ne.s32.totalorder %s144, %s145
      %p157 = scmp.eq.s32.totalorder %s25, 1
      %p158 = por %p156, %p157
      %p160 = scmp.ne.s32.totalorder %s145, %s159
      %p161 = scmp.eq.s32.totalorder %s25, 0
      %p162 = por %p160, %p161
      %s164 = sadd.s32 %s163, 1
      %p167 = scmp.eq.s32.totalorder %s19, 1
      %p168 = scmp.ne.s32.totalorder %s163, %s165
      %p169 = scmp.eq.s32.totalorder %s19, 0
      %p170 = por %p168, %p169
      %p171 = scmp.ne.s32.totalorder %s163, %s165
      %p172 = scmp.eq.s32.totalorder %s24, 1
      %p173 = por %p171, %p172
      %p174 = scmp.ne.s32.totalorder %s165, %s166
      %p175 = scmp.eq.s32.totalorder %s24, 0
      %p176 = por %p174, %p175
      %p177 = scmp.ne.s32.totalorder %s165, %s166
      %p178 = scmp.eq.s32.totalorder %s25, 1
      %p179 = por %p177, %p178
      %p181 = scmp.ne.s32.totalorder %s166, %s180
      %p182 = scmp.eq.s32.totalorder %s25, 0
      %p183 = por %p181, %p182
      %s185 = sadd.s32 %s184, 1
      %p188 = scmp.eq.s32.totalorder %s19, 1
      %p189 = scmp.ne.s32.totalorder %s184, %s186
      %p190 = scmp.eq.s32.totalorder %s19, 0
      %p191 = por %p189, %p190
      %p192 = scmp.ne.s32.totalorder %s184, %s186
      %p193 = scmp.eq.s32.totalorder %s24, 1
      %p194 = por %p192, %p193
      %p195 = scmp.ne.s32.totalorder %s186, %s187
      %p196 = scmp.eq.s32.totalorder %s24, 0
      %p197 = por %p195, %p196
      %p198 = scmp.ne.s32.totalorder %s186, %s187
      %p199 = scmp.eq.s32.totalorder %s25, 1
      %p200 = por %p198, %p199
      %p202 = scmp.ne.s32.totalorder %s187, %s201
      %p203 = scmp.eq.s32.totalorder %s25, 0
      %p204 = por %p202, %p203
      %s206 = sadd.s32 %s205, 1
      %p209 = scmp.eq.s32.totalorder %s19, 1
      %p210 = scmp.ne.s32.totalorder %s205, %s207
      %p211 = scmp.eq.s32.totalorder %s19, 0
      %p212 = por %p210, %p211
      %p213 = scmp.ne.s32.totalorder %s205, %s207
      %p214 = scmp.eq.s32.totalorder %s24, 1
      %p215 = por %p213, %p214
      %p216 = scmp.ne.s32.totalorder %s207, %s208
      %p217 = scmp.eq.s32.totalorder %s24, 0
      %p218 = por %p216, %p217
      %p219 = scmp.ne.s32.totalorder %s207, %s208
      %p220 = scmp.eq.s32.totalorder %s25, 1
      %p221 = por %p219, %p220
      %p223 = scmp.ne.s32.totalorder %s208, %s222
      %p224 = scmp.eq.s32.totalorder %s25, 0
      %p225 = por %p223, %p224
      %s227 = sadd.s32 %s226, 1
      %p230 = scmp.eq.s32.totalorder %s19, 1
      %p231 = scmp.ne.s32.totalorder %s226, %s228
      %p232 = scmp.eq.s32.totalorder %s19, 0
      %p233 = por %p231, %p232
      %p234 = scmp.ne.s32.totalorder %s226, %s228
      %p235 = scmp.eq.s32.totalorder %s24, 1
      %p236 = por %p234, %p235
      %p237 = scmp.ne.s32.totalorder %s228, %s229
      %p238 = scmp.eq.s32.totalorder %s24, 0
      %p239 = por %p237, %p238
      %p240 = scmp.ne.s32.totalorder %s228, %s229
      %p241 = scmp.eq.s32.totalorder %s25, 1
      %p242 = por %p240, %p241
      %p244 = scmp.ne.s32.totalorder %s229, %s243
      %p245 = scmp.eq.s32.totalorder %s25, 0
      %p246 = por %p244, %p245
      %s248 = sadd.s32 %s247, 1
      %p251 = scmp.eq.s32.totalorder %s19, 1
      %p252 = scmp.ne.s32.totalorder %s247, %s249
      %p253 = scmp.eq.s32.totalorder %s19, 0
      %p254 = por %p252, %p253
      %p255 = scmp.ne.s32.totalorder %s247, %s249
      %p256 = scmp.eq.s32.totalorder %s24, 1
      %p257 = por %p255, %p256
      %p258 = scmp.ne.s32.totalorder %s249, %s250
      %p259 = scmp.eq.s32.totalorder %s24, 0
      %p260 = por %p258, %p259
      %p261 = scmp.ne.s32.totalorder %s249, %s250
      %p262 = scmp.eq.s32.totalorder %s25, 1
      %p263 = por %p261, %p262
      %p265 = scmp.ne.s32.totalorder %s250, %s264
      %p266 = scmp.eq.s32.totalorder %s25, 0
      %p267 = por %p265, %p266
      %s269 = sadd.s32 %s268, 1
      %p272 = scmp.eq.s32.totalorder %s19, 1
      %p273 = scmp.ne.s32.totalorder %s268, %s270
      %p274 = scmp.eq.s32.totalorder %s19, 0
      %p275 = por %p273, %p274
      %p276 = scmp.ne.s32.totalorder %s268, %s270
      %p277 = scmp.eq.s32.totalorder %s24, 1
      %p278 = por %p276, %p277
      %p279 = scmp.ne.s32.totalorder %s270, %s271
      %p280 = scmp.eq.s32.totalorder %s24, 0
      %p281 = por %p279, %p280
      %p282 = scmp.ne.s32.totalorder %s270, %s271
      %p283 = scmp.eq.s32.totalorder %s25, 1
      %p284 = por %p282, %p283
      %p286 = scmp.ne.s32.totalorder %s271, %s285
      %p287 = scmp.eq.s32.totalorder %s25, 0
      %p288 = por %p286, %p287
      %s289 = ssub.s32 %s19, %s26
      %p290 = scmp.eq.s32.totalorder %s289, 0
      %s292 = sadd.s32 %s291, 1
      %s293 = scalar_select %p290, %s291, %s292
      %p296 = pneg %p290
      %p297 = scmp.eq.s32.totalorder %s19, 1
      %p298 = por %p296, %p297
      %p299 = scmp.ne.s32.totalorder %s291, %s294
      %p300 = scmp.eq.s32.totalorder %s19, 0
      %p301 = por %p299, %p300
      %p302 = scmp.ne.s32.totalorder %s291, %s294
      %p303 = scmp.eq.s32.totalorder %s24, 1
      %p304 = por %p302, %p303
      %p305 = scmp.ne.s32.totalorder %s294, %s295
      %p306 = scmp.eq.s32.totalorder %s24, 0
      %p307 = por %p305, %p306
      %p308 = scmp.ne.s32.totalorder %s294, %s295
      %p309 = scmp.eq.s32.totalorder %s25, 1
      %p310 = por %p308, %p309
      %p312 = scmp.ne.s32.totalorder %s295, %s311
      %p313 = scmp.eq.s32.totalorder %s25, 0
      %p314 = por %p312, %p313
      %p315 = scmp.le.s32.totalorder 1, %s19
      %p316 = scmp.lt.s32.totalorder %s19, 3
      %p317 = pnand %p315, %p316
      %p318 = pneg %p317
      // Predicated region
      $region9: #{criticos_gemelos_forward.1} parent=5 // pred_check
        _
      $region10: #{criticos_gemelos_forward.1} parent=5 // pred_check_branch
        %320 = sbr.rel (%p317) target = $region12
      $region11: #{criticos_gemelos_forward.1} parent=5 // pred_region
        %s321 = ssub.s32 %s19, 1
        // Predicated region
        $region13: #{criticos_gemelos_forward.1} parent=11 // pred_check
          %p322 = pneg %p92
        $region14: #{criticos_gemelos_forward.1} parent=11 // pred_check_branch
          %324 = sbr.rel (%p322) target = $region16
        $region15: #{criticos_gemelos_forward.1} parent=11 // pred_region
          _
        $region16: #{criticos_gemelos_forward.1} parent=11 // pred_fallthru
          _
        // Predicated region
        $region17: #{criticos_gemelos_forward.1} parent=11 // pred_check
          %p325 = pneg %p113
        $region18: #{criticos_gemelos_forward.1} parent=11 // pred_check_branch
          %327 = sbr.rel (%p325) target = $region20
        $region19: #{criticos_gemelos_forward.1} parent=11 // pred_region
          _
        $region20: #{criticos_gemelos_forward.1} parent=11 // pred_fallthru
          _
        // Predicated region
        $region21: #{criticos_gemelos_forward.1} parent=11 // pred_check
          %p328 = pneg %p134
        $region22: #{criticos_gemelos_forward.1} parent=11 // pred_check_branch
          %330 = sbr.rel (%p328) target = $region24
        $region23: #{criticos_gemelos_forward.1} parent=11 // pred_region
          _
        $region24: #{criticos_gemelos_forward.1} parent=11 // pred_fallthru
          _
        // Predicated region
        $region25: #{criticos_gemelos_forward.1} parent=11 // pred_check
          %p331 = pneg %p155
        $region26: #{criticos_gemelos_forward.1} parent=11 // pred_check_branch
          %333 = sbr.rel (%p331) target = $region28
        $region27: #{criticos_gemelos_forward.1} parent=11 // pred_region
          _
        $region28: #{criticos_gemelos_forward.1} parent=11 // pred_fallthru
          _
        // Predicated region
        $region29: #{criticos_gemelos_forward.1} parent=11 // pred_check
          %p334 = pneg %p176
        $region30: #{criticos_gemelos_forward.1} parent=11 // pred_check_branch
          %336 = sbr.rel (%p334) target = $region32
        $region31: #{criticos_gemelos_forward.1} parent=11 // pred_region
          _
        $region32: #{criticos_gemelos_forward.1} parent=11 // pred_fallthru
          _
        // Predicated region
        $region33: #{criticos_gemelos_forward.1} parent=11 // pred_check
          %p337 = pneg %p197
        $region34: #{criticos_gemelos_forward.1} parent=11 // pred_check_branch
          %339 = sbr.rel (%p337) target = $region36
        $region35: #{criticos_gemelos_forward.1} parent=11 // pred_region
          %s341 = ssub.s32 12288, 12288
          %342 = vsyncadd [#allocation3], %s341
          %s343 = sshll.u32 [#allocation2], 4
          %s344 = int_to_ptr.vmem [resolvable:$true] %s343
          %349 = dma.hbm_to_vmem [thread:$0]  %s7, 12288, %s344, [#allocation3], 192, 192, 12
        $region36: #{criticos_gemelos_forward.1} parent=11 // pred_fallthru
          _
        // Predicated region
        $region37: #{criticos_gemelos_forward.1} parent=11 // pred_check
          %p350 = pneg %p218
        $region38: #{criticos_gemelos_forward.1} parent=11 // pred_check_branch
          %352 = sbr.rel (%p350) target = $region40
        $region39: #{criticos_gemelos_forward.1} parent=11 // pred_region
          _
        $region40: #{criticos_gemelos_forward.1} parent=11 // pred_fallthru
          _
        // Predicated region
        $region41: #{criticos_gemelos_forward.1} parent=11 // pred_check
          %p353 = pneg %p239
        $region42: #{criticos_gemelos_forward.1} parent=11 // pred_check_branch
          %355 = sbr.rel (%p353) target = $region44
        $region43: #{criticos_gemelos_forward.1} parent=11 // pred_region
          _
        $region44: #{criticos_gemelos_forward.1} parent=11 // pred_fallthru
          _
        // Predicated region
        $region45: #{criticos_gemelos_forward.1} parent=11 // pred_check
          %p356 = pneg %p260
        $region46: #{criticos_gemelos_forward.1} parent=11 // pred_check_branch
          %358 = sbr.rel (%p356) target = $region48
        $region47: #{criticos_gemelos_forward.1} parent=11 // pred_region
          _
        $region48: #{criticos_gemelos_forward.1} parent=11 // pred_fallthru
          _
        // Predicated region
        $region49: #{criticos_gemelos_forward.1} parent=11 // pred_check
          %p359 = pneg %p281
        $region50: #{criticos_gemelos_forward.1} parent=11 // pred_check_branch
          %361 = sbr.rel (%p359) target = $region52
        $region51: #{criticos_gemelos_forward.1} parent=11 // pred_region
          _
        $region52: #{criticos_gemelos_forward.1} parent=11 // pred_fallthru
          _
      $region12: #{criticos_gemelos_forward.1} parent=5 // pred_fallthru
        _
      %p362 = scmp.lt.s32.totalorder %s19, 2
      // Predicated region
      $region53: #{criticos_gemelos_forward.1} parent=5 // pred_check
        %p363 = pneg %p362
      $region54: #{criticos_gemelos_forward.1} parent=5 // pred_check_branch
        %365 = sbr.rel (%p363) target = $region56
      $region55: #{criticos_gemelos_forward.1} parent=5 // pred_region
        // Predicated region
        $region57: #{criticos_gemelos_forward.1} parent=55 // pred_check
          %p366 = pneg %p39
        $region58: #{criticos_gemelos_forward.1} parent=55 // pred_check_branch
          %368 = sbr.rel (%p366) target = $region60
        $region59: #{criticos_gemelos_forward.1} parent=55 // pred_region
          %s369 = smul.u32 16, %s19
          %p370 = scmp.lt.s32.totalorder %s369, 31
          %s371 = scalar_select %p370, %s369, 31
          %s372 = smul.addr %s371, 8
          %s373 = scalar_lea.vmem %s0, %s372
          %s374 = smul.u32 16, %s19
        $region60: #{criticos_gemelos_forward.1} parent=55 // pred_fallthru
          _
        // Predicated region
        $region61: #{criticos_gemelos_forward.1} parent=55 // pred_check
          %p375 = pneg %p65
        $region62: #{criticos_gemelos_forward.1} parent=55 // pred_check_branch
          %377 = sbr.rel (%p375) target = $region64
        $region63: #{criticos_gemelos_forward.1} parent=55 // pred_region
          %s378 = smul.u32 16, %s19
          %p379 = scmp.lt.s32.totalorder %s378, 31
          %s380 = scalar_select %p379, %s378, 31
          %s381 = smul.addr %s380, 8
          %s382 = scalar_lea.vmem %s1, %s381
          %s383 = smul.u32 16, %s19
        $region64: #{criticos_gemelos_forward.1} parent=55 // pred_fallthru
          _
      $region56: #{criticos_gemelos_forward.1} parent=5 // pred_fallthru
        _
      %p384 = scmp.le.s32.totalorder 1, %s19
      %p385 = scmp.lt.s32.totalorder %s19, 3
      %p386 = pnand %p384, %p385
      %p387 = pneg %p386
      // Predicated region
      $region65: #{criticos_gemelos_forward.1} parent=5 // pred_check
        _
      $region66: #{criticos_gemelos_forward.1} parent=5 // pred_check_branch
        %389 = sbr.rel (%p386) target = $region68
      $region67: #{criticos_gemelos_forward.1} parent=5 // pred_region
        %s390 = ssub.s32 %s19, 1
        // Predicated region
        $region69: #{criticos_gemelos_forward.1} parent=67 // pred_check
          %p391 = pneg %p197
        $region70: #{criticos_gemelos_forward.1} parent=67 // pred_check_branch
          %393 = sbr.rel (%p391) target = $region72
        $region71: #{criticos_gemelos_forward.1} parent=67 // pred_region
          %394 = dma.done [#allocation3], 12288
        $region72: #{criticos_gemelos_forward.1} parent=67 // pred_fallthru
          _
        %s395 = smul.u32 16, %s24
        %p396 = scmp.lt.s32.totalorder %s395, 31
        %s397 = scalar_select %p396, %s395, 31
        %s398 = smul.addr %s397, 8
        %s399 = scalar_lea.vmem %s0, %s398
        %p400 = pneg %p45
        %p401 = pneg %p42
        %s402 = smul.u32 16, %s24
        %p403 = scmp.lt.s32.totalorder %s402, 31
        %s404 = scalar_select %p403, %s402, 31
        %s405 = smul.addr %s404, 8
        %s406 = scalar_lea.vmem %s1, %s405
        %p407 = pneg %p71
        %p408 = pneg %p68
        %p409 = pneg %p92
        %p410 = pneg %p89
        %p411 = pneg %p113
        %p412 = pneg %p110
        %p413 = pneg %p134
        %p414 = pneg %p131
        %p415 = pneg %p155
        %p416 = pneg %p152
        %p417 = pneg %p176
        %p418 = pneg %p173
        %p419 = pneg %p197
        %p420 = pneg %p194
        %p421 = pneg %p218
        %p422 = pneg %p215
        %p423 = pneg %p239
        %p424 = pneg %p236
        %p425 = pneg %p260
        %p426 = pneg %p257
        %p427 = pneg %p281
        %p428 = pneg %p278
        %p429 = pneg %p307
        %p430 = pneg %p304
        %s431 = smul.u32 16, %s24
        %p432 = scmp.lt.s32.totalorder %s431, 31
        %s433 = scalar_select %p432, %s431, 31
        %s434 = smul.addr %s433, 8
        %s435 = scalar_lea.vmem %s12, %s434
        %s436 = smul.u32 16, %s24
        %p437 = scmp.lt.s32.totalorder %s436, 31
        %s438 = scalar_select %p437, %s436, 31
        %s439 = smul.addr %s438, 8
        %s440 = scalar_lea.vmem %s0, %s439
        %s441 = smul.u32 16, %s24
        %s442 = smul.u32 16, %s24
        %p443 = scmp.lt.s32.totalorder %s442, 31
        %s444 = scalar_select %p443, %s442, 31
        %s445 = smul.addr %s444, 8
        %s446 = scalar_lea.vmem %s1, %s445
        %s447 = smul.u32 16, %s24
        %s448 = smul.u32 16, %s24
        %p449 = scmp.lt.s32.totalorder %s448, 31
        %s450 = scalar_select %p449, %s448, 31
        %s451 = smul.addr %s450, 8
        %s452 = scalar_lea.vmem %s12, %s451
        %s453 = smul.u32 16, %s24
        %v455 = vld [vmem:[%s440] sm:$0xff]
        %v456 = vld [vmem:[%s440 + $0x8] sm:$0xff]
        %v457 = vld [vmem:[%s440 + $0x10] sm:$0xff]
        %v458 = vld [vmem:[%s440 + $0x18] sm:$0xff]
        %v459 = vld [vmem:[%s440 + $0x20] sm:$0xff]
        %v460 = vld [vmem:[%s440 + $0x28] sm:$0xff]
        %v461 = vld [vmem:[%s440 + $0x30] sm:$0xff]
        %v462 = vld [vmem:[%s440 + $0x38] sm:$0xff]
        %v463 = vld [vmem:[%s440 + $0x40] sm:$0xff]
        %v464 = vld [vmem:[%s440 + $0x48] sm:$0xff]
        %v465 = vld [vmem:[%s440 + $0x50] sm:$0xff]
        %v466 = vld [vmem:[%s440 + $0x58] sm:$0xff]
        %v467 = vld [vmem:[%s440 + $0x60] sm:$0xff]
        %v468 = vld [vmem:[%s440 + $0x68] sm:$0xff]
        %v469 = vld [vmem:[%s440 + $0x70] sm:$0xff]
        %v470 = vld [vmem:[%s440 + $0x78] sm:$0xff]
        %v471 = vpack.c.bf16 %v456, %v455
        %v472 = vpack.c.bf16 %v458, %v457
        %v473 = vpack.c.bf16 %v460, %v459
        %v474 = vpack.c.bf16 %v462, %v461
        %v475 = vpack.c.bf16 %v464, %v463
        %v476 = vpack.c.bf16 %v466, %v465
        %v477 = vpack.c.bf16 %v468, %v467
        %v478 = vpack.c.bf16 %v470, %v469
        %v479 = vld [vmem:[%s446] sm:$0xff]
        %v480 = vld [vmem:[%s446 + $0x8] sm:$0xff]
        %v481 = vld [vmem:[%s446 + $0x10] sm:$0xff]
        %v482 = vld [vmem:[%s446 + $0x18] sm:$0xff]
        %v483 = vld [vmem:[%s446 + $0x20] sm:$0xff]
        %v484 = vld [vmem:[%s446 + $0x28] sm:$0xff]
        %v485 = vld [vmem:[%s446 + $0x30] sm:$0xff]
        %v486 = vld [vmem:[%s446 + $0x38] sm:$0xff]
        %v487 = vld [vmem:[%s446 + $0x40] sm:$0xff]
        %v488 = vld [vmem:[%s446 + $0x48] sm:$0xff]
        %v489 = vld [vmem:[%s446 + $0x50] sm:$0xff]
        %v490 = vld [vmem:[%s446 + $0x58] sm:$0xff]
        %v491 = vld [vmem:[%s446 + $0x60] sm:$0xff]
        %v492 = vld [vmem:[%s446 + $0x68] sm:$0xff]
        %v493 = vld [vmem:[%s446 + $0x70] sm:$0xff]
        %v494 = vld [vmem:[%s446 + $0x78] sm:$0xff]
        %v495 = vpack.c.bf16 %v480, %v479
        %v496 = vpack.c.bf16 %v482, %v481
        %v497 = vpack.c.bf16 %v484, %v483
        %v498 = vpack.c.bf16 %v486, %v485
        %v499 = vpack.c.bf16 %v488, %v487
        %v500 = vpack.c.bf16 %v490, %v489
        %v501 = vpack.c.bf16 %v492, %v491
        %v502 = vpack.c.bf16 %v494, %v493
        %v503 = vld [vmem:[%s2] sm:$0xff]
        %v504 = vld [vmem:[%s2 + $0x8] sm:$0xff]
        %v505 = vld [vmem:[%s2 + $0x10] sm:$0xff]
        %v506 = vld [vmem:[%s2 + $0x18] sm:$0xff]
        %v507 = vld [vmem:[%s2 + $0x20] sm:$0xff]
        %v508 = vld [vmem:[%s2 + $0x28] sm:$0xff]
        %v509 = vld [vmem:[%s2 + $0x30] sm:$0xff]
        %v510 = vld [vmem:[%s2 + $0x38] sm:$0xff]
        %v511 = vld [vmem:[%s2 + $0x40] sm:$0xff]
        %v512 = vld [vmem:[%s2 + $0x48] sm:$0xff]
        %v513 = vld [vmem:[%s2 + $0x50] sm:$0xff]
        %v514 = vld [vmem:[%s2 + $0x58] sm:$0xff]
        %v515 = vld [vmem:[%s3] sm:$0xff]
        %v516 = vld [vmem:[%s3 + $0x8] sm:$0xff]
        %v517 = vld [vmem:[%s3 + $0x10] sm:$0xff]
        %v518 = vld [vmem:[%s3 + $0x18] sm:$0xff]
        %v523 = vunpack.c.l.b16 %v515
        %v524 = vunpack.c.h.b16 %v515
        %v525 = vunpack.c.l.b16 %v516
        %v526 = vunpack.c.h.b16 %v516
        %v527 = vunpack.c.l.b16 %v517
        %v528 = vunpack.c.h.b16 %v517
        %v529 = vunpack.c.l.b16 %v518
        %v530 = vunpack.c.h.b16 %v518
        %v531 = vpack.c.b16 %v523, %v523
        %v532 = vpack.c.b16 %v524, %v524
        %v533 = vpack.c.b16 %v525, %v525
        %v534 = vpack.c.b16 %v526, %v526
        %v535 = vpack.c.b16 %v527, %v527
        %v536 = vpack.c.b16 %v528, %v528
        %v537 = vpack.c.b16 %v529, %v529
        %v538 = vpack.c.b16 %v530, %v530
        %vm539 = vcmask 64512
        %v541 = vsel %vm539, %v495, 0
        %v544 = vsel %vm539, %v496, 0
        %v547 = vsel %vm539, %v497, 0
        %v550 = vsel %vm539, %v498, 0
        %v553 = vsel %vm539, %v499, 0
        %v556 = vsel %vm539, %v500, 0
        %v559 = vsel %vm539, %v501, 0
        %v562 = vsel %vm539, %v502, 0
        %vm564 = vcmask 1043456
        %v566 = vsel %vm564, %v531, 0
        %v569 = vsel %vm564, %v532, 0
        %v572 = vsel %vm564, %v533, 0
        %v575 = vsel %vm564, %v534, 0
        %v578 = vsel %vm564, %v535, 0
        %v581 = vsel %vm564, %v536, 0
        %v584 = vsel %vm564, %v537, 0
        %v587 = vsel %vm564, %v538, 0
        %589 = vmatprep.subr.bf16.mxu0 %v569
        %590 = vmatpush1.bf16.msra.mxu0 %v566
        %591 = vmatprep.subr.bf16.mxu0 0
        %592 = vmatpush1.bf16.msra.mxu0 0
        %593 = vmatprep.subr.bf16.mxu0 0
        %594 = vmatpush1.bf16.msra.mxu0 0
        %595 = vmatprep.subr.bf16.mxu0 0
        %596 = vmatpush1.bf16.msra.mxu0 0
        %597 = vmatprep.subr.bf16.mxu0 0
        %598 = vmatpush1.bf16.msra.mxu0 0
        %599 = vmatprep.subr.bf16.mxu0 0
        %600 = vmatpush1.bf16.msra.mxu0 0
        %601 = vmatprep.subr.bf16.mxu0 0
        %602 = vmatpush1.bf16.msra.mxu0 0
        %603 = vmatprep.subr.bf16.mxu0 0
        %604 = vmatpush1.bf16.msra.mxu0 0
        %605 = vmatprep.subr.bf16.mxu0 0
        %606 = vmatpush1.bf16.msra.mxu0 0
        %607 = vmatprep.subr.bf16.mxu0 0
        %608 = vmatpush1.bf16.msra.mxu0 0
        %609 = vmatprep.subr.bf16.mxu0 0
        %610 = vmatpush1.bf16.msra.mxu0 0
        %611 = vmatprep.subr.bf16.mxu0 0
        %612 = vmatpush1.bf16.msra.mxu0 0
        %613 = vmatprep.subr.bf16.mxu0 0
        %614 = vmatpush1.bf16.msra.mxu0 0
        %615 = vmatprep.subr.bf16.mxu0 0
        %616 = vmatpush1.bf16.msra.mxu0 0
        %617 = vmatprep.subr.bf16.mxu0 0
        %618 = vmatpush1.bf16.msra.mxu0 0
        %619 = vmatprep.subr.bf16.mxu0 0
        %620 = vmatpush1.bf16.msra.mxu0 0
        %621 = vmatprep.mubr.bf16.mxu0 0
        %622 = vmatmul.mubr.bf16.gmra.mrb[0].mxu0 %v541
        %v623 = vpop.f32.mrb[0].mxu0
        %v624 = vadd.f32 0.0, %v623
        %v625 = vpop.f32.mrb[0].mxu0
        %v626 = vadd.f32 0.0, %v625
        %v627 = vpop.f32.mrb[0].mxu0
        %v628 = vadd.f32 0.0, %v627
        %v629 = vpop.f32.mrb[0].mxu0
        %v630 = vadd.f32 0.0, %v629
        %631 = vmatprep.mubr.bf16.mxu0 0
        %632 = vmatmul.mubr.bf16.gmra.mrb[0].mxu0 %v544
        %v633 = vpop.f32.mrb[0].mxu0
        %v634 = vadd.f32 0.0, %v633
        %v635 = vpop.f32.mrb[0].mxu0
        %v636 = vadd.f32 0.0, %v635
        %v637 = vpop.f32.mrb[0].mxu0
        %v638 = vadd.f32 0.0, %v637
        %v639 = vpop.f32.mrb[0].mxu0
        %v640 = vadd.f32 0.0, %v639
        %641 = vmatprep.mubr.bf16.mxu0 0
        %642 = vmatmul.mubr.bf16.gmra.mrb[0].mxu0 %v547
        %v643 = vpop.f32.mrb[0].mxu0
        %v644 = vadd.f32 0.0, %v643
        %v645 = vpop.f32.mrb[0].mxu0
        %v646 = vadd.f32 0.0, %v645
        %v647 = vpop.f32.mrb[0].mxu0
        %v648 = vadd.f32 0.0, %v647
        %v649 = vpop.f32.mrb[0].mxu0
        %v650 = vadd.f32 0.0, %v649
        %651 = vmatprep.mubr.bf16.mxu0 0
        %652 = vmatmul.mubr.bf16.gmra.mrb[0].mxu0 %v550
        %v653 = vpop.f32.mrb[0].mxu0
        %v654 = vadd.f32 0.0, %v653
        %v655 = vpop.f32.mrb[0].mxu0
        %v656 = vadd.f32 0.0, %v655
        %v657 = vpop.f32.mrb[0].mxu0
        %v658 = vadd.f32 0.0, %v657
        %v659 = vpop.f32.mrb[0].mxu0
        %v660 = vadd.f32 0.0, %v659
        %661 = vmatprep.mubr.bf16.mxu0 0
        %662 = vmatmul.mubr.bf16.gmra.mrb[0].mxu0 %v553
        %v663 = vpop.f32.mrb[0].mxu0
        %v664 = vadd.f32 0.0, %v663
        %v665 = vpop.f32.mrb[0].mxu0
        %v666 = vadd.f32 0.0, %v665
        %v667 = vpop.f32.mrb[0].mxu0
        %v668 = vadd.f32 0.0, %v667
        %v669 = vpop.f32.mrb[0].mxu0
        %v670 = vadd.f32 0.0, %v669
        %671 = vmatprep.mubr.bf16.mxu0 0
        %672 = vmatmul.mubr.bf16.gmra.mrb[0].mxu0 %v556
        %v673 = vpop.f32.mrb[0].mxu0
        %v674 = vadd.f32 0.0, %v673
        %v675 = vpop.f32.mrb[0].mxu0
        %v676 = vadd.f32 0.0, %v675
        %v677 = vpop.f32.mrb[0].mxu0
        %v678 = vadd.f32 0.0, %v677
        %v679 = vpop.f32.mrb[0].mxu0
        %v680 = vadd.f32 0.0, %v679
        %681 = vmatprep.mubr.bf16.mxu0 0
        %682 = vmatmul.mubr.bf16.gmra.mrb[0].mxu0 %v559
        %v683 = vpop.f32.mrb[0].mxu0
        %v684 = vadd.f32 0.0, %v683
        %v685 = vpop.f32.mrb[0].mxu0
        %v686 = vadd.f32 0.0, %v685
        %v687 = vpop.f32.mrb[0].mxu0
        %v688 = vadd.f32 0.0, %v687
        %v689 = vpop.f32.mrb[0].mxu0
        %v690 = vadd.f32 0.0, %v689
        %691 = vmatprep.mubr.bf16.mxu0 0
        %692 = vmatmul.mubr.bf16.gmra.mrb[0].mxu0 %v562
        %v693 = vpop.f32.mrb[0].mxu0
        %v694 = vadd.f32 0.0, %v693
        %v695 = vpop.f32.mrb[0].mxu0
        %v696 = vadd.f32 0.0, %v695
        %v697 = vpop.f32.mrb[0].mxu0
        %v698 = vadd.f32 0.0, %v697
        %v699 = vpop.f32.mrb[0].mxu0
        %v700 = vadd.f32 0.0, %v699
        %701 = vdwg.mxu0
        %702 = vmatprep.subr.bf16.mxu0 %v575
        %703 = vmatpush1.bf16.msra.mxu0 %v572
        %704 = vmatprep.subr.bf16.mxu0 0
        %705 = vmatpush1.bf16.msra.mxu0 0
        %706 = vmatprep.subr.bf16.mxu0 0
        %707 = vmatpush1.bf16.msra.mxu0 0
        %708 = vmatprep.subr.bf16.mxu0 0
        %709 = vmatpush1.bf16.msra.mxu0 0
        %710 = vmatprep.subr.bf16.mxu0 0
        %711 = vmatpush1.bf16.msra.mxu0 0
        %712 = vmatprep.subr.bf16.mxu0 0
        %713 = vmatpush1.bf16.msra.mxu0 0
        %714 = vmatprep.subr.bf16.mxu0 0
        %715 = vmatpush1.bf16.msra.mxu0 0
        %716 = vmatprep.subr.bf16.mxu0 0
        %717 = vmatpush1.bf16.msra.mxu0 0
        %718 = vmatprep.subr.bf16.mxu0 0
        %719 = vmatpush1.bf16.msra.mxu0 0
        %720 = vmatprep.subr.bf16.mxu0 0
        %721 = vmatpush1.bf16.msra.mxu0 0
        %722 = vmatprep.subr.bf16.mxu0 0
        %723 = vmatpush1.bf16.msra.mxu0 0
        %724 = vmatprep.subr.bf16.mxu0 0
        %725 = vmatpush1.bf16.msra.mxu0 0
        %726 = vmatprep.subr.bf16.mxu0 0
        %727 = vmatpush1.bf16.msra.mxu0 0
        %728 = vmatprep.subr.bf16.mxu0 0
        %729 = vmatpush1.bf16.msra.mxu0 0
        %730 = vmatprep.subr.bf16.mxu0 0
        %731 = vmatpush1.bf16.msra.mxu0 0
        %732 = vmatprep.subr.bf16.mxu0 0
        %733 = vmatpush1.bf16.msra.mxu0 0
        %734 = vmatprep.mubr.bf16.mxu0 0
        %735 = vmatmul.mubr.bf16.gmra.mrb[0].mxu0 %v541
        %v736 = vpop.f32.mrb[0].mxu0
        %v737 = vadd.f32 0.0, %v736
        %v738 = vpop.f32.mrb[0].mxu0
        %v739 = vadd.f32 0.0, %v738
        %v740 = vpop.f32.mrb[0].mxu0
        %v741 = vadd.f32 0.0, %v740
        %v742 = vpop.f32.mrb[0].mxu0
        %v743 = vadd.f32 0.0, %v742
        %744 = vmatprep.mubr.bf16.mxu0 0
        %745 = vmatmul.mubr.bf16.gmra.mrb[0].mxu0 %v544
        %v746 = vpop.f32.mrb[0].mxu0
        %v747 = vadd.f32 0.0, %v746
        %v748 = vpop.f32.mrb[0].mxu0
        %v749 = vadd.f32 0.0, %v748
        %v750 = vpop.f32.mrb[0].mxu0
        %v751 = vadd.f32 0.0, %v750
        %v752 = vpop.f32.mrb[0].mxu0
        %v753 = vadd.f32 0.0, %v752
        %754 = vmatprep.mubr.bf16.mxu0 0
        %755 = vmatmul.mubr.bf16.gmra.mrb[0].mxu0 %v547
        %v756 = vpop.f32.mrb[0].mxu0
        %v757 = vadd.f32 0.0, %v756
        %v758 = vpop.f32.mrb[0].mxu0
        %v759 = vadd.f32 0.0, %v758
        %v760 = vpop.f32.mrb[0].mxu0
        %v761 = vadd.f32 0.0, %v760
        %v762 = vpop.f32.mrb[0].mxu0
        %v763 = vadd.f32 0.0, %v762
        %764 = vmatprep.mubr.bf16.mxu0 0
        %765 = vmatmul.mubr.bf16.gmra.mrb[0].mxu0 %v550
        %v766 = vpop.f32.mrb[0].mxu0
        %v767 = vadd.f32 0.0, %v766
        %v768 = vpop.f32.mrb[0].mxu0
        %v769 = vadd.f32 0.0, %v768
        %v770 = vpop.f32.mrb[0].mxu0
        %v771 = vadd.f32 0.0, %v770
        %v772 = vpop.f32.mrb[0].mxu0
        %v773 = vadd.f32 0.0, %v772
        %774 = vmatprep.mubr.bf16.mxu0 0
        %775 = vmatmul.mubr.bf16.gmra.mrb[0].mxu0 %v553
        %v776 = vpop.f32.mrb[0].mxu0
        %v777 = vadd.f32 0.0, %v776
        %v778 = vpop.f32.mrb[0].mxu0
        %v779 = vadd.f32 0.0, %v778
        %v780 = vpop.f32.mrb[0].mxu0
        %v781 = vadd.f32 0.0, %v780
        %v782 = vpop.f32.mrb[0].mxu0
        %v783 = vadd.f32 0.0, %v782
        %784 = vmatprep.mubr.bf16.mxu0 0
        %785 = vmatmul.mubr.bf16.gmra.mrb[0].mxu0 %v556
        %v786 = vpop.f32.mrb[0].mxu0
        %v787 = vadd.f32 0.0, %v786
        %v788 = vpop.f32.mrb[0].mxu0
        %v789 = vadd.f32 0.0, %v788
        %v790 = vpop.f32.mrb[0].mxu0
        %v791 = vadd.f32 0.0, %v790
        %v792 = vpop.f32.mrb[0].mxu0
        %v793 = vadd.f32 0.0, %v792
        %794 = vmatprep.mubr.bf16.mxu0 0
        %795 = vmatmul.mubr.bf16.gmra.mrb[0].mxu0 %v559
        %v796 = vpop.f32.mrb[0].mxu0
        %v797 = vadd.f32 0.0, %v796
        %v798 = vpop.f32.mrb[0].mxu0
        %v799 = vadd.f32 0.0, %v798
        %v800 = vpop.f32.mrb[0].mxu0
        %v801 = vadd.f32 0.0, %v800
        %v802 = vpop.f32.mrb[0].mxu0
        %v803 = vadd.f32 0.0, %v802
        %804 = vmatprep.mubr.bf16.mxu0 0
        %805 = vmatmul.mubr.bf16.gmra.mrb[0].mxu0 %v562
        %v806 = vpop.f32.mrb[0].mxu0
        %v807 = vadd.f32 0.0, %v806
        %v808 = vpop.f32.mrb[0].mxu0
        %v809 = vadd.f32 0.0, %v808
        %v810 = vpop.f32.mrb[0].mxu0
        %v811 = vadd.f32 0.0, %v810
        %v812 = vpop.f32.mrb[0].mxu0
        %v813 = vadd.f32 0.0, %v812
        %814 = vdwg.mxu0
        %815 = vmatprep.subr.bf16.mxu0 %v581
        %816 = vmatpush1.bf16.msra.mxu0 %v578
        %817 = vmatprep.subr.bf16.mxu0 0
        %818 = vmatpush1.bf16.msra.mxu0 0
        %819 = vmatprep.subr.bf16.mxu0 0
        %820 = vmatpush1.bf16.msra.mxu0 0
        %821 = vmatprep.subr.bf16.mxu0 0
        %822 = vmatpush1.bf16.msra.mxu0 0
        %823 = vmatprep.subr.bf16.mxu0 0
        %824 = vmatpush1.bf16.msra.mxu0 0
        %825 = vmatprep.subr.bf16.mxu0 0
        %826 = vmatpush1.bf16.msra.mxu0 0
        %827 = vmatprep.subr.bf16.mxu0 0
        %828 = vmatpush1.bf16.msra.mxu0 0
        %829 = vmatprep.subr.bf16.mxu0 0
        %830 = vmatpush1.bf16.msra.mxu0 0
        %831 = vmatprep.subr.bf16.mxu0 0
        %832 = vmatpush1.bf16.msra.mxu0 0
        %833 = vmatprep.subr.bf16.mxu0 0
        %834 = vmatpush1.bf16.msra.mxu0 0
        %835 = vmatprep.subr.bf16.mxu0 0
        %836 = vmatpush1.bf16.msra.mxu0 0
        %837 = vmatprep.subr.bf16.mxu0 0
        %838 = vmatpush1.bf16.msra.mxu0 0
        %839 = vmatprep.subr.bf16.mxu0 0
        %840 = vmatpush1.bf16.msra.mxu0 0
        %841 = vmatprep.subr.bf16.mxu0 0
        %842 = vmatpush1.bf16.msra.mxu0 0
        %843 = vmatprep.subr.bf16.mxu0 0
        %844 = vmatpush1.bf16.msra.mxu0 0
        %845 = vmatprep.subr.bf16.mxu0 0
        %846 = vmatpush1.bf16.msra.mxu0 0
        %847 = vmatprep.mubr.bf16.mxu0 0
        %848 = vmatmul.mubr.bf16.gmra.mrb[0].mxu0 %v541
        %v849 = vpop.f32.mrb[0].mxu0
        %v850 = vadd.f32 0.0, %v849
        %v851 = vpop.f32.mrb[0].mxu0
        %v852 = vadd.f32 0.0, %v851
        %v853 = vpop.f32.mrb[0].mxu0
        %v854 = vadd.f32 0.0, %v853
        %v855 = vpop.f32.mrb[0].mxu0
        %v856 = vadd.f32 0.0, %v855
        %857 = vmatprep.mubr.bf16.mxu0 0
        %858 = vmatmul.mubr.bf16.gmra.mrb[0].mxu0 %v544
        %v859 = vpop.f32.mrb[0].mxu0
        %v860 = vadd.f32 0.0, %v859
        %v861 = vpop.f32.mrb[0].mxu0
        %v862 = vadd.f32 0.0, %v861
        %v863 = vpop.f32.mrb[0].mxu0
        %v864 = vadd.f32 0.0, %v863
        %v865 = vpop.f32.mrb[0].mxu0
        %v866 = vadd.f32 0.0, %v865
        %867 = vmatprep.mubr.bf16.mxu0 0
        %868 = vmatmul.mubr.bf16.gmra.mrb[0].mxu0 %v547
        %v869 = vpop.f32.mrb[0].mxu0
        %v870 = vadd.f32 0.0, %v869
        %v871 = vpop.f32.mrb[0].mxu0
        %v872 = vadd.f32 0.0, %v871
        %v873 = vpop.f32.mrb[0].mxu0
        %v874 = vadd.f32 0.0, %v873
        %v875 = vpop.f32.mrb[0].mxu0
        %v876 = vadd.f32 0.0, %v875
        %877 = vmatprep.mubr.bf16.mxu0 0
        %878 = vmatmul.mubr.bf16.gmra.mrb[0].mxu0 %v550
        %v879 = vpop.f32.mrb[0].mxu0
        %v880 = vadd.f32 0.0, %v879
        %v881 = vpop.f32.mrb[0].mxu0
        %v882 = vadd.f32 0.0, %v881
        %v883 = vpop.f32.mrb[0].mxu0
        %v884 = vadd.f32 0.0, %v883
        %v885 = vpop.f32.mrb[0].mxu0
        %v886 = vadd.f32 0.0, %v885
        %887 = vmatprep.mubr.bf16.mxu0 0
        %888 = vmatmul.mubr.bf16.gmra.mrb[0].mxu0 %v553
        %v889 = vpop.f32.mrb[0].mxu0
        %v890 = vadd.f32 0.0, %v889
        %v891 = vpop.f32.mrb[0].mxu0
        %v892 = vadd.f32 0.0, %v891
        %v893 = vpop.f32.mrb[0].mxu0
        %v894 = vadd.f32 0.0, %v893
        %v895 = vpop.f32.mrb[0].mxu0
        %v896 = vadd.f32 0.0, %v895
        %897 = vmatprep.mubr.bf16.mxu0 0
        %898 = vmatmul.mubr.bf16.gmra.mrb[0].mxu0 %v556
        %v899 = vpop.f32.mrb[0].mxu0
        %v900 = vadd.f32 0.0, %v899
        %v901 = vpop.f32.mrb[0].mxu0
        %v902 = vadd.f32 0.0, %v901
        %v903 = vpop.f32.mrb[0].mxu0
        %v904 = vadd.f32 0.0, %v903
        %v905 = vpop.f32.mrb[0].mxu0
        %v906 = vadd.f32 0.0, %v905
        %907 = vmatprep.mubr.bf16.mxu0 0
        %908 = vmatmul.mubr.bf16.gmra.mrb[0].mxu0 %v559
        %v909 = vpop.f32.mrb[0].mxu0
        %v910 = vadd.f32 0.0, %v909
        %v911 = vpop.f32.mrb[0].mxu0
        %v912 = vadd.f32 0.0, %v911
        %v913 = vpop.f32.mrb[0].mxu0
        %v914 = vadd.f32 0.0, %v913
        %v915 = vpop.f32.mrb[0].mxu0
        %v916 = vadd.f32 0.0, %v915
        %917 = vmatprep.mubr.bf16.mxu0 0
        %918 = vmatmul.mubr.bf16.gmra.mrb[0].mxu0 %v562
        %v919 = vpop.f32.mrb[0].mxu0
        %v920 = vadd.f32 0.0, %v919
        %v921 = vpop.f32.mrb[0].mxu0
        %v922 = vadd.f32 0.0, %v921
        %v923 = vpop.f32.mrb[0].mxu0
        %v924 = vadd.f32 0.0, %v923
        %v925 = vpop.f32.mrb[0].mxu0
        %v926 = vadd.f32 0.0, %v925
        %927 = vdwg.mxu0
        %928 = vmatprep.subr.bf16.mxu0 %v587
        %929 = vmatpush1.bf16.msra.mxu0 %v584
        %930 = vmatprep.subr.bf16.mxu0 0
        %931 = vmatpush1.bf16.msra.mxu0 0
        %932 = vmatprep.subr.bf16.mxu0 0
        %933 = vmatpush1.bf16.msra.mxu0 0
        %934 = vmatprep.subr.bf16.mxu0 0
        %935 = vmatpush1.bf16.msra.mxu0 0
        %936 = vmatprep.subr.bf16.mxu0 0
        %937 = vmatpush1.bf16.msra.mxu0 0
        %938 = vmatprep.subr.bf16.mxu0 0
        %939 = vmatpush1.bf16.msra.mxu0 0
        %940 = vmatprep.subr.bf16.mxu0 0
        %941 = vmatpush1.bf16.msra.mxu0 0
        %942 = vmatprep.subr.bf16.mxu0 0
        %943 = vmatpush1.bf16.msra.mxu0 0
        %944 = vmatprep.subr.bf16.mxu0 0
        %945 = vmatpush1.bf16.msra.mxu0 0
        %946 = vmatprep.subr.bf16.mxu0 0
        %947 = vmatpush1.bf16.msra.mxu0 0
        %948 = vmatprep.subr.bf16.mxu0 0
        %949 = vmatpush1.bf16.msra.mxu0 0
        %950 = vmatprep.subr.bf16.mxu0 0
        %951 = vmatpush1.bf16.msra.mxu0 0
        %952 = vmatprep.subr.bf16.mxu0 0
        %953 = vmatpush1.bf16.msra.mxu0 0
        %954 = vmatprep.subr.bf16.mxu0 0
        %955 = vmatpush1.bf16.msra.mxu0 0
        %956 = vmatprep.subr.bf16.mxu0 0
        %957 = vmatpush1.bf16.msra.mxu0 0
        %958 = vmatprep.subr.bf16.mxu0 0
        %959 = vmatpush1.bf16.msra.mxu0 0
        %960 = vmatprep.mubr.bf16.mxu0 0
        %961 = vmatmul.mubr.bf16.gmra.mrb[0].mxu0 %v541
        %v962 = vpop.f32.mrb[0].mxu0
        %v963 = vadd.f32 0.0, %v962
        %v964 = vpop.f32.mrb[0].mxu0
        %v965 = vadd.f32 0.0, %v964
        %v966 = vpop.f32.mrb[0].mxu0
        %v967 = vadd.f32 0.0, %v966
        %v968 = vpop.f32.mrb[0].mxu0
        %v969 = vadd.f32 0.0, %v968
        %970 = vmatprep.mubr.bf16.mxu0 0
        %971 = vmatmul.mubr.bf16.gmra.mrb[0].mxu0 %v544
        %v972 = vpop.f32.mrb[0].mxu0
        %v973 = vadd.f32 0.0, %v972
        %v974 = vpop.f32.mrb[0].mxu0
        %v975 = vadd.f32 0.0, %v974
        %v976 = vpop.f32.mrb[0].mxu0
        %v977 = vadd.f32 0.0, %v976
        %v978 = vpop.f32.mrb[0].mxu0
        %v979 = vadd.f32 0.0, %v978
        %980 = vmatprep.mubr.bf16.mxu0 0
        %981 = vmatmul.mubr.bf16.gmra.mrb[0].mxu0 %v547
        %v982 = vpop.f32.mrb[0].mxu0
        %v983 = vadd.f32 0.0, %v982
        %v984 = vpop.f32.mrb[0].mxu0
        %v985 = vadd.f32 0.0, %v984
        %v986 = vpop.f32.mrb[0].mxu0
        %v987 = vadd.f32 0.0, %v986
        %v988 = vpop.f32.mrb[0].mxu0
        %v989 = vadd.f32 0.0, %v988
        %990 = vmatprep.mubr.bf16.mxu0 0
        %991 = vmatmul.mubr.bf16.gmra.mrb[0].mxu0 %v550
        %v992 = vpop.f32.mrb[0].mxu0
        %v993 = vadd.f32 0.0, %v992
        %v994 = vpop.f32.mrb[0].mxu0
        %v995 = vadd.f32 0.0, %v994
        %v996 = vpop.f32.mrb[0].mxu0
        %v997 = vadd.f32 0.0, %v996
        %v998 = vpop.f32.mrb[0].mxu0
        %v999 = vadd.f32 0.0, %v998
        %1000 = vmatprep.mubr.bf16.mxu0 0
        %1001 = vmatmul.mubr.bf16.gmra.mrb[0].mxu0 %v553
        %v1002 = vpop.f32.mrb[0].mxu0
        %v1003 = vadd.f32 0.0, %v1002
        %v1004 = vpop.f32.mrb[0].mxu0
        %v1005 = vadd.f32 0.0, %v1004
        %v1006 = vpop.f32.mrb[0].mxu0
        %v1007 = vadd.f32 0.0, %v1006
        %v1008 = vpop.f32.mrb[0].mxu0
        %v1009 = vadd.f32 0.0, %v1008
        %1010 = vmatprep.mubr.bf16.mxu0 0
        %1011 = vmatmul.mubr.bf16.gmra.mrb[0].mxu0 %v556
        %v1012 = vpop.f32.mrb[0].mxu0
        %v1013 = vadd.f32 0.0, %v1012
        %v1014 = vpop.f32.mrb[0].mxu0
        %v1015 = vadd.f32 0.0, %v1014
        %v1016 = vpop.f32.mrb[0].mxu0
        %v1017 = vadd.f32 0.0, %v1016
        %v1018 = vpop.f32.mrb[0].mxu0
        %v1019 = vadd.f32 0.0, %v1018
        %1020 = vmatprep.mubr.bf16.mxu0 0
        %1021 = vmatmul.mubr.bf16.gmra.mrb[0].mxu0 %v559
        %v1022 = vpop.f32.mrb[0].mxu0
        %v1023 = vadd.f32 0.0, %v1022
        %v1024 = vpop.f32.mrb[0].mxu0
        %v1025 = vadd.f32 0.0, %v1024
        %v1026 = vpop.f32.mrb[0].mxu0
        %v1027 = vadd.f32 0.0, %v1026
        %v1028 = vpop.f32.mrb[0].mxu0
        %v1029 = vadd.f32 0.0, %v1028
        %1030 = vmatprep.mubr.bf16.mxu0 0
        %1031 = vmatmul.mubr.bf16.gmra.mrb[0].mxu0 %v562
        %v1032 = vpop.f32.mrb[0].mxu0
        %v1033 = vadd.f32 0.0, %v1032
        %v1034 = vpop.f32.mrb[0].mxu0
        %v1035 = vadd.f32 0.0, %v1034
        %v1036 = vpop.f32.mrb[0].mxu0
        %v1037 = vadd.f32 0.0, %v1036
        %v1038 = vpop.f32.mrb[0].mxu0
        %v1039 = vadd.f32 0.0, %v1038
        %1040 = vdwg.mxu0
        %v1053 = vunpack.c.l.b16 %v503
        %v1054 = vunpack.c.h.b16 %v503
        %v1055 = vunpack.c.l.b16 %v504
        %v1056 = vunpack.c.h.b16 %v504
        %v1057 = vunpack.c.l.b16 %v505
        %v1058 = vunpack.c.h.b16 %v505
        %v1059 = vunpack.c.l.b16 %v506
        %v1060 = vunpack.c.h.b16 %v506
        %v1061 = vunpack.c.l.b16 %v507
        %v1062 = vunpack.c.h.b16 %v507
        %v1063 = vunpack.c.l.b16 %v508
        %v1064 = vunpack.c.h.b16 %v508
        %v1065 = vunpack.c.l.b16 %v509
        %v1066 = vunpack.c.h.b16 %v509
        %v1067 = vunpack.c.l.b16 %v510
        %v1068 = vunpack.c.h.b16 %v510
        %v1069 = vunpack.c.l.b16 %v511
        %v1070 = vunpack.c.h.b16 %v511
        %v1071 = vunpack.c.l.b16 %v512
        %v1072 = vunpack.c.h.b16 %v512
        %v1073 = vunpack.c.l.b16 %v513
        %v1074 = vunpack.c.h.b16 %v513
        %v1075 = vunpack.c.l.b16 %v514
        %v1076 = vunpack.c.h.b16 %v514
        %v1077 = vpack.c.b16 %v1061, %v1053
        %v1078 = vpack.c.b16 %v1062, %v1054
        %v1079 = vpack.c.b16 %v1063, %v1055
        %v1080 = vpack.c.b16 %v1064, %v1056
        %v1081 = vpack.c.b16 %v1065, %v1057
        %v1082 = vpack.c.b16 %v1066, %v1058
        %v1083 = vpack.c.b16 %v1067, %v1059
        %v1084 = vpack.c.b16 %v1068, %v1060
        %v1085 = vpack.c.b16 %v1069, %v1069
        %v1086 = vpack.c.b16 %v1070, %v1070
        %v1087 = vpack.c.b16 %v1071, %v1071
        %v1088 = vpack.c.b16 %v1072, %v1072
        %v1089 = vpack.c.b16 %v1073, %v1073
        %v1090 = vpack.c.b16 %v1074, %v1074
        %v1091 = vpack.c.b16 %v1075, %v1075
        %v1092 = vpack.c.b16 %v1076, %v1076
        %vm1101 = vcmask 195584
        %v1103 = vsel %vm1101, %v471, 0
        %v1106 = vsel %vm1101, %v472, 0
        %v1109 = vsel %vm1101, %v473, 0
        %v1112 = vsel %vm1101, %v474, 0
        %v1115 = vsel %vm1101, %v475, 0
        %v1118 = vsel %vm1101, %v476, 0
        %v1121 = vsel %vm1101, %v477, 0
        %v1124 = vsel %vm1101, %v478, 0
        %v1127 = vsel %vm564, %v1085, 0
        %v1130 = vsel %vm564, %v1086, 0
        %v1133 = vsel %vm564, %v1087, 0
        %v1136 = vsel %vm564, %v1088, 0
        %v1139 = vsel %vm564, %v1089, 0
        %v1142 = vsel %vm564, %v1090, 0
        %v1145 = vsel %vm564, %v1091, 0
        %v1148 = vsel %vm564, %v1092, 0
        %1150 = vmatprep.subr.bf16.mxu0 %v1078
        %1151 = vmatpush1.bf16.msra.mxu0 %v1077
        %1152 = vmatprep.subr.bf16.mxu0 %v1130
        %1153 = vmatpush1.bf16.msra.mxu0 %v1127
        %1154 = vmatprep.subr.bf16.mxu0 0
        %1155 = vmatpush1.bf16.msra.mxu0 0
        %1156 = vmatprep.subr.bf16.mxu0 0
        %1157 = vmatpush1.bf16.msra.mxu0 0
        %1158 = vmatprep.subr.bf16.mxu0 0
        %1159 = vmatpush1.bf16.msra.mxu0 0
        %1160 = vmatprep.subr.bf16.mxu0 0
        %1161 = vmatpush1.bf16.msra.mxu0 0
        %1162 = vmatprep.subr.bf16.mxu0 0
        %1163 = vmatpush1.bf16.msra.mxu0 0
        %1164 = vmatprep.subr.bf16.mxu0 0
        %1165 = vmatpush1.bf16.msra.mxu0 0
        %1166 = vmatprep.subr.bf16.mxu0 0
        %1167 = vmatpush1.bf16.msra.mxu0 0
        %1168 = vmatprep.subr.bf16.mxu0 0
        %1169 = vmatpush1.bf16.msra.mxu0 0
        %1170 = vmatprep.subr.bf16.mxu0 0
        %1171 = vmatpush1.bf16.msra.mxu0 0
        %1172 = vmatprep.subr.bf16.mxu0 0
        %1173 = vmatpush1.bf16.msra.mxu0 0
        %1174 = vmatprep.subr.bf16.mxu0 0
        %1175 = vmatpush1.bf16.msra.mxu0 0
        %1176 = vmatprep.subr.bf16.mxu0 0
        %1177 = vmatpush1.bf16.msra.mxu0 0
        %1178 = vmatprep.subr.bf16.mxu0 0
        %1179 = vmatpush1.bf16.msra.mxu0 0
        %1180 = vmatprep.subr.bf16.mxu0 0
        %1181 = vmatpush1.bf16.msra.mxu0 0
        %1182 = vmatprep.mubr.bf16.mxu0 0
        %1183 = vmatmul.mubr.bf16.gmra.mrb[0].mxu0 %v1103
        %v1184 = vpop.f32.mrb[0].mxu0
        %v1185 = vadd.f32 %v624, %v1184
        %v1186 = vpop.f32.mrb[0].mxu0
        %v1187 = vadd.f32 %v626, %v1186
        %v1188 = vpop.f32.mrb[0].mxu0
        %v1189 = vadd.f32 %v628, %v1188
        %v1190 = vpop.f32.mrb[0].mxu0
        %v1191 = vadd.f32 %v630, %v1190
        %1192 = vmatprep.mubr.bf16.mxu0 0
        %1193 = vmatmul.mubr.bf16.gmra.mrb[0].mxu0 %v1106
        %v1194 = vpop.f32.mrb[0].mxu0
        %v1195 = vadd.f32 %v634, %v1194
        %v1196 = vpop.f32.mrb[0].mxu0
        %v1197 = vadd.f32 %v636, %v1196
        %v1198 = vpop.f32.mrb[0].mxu0
        %v1199 = vadd.f32 %v638, %v1198
        %v1200 = vpop.f32.mrb[0].mxu0
        %v1201 = vadd.f32 %v640, %v1200
        %1202 = vmatprep.mubr.bf16.mxu0 0
        %1203 = vmatmul.mubr.bf16.gmra.mrb[0].mxu0 %v1109
        %v1204 = vpop.f32.mrb[0].mxu0
        %v1205 = vadd.f32 %v644, %v1204
        %v1206 = vpop.f32.mrb[0].mxu0
        %v1207 = vadd.f32 %v646, %v1206
        %v1208 = vpop.f32.mrb[0].mxu0
        %v1209 = vadd.f32 %v648, %v1208
        %v1210 = vpop.f32.mrb[0].mxu0
        %v1211 = vadd.f32 %v650, %v1210
        %1212 = vmatprep.mubr.bf16.mxu0 0
        %1213 = vmatmul.mubr.bf16.gmra.mrb[0].mxu0 %v1112
        %v1214 = vpop.f32.mrb[0].mxu0
        %v1215 = vadd.f32 %v654, %v1214
        %v1216 = vpop.f32.mrb[0].mxu0
        %v1217 = vadd.f32 %v656, %v1216
        %v1218 = vpop.f32.mrb[0].mxu0
        %v1219 = vadd.f32 %v658, %v1218
        %v1220 = vpop.f32.mrb[0].mxu0
        %v1221 = vadd.f32 %v660, %v1220
        %1222 = vmatprep.mubr.bf16.mxu0 0
        %1223 = vmatmul.mubr.bf16.gmra.mrb[0].mxu0 %v1115
        %v1224 = vpop.f32.mrb[0].mxu0
        %v1225 = vadd.f32 %v664, %v1224
        %v1226 = vpop.f32.mrb[0].mxu0
        %v1227 = vadd.f32 %v666, %v1226
        %v1228 = vpop.f32.mrb[0].mxu0
        %v1229 = vadd.f32 %v668, %v1228
        %v1230 = vpop.f32.mrb[0].mxu0
        %v1231 = vadd.f32 %v670, %v1230
        %1232 = vmatprep.mubr.bf16.mxu0 0
        %1233 = vmatmul.mubr.bf16.gmra.mrb[0].mxu0 %v1118
        %v1234 = vpop.f32.mrb[0].mxu0
        %v1235 = vadd.f32 %v674, %v1234
        %v1236 = vpop.f32.mrb[0].mxu0
        %v1237 = vadd.f32 %v676, %v1236
        %v1238 = vpop.f32.mrb[0].mxu0
        %v1239 = vadd.f32 %v678, %v1238
        %v1240 = vpop.f32.mrb[0].mxu0
        %v1241 = vadd.f32 %v680, %v1240
        %1242 = vmatprep.mubr.bf16.mxu0 0
        %1243 = vmatmul.mubr.bf16.gmra.mrb[0].mxu0 %v1121
        %v1244 = vpop.f32.mrb[0].mxu0
        %v1245 = vadd.f32 %v684, %v1244
        %v1246 = vpop.f32.mrb[0].mxu0
        %v1247 = vadd.f32 %v686, %v1246
        %v1248 = vpop.f32.mrb[0].mxu0
        %v1249 = vadd.f32 %v688, %v1248
        %v1250 = vpop.f32.mrb[0].mxu0
        %v1251 = vadd.f32 %v690, %v1250
        %1252 = vmatprep.mubr.bf16.mxu0 0
        %1253 = vmatmul.mubr.bf16.gmra.mrb[0].mxu0 %v1124
        %v1254 = vpop.f32.mrb[0].mxu0
        %v1255 = vadd.f32 %v694, %v1254
        %v1256 = vpop.f32.mrb[0].mxu0
        %v1257 = vadd.f32 %v696, %v1256
        %v1258 = vpop.f32.mrb[0].mxu0
        %v1259 = vadd.f32 %v698, %v1258
        %v1260 = vpop.f32.mrb[0].mxu0
        %v1261 = vadd.f32 %v700, %v1260
        %1262 = vdwg.mxu0
        %1263 = vmatprep.subr.bf16.mxu0 %v1080
        %1264 = vmatpush1.bf16.msra.mxu0 %v1079
        %1265 = vmatprep.subr.bf16.mxu0 %v1136
        %1266 = vmatpush1.bf16.msra.mxu0 %v1133
        %1267 = vmatprep.subr.bf16.mxu0 0
        %1268 = vmatpush1.bf16.msra.mxu0 0
        %1269 = vmatprep.subr.bf16.mxu0 0
        %1270 = vmatpush1.bf16.msra.mxu0 0
        %1271 = vmatprep.subr.bf16.mxu0 0
        %1272 = vmatpush1.bf16.msra.mxu0 0
        %1273 = vmatprep.subr.bf16.mxu0 0
        %1274 = vmatpush1.bf16.msra.mxu0 0
        %1275 = vmatprep.subr.bf16.mxu0 0
        %1276 = vmatpush1.bf16.msra.mxu0 0
        %1277 = vmatprep.subr.bf16.mxu0 0
        %1278 = vmatpush1.bf16.msra.mxu0 0
        %1279 = vmatprep.subr.bf16.mxu0 0
        %1280 = vmatpush1.bf16.msra.mxu0 0
        %1281 = vmatprep.subr.bf16.mxu0 0
        %1282 = vmatpush1.bf16.msra.mxu0 0
        %1283 = vmatprep.subr.bf16.mxu0 0
        %1284 = vmatpush1.bf16.msra.mxu0 0
        %1285 = vmatprep.subr.bf16.mxu0 0
        %1286 = vmatpush1.bf16.msra.mxu0 0
        %1287 = vmatprep.subr.bf16.mxu0 0
        %1288 = vmatpush1.bf16.msra.mxu0 0
        %1289 = vmatprep.subr.bf16.mxu0 0
        %1290 = vmatpush1.bf16.msra.mxu0 0
        %1291 = vmatprep.subr.bf16.mxu0 0
        %1292 = vmatpush1.bf16.msra.mxu0 0
        %1293 = vmatprep.subr.bf16.mxu0 0
        %1294 = vmatpush1.bf16.msra.mxu0 0
        %1295 = vmatprep.mubr.bf16.mxu0 0
        %1296 = vmatmul.mubr.bf16.gmra.mrb[0].mxu0 %v1103
        %v1297 = vpop.f32.mrb[0].mxu0
        %v1298 = vadd.f32 %v737, %v1297
        %v1299 = vpop.f32.mrb[0].mxu0
        %v1300 = vadd.f32 %v739, %v1299
        %v1301 = vpop.f32.mrb[0].mxu0
        %v1302 = vadd.f32 %v741, %v1301
        %v1303 = vpop.f32.mrb[0].mxu0
        %v1304 = vadd.f32 %v743, %v1303
        %1305 = vmatprep.mubr.bf16.mxu0 0
        %1306 = vmatmul.mubr.bf16.gmra.mrb[0].mxu0 %v1106
        %v1307 = vpop.f32.mrb[0].mxu0
        %v1308 = vadd.f32 %v747, %v1307
        %v1309 = vpop.f32.mrb[0].mxu0
        %v1310 = vadd.f32 %v749, %v1309
        %v1311 = vpop.f32.mrb[0].mxu0
        %v1312 = vadd.f32 %v751, %v1311
        %v1313 = vpop.f32.mrb[0].mxu0
        %v1314 = vadd.f32 %v753, %v1313
        %1315 = vmatprep.mubr.bf16.mxu0 0
        %1316 = vmatmul.mubr.bf16.gmra.mrb[0].mxu0 %v1109
        %v1317 = vpop.f32.mrb[0].mxu0
        %v1318 = vadd.f32 %v757, %v1317
        %v1319 = vpop.f32.mrb[0].mxu0
        %v1320 = vadd.f32 %v759, %v1319
        %v1321 = vpop.f32.mrb[0].mxu0
        %v1322 = vadd.f32 %v761, %v1321
        %v1323 = vpop.f32.mrb[0].mxu0
        %v1324 = vadd.f32 %v763, %v1323
        %1325 = vmatprep.mubr.bf16.mxu0 0
        %1326 = vmatmul.mubr.bf16.gmra.mrb[0].mxu0 %v1112
        %v1327 = vpop.f32.mrb[0].mxu0
        %v1328 = vadd.f32 %v767, %v1327
        %v1329 = vpop.f32.mrb[0].mxu0
        %v1330 = vadd.f32 %v769, %v1329
        %v1331 = vpop.f32.mrb[0].mxu0
        %v1332 = vadd.f32 %v771, %v1331
        %v1333 = vpop.f32.mrb[0].mxu0
        %v1334 = vadd.f32 %v773, %v1333
        %1335 = vmatprep.mubr.bf16.mxu0 0
        %1336 = vmatmul.mubr.bf16.gmra.mrb[0].mxu0 %v1115
        %v1337 = vpop.f32.mrb[0].mxu0
        %v1338 = vadd.f32 %v777, %v1337
        %v1339 = vpop.f32.mrb[0].mxu0
        %v1340 = vadd.f32 %v779, %v1339
        %v1341 = vpop.f32.mrb[0].mxu0
        %v1342 = vadd.f32 %v781, %v1341
        %v1343 = vpop.f32.mrb[0].mxu0
        %v1344 = vadd.f32 %v783, %v1343
        %1345 = vmatprep.mubr.bf16.mxu0 0
        %1346 = vmatmul.mubr.bf16.gmra.mrb[0].mxu0 %v1118
        %v1347 = vpop.f32.mrb[0].mxu0
        %v1348 = vadd.f32 %v787, %v1347
        %v1349 = vpop.f32.mrb[0].mxu0
        %v1350 = vadd.f32 %v789, %v1349
        %v1351 = vpop.f32.mrb[0].mxu0
        %v1352 = vadd.f32 %v791, %v1351
        %v1353 = vpop.f32.mrb[0].mxu0
        %v1354 = vadd.f32 %v793, %v1353
        %1355 = vmatprep.mubr.bf16.mxu0 0
        %1356 = vmatmul.mubr.bf16.gmra.mrb[0].mxu0 %v1121
        %v1357 = vpop.f32.mrb[0].mxu0
        %v1358 = vadd.f32 %v797, %v1357
        %v1359 = vpop.f32.mrb[0].mxu0
        %v1360 = vadd.f32 %v799, %v1359
        %v1361 = vpop.f32.mrb[0].mxu0
        %v1362 = vadd.f32 %v801, %v1361
        %v1363 = vpop.f32.mrb[0].mxu0
        %v1364 = vadd.f32 %v803, %v1363
        %1365 = vmatprep.mubr.bf16.mxu0 0
        %1366 = vmatmul.mubr.bf16.gmra.mrb[0].mxu0 %v1124
        %v1367 = vpop.f32.mrb[0].mxu0
        %v1368 = vadd.f32 %v807, %v1367
        %v1369 = vpop.f32.mrb[0].mxu0
        %v1370 = vadd.f32 %v809, %v1369
        %v1371 = vpop.f32.mrb[0].mxu0
        %v1372 = vadd.f32 %v811, %v1371
        %v1373 = vpop.f32.mrb[0].mxu0
        %v1374 = vadd.f32 %v813, %v1373
        %1375 = vdwg.mxu0
        %1376 = vmatprep.subr.bf16.mxu0 %v1082
        %1377 = vmatpush1.bf16.msra.mxu0 %v1081
        %1378 = vmatprep.subr.bf16.mxu0 %v1142
        %1379 = vmatpush1.bf16.msra.mxu0 %v1139
        %1380 = vmatprep.subr.bf16.mxu0 0
        %1381 = vmatpush1.bf16.msra.mxu0 0
        %1382 = vmatprep.subr.bf16.mxu0 0
        %1383 = vmatpush1.bf16.msra.mxu0 0
        %1384 = vmatprep.subr.bf16.mxu0 0
        %1385 = vmatpush1.bf16.msra.mxu0 0
        %1386 = vmatprep.subr.bf16.mxu0 0
        %1387 = vmatpush1.bf16.msra.mxu0 0
        %1388 = vmatprep.subr.bf16.mxu0 0
        %1389 = vmatpush1.bf16.msra.mxu0 0
        %1390 = vmatprep.subr.bf16.mxu0 0
        %1391 = vmatpush1.bf16.msra.mxu0 0
        %1392 = vmatprep.subr.bf16.mxu0 0
        %1393 = vmatpush1.bf16.msra.mxu0 0
        %1394 = vmatprep.subr.bf16.mxu0 0
        %1395 = vmatpush1.bf16.msra.mxu0 0
        %1396 = vmatprep.subr.bf16.mxu0 0
        %1397 = vmatpush1.bf16.msra.mxu0 0
        %1398 = vmatprep.subr.bf16.mxu0 0
        %1399 = vmatpush1.bf16.msra.mxu0 0
        %1400 = vmatprep.subr.bf16.mxu0 0
        %1401 = vmatpush1.bf16.msra.mxu0 0
        %1402 = vmatprep.subr.bf16.mxu0 0
        %1403 = vmatpush1.bf16.msra.mxu0 0
        %1404 = vmatprep.subr.bf16.mxu0 0
        %1405 = vmatpush1.bf16.msra.mxu0 0
        %1406 = vmatprep.subr.bf16.mxu0 0
        %1407 = vmatpush1.bf16.msra.mxu0 0
        %1408 = vmatprep.mubr.bf16.mxu0 0
        %1409 = vmatmul.mubr.bf16.gmra.mrb[0].mxu0 %v1103
        %v1410 = vpop.f32.mrb[0].mxu0
        %v1411 = vadd.f32 %v850, %v1410
        %v1412 = vpop.f32.mrb[0].mxu0
        %v1413 = vadd.f32 %v852, %v1412
        %v1414 = vpop.f32.mrb[0].mxu0
        %v1415 = vadd.f32 %v854, %v1414
        %v1416 = vpop.f32.mrb[0].mxu0
        %v1417 = vadd.f32 %v856, %v1416
        %1418 = vmatprep.mubr.bf16.mxu0 0
        %1419 = vmatmul.mubr.bf16.gmra.mrb[0].mxu0 %v1106
        %v1420 = vpop.f32.mrb[0].mxu0
        %v1421 = vadd.f32 %v860, %v1420
        %v1422 = vpop.f32.mrb[0].mxu0
        %v1423 = vadd.f32 %v862, %v1422
        %v1424 = vpop.f32.mrb[0].mxu0
        %v1425 = vadd.f32 %v864, %v1424
        %v1426 = vpop.f32.mrb[0].mxu0
        %v1427 = vadd.f32 %v866, %v1426
        %1428 = vmatprep.mubr.bf16.mxu0 0
        %1429 = vmatmul.mubr.bf16.gmra.mrb[0].mxu0 %v1109
        %v1430 = vpop.f32.mrb[0].mxu0
        %v1431 = vadd.f32 %v870, %v1430
        %v1432 = vpop.f32.mrb[0].mxu0
        %v1433 = vadd.f32 %v872, %v1432
        %v1434 = vpop.f32.mrb[0].mxu0
        %v1435 = vadd.f32 %v874, %v1434
        %v1436 = vpop.f32.mrb[0].mxu0
        %v1437 = vadd.f32 %v876, %v1436
        %1438 = vmatprep.mubr.bf16.mxu0 0
        %1439 = vmatmul.mubr.bf16.gmra.mrb[0].mxu0 %v1112
        %v1440 = vpop.f32.mrb[0].mxu0
        %v1441 = vadd.f32 %v880, %v1440
        %v1442 = vpop.f32.mrb[0].mxu0
        %v1443 = vadd.f32 %v882, %v1442
        %v1444 = vpop.f32.mrb[0].mxu0
        %v1445 = vadd.f32 %v884, %v1444
        %v1446 = vpop.f32.mrb[0].mxu0
        %v1447 = vadd.f32 %v886, %v1446
        %1448 = vmatprep.mubr.bf16.mxu0 0
        %1449 = vmatmul.mubr.bf16.gmra.mrb[0].mxu0 %v1115
        %v1450 = vpop.f32.mrb[0].mxu0
        %v1451 = vadd.f32 %v890, %v1450
        %v1452 = vpop.f32.mrb[0].mxu0
        %v1453 = vadd.f32 %v892, %v1452
        %v1454 = vpop.f32.mrb[0].mxu0
        %v1455 = vadd.f32 %v894, %v1454
        %v1456 = vpop.f32.mrb[0].mxu0
        %v1457 = vadd.f32 %v896, %v1456
        %1458 = vmatprep.mubr.bf16.mxu0 0
        %1459 = vmatmul.mubr.bf16.gmra.mrb[0].mxu0 %v1118
        %v1460 = vpop.f32.mrb[0].mxu0
        %v1461 = vadd.f32 %v900, %v1460
        %v1462 = vpop.f32.mrb[0].mxu0
        %v1463 = vadd.f32 %v902, %v1462
        %v1464 = vpop.f32.mrb[0].mxu0
        %v1465 = vadd.f32 %v904, %v1464
        %v1466 = vpop.f32.mrb[0].mxu0
        %v1467 = vadd.f32 %v906, %v1466
        %1468 = vmatprep.mubr.bf16.mxu0 0
        %1469 = vmatmul.mubr.bf16.gmra.mrb[0].mxu0 %v1121
        %v1470 = vpop.f32.mrb[0].mxu0
        %v1471 = vadd.f32 %v910, %v1470
        %v1472 = vpop.f32.mrb[0].mxu0
        %v1473 = vadd.f32 %v912, %v1472
        %v1474 = vpop.f32.mrb[0].mxu0
        %v1475 = vadd.f32 %v914, %v1474
        %v1476 = vpop.f32.mrb[0].mxu0
        %v1477 = vadd.f32 %v916, %v1476
        %1478 = vmatprep.mubr.bf16.mxu0 0
        %1479 = vmatmul.mubr.bf16.gmra.mrb[0].mxu0 %v1124
        %v1480 = vpop.f32.mrb[0].mxu0
        %v1481 = vadd.f32 %v920, %v1480
        %v1482 = vpop.f32.mrb[0].mxu0
        %v1483 = vadd.f32 %v922, %v1482
        %v1484 = vpop.f32.mrb[0].mxu0
        %v1485 = vadd.f32 %v924, %v1484
        %v1486 = vpop.f32.mrb[0].mxu0
        %v1487 = vadd.f32 %v926, %v1486
        %1488 = vdwg.mxu0
        %1489 = vmatprep.subr.bf16.mxu0 %v1084
        %1490 = vmatpush1.bf16.msra.mxu0 %v1083
        %1491 = vmatprep.subr.bf16.mxu0 %v1148
        %1492 = vmatpush1.bf16.msra.mxu0 %v1145
        %1493 = vmatprep.subr.bf16.mxu0 0
        %1494 = vmatpush1.bf16.msra.mxu0 0
        %1495 = vmatprep.subr.bf16.mxu0 0
        %1496 = vmatpush1.bf16.msra.mxu0 0
        %1497 = vmatprep.subr.bf16.mxu0 0
        %1498 = vmatpush1.bf16.msra.mxu0 0
        %1499 = vmatprep.subr.bf16.mxu0 0
        %1500 = vmatpush1.bf16.msra.mxu0 0
        %1501 = vmatprep.subr.bf16.mxu0 0
        %1502 = vmatpush1.bf16.msra.mxu0 0
        %1503 = vmatprep.subr.bf16.mxu0 0
        %1504 = vmatpush1.bf16.msra.mxu0 0
        %1505 = vmatprep.subr.bf16.mxu0 0
        %1506 = vmatpush1.bf16.msra.mxu0 0
        %1507 = vmatprep.subr.bf16.mxu0 0
        %1508 = vmatpush1.bf16.msra.mxu0 0
        %1509 = vmatprep.subr.bf16.mxu0 0
        %1510 = vmatpush1.bf16.msra.mxu0 0
        %1511 = vmatprep.subr.bf16.mxu0 0
        %1512 = vmatpush1.bf16.msra.mxu0 0
        %1513 = vmatprep.subr.bf16.mxu0 0
        %1514 = vmatpush1.bf16.msra.mxu0 0
        %1515 = vmatprep.subr.bf16.mxu0 0
        %1516 = vmatpush1.bf16.msra.mxu0 0
        %1517 = vmatprep.subr.bf16.mxu0 0
        %1518 = vmatpush1.bf16.msra.mxu0 0
        %1519 = vmatprep.subr.bf16.mxu0 0
        %1520 = vmatpush1.bf16.msra.mxu0 0
        %1521 = vmatprep.mubr.bf16.mxu0 0
        %1522 = vmatmul.mubr.bf16.gmra.mrb[0].mxu0 %v1103
        %v1523 = vpop.f32.mrb[0].mxu0
        %v1524 = vadd.f32 %v963, %v1523
        %v1525 = vpop.f32.mrb[0].mxu0
        %v1526 = vadd.f32 %v965, %v1525
        %v1527 = vpop.f32.mrb[0].mxu0
        %v1528 = vadd.f32 %v967, %v1527
        %v1529 = vpop.f32.mrb[0].mxu0
        %v1530 = vadd.f32 %v969, %v1529
        %1531 = vmatprep.mubr.bf16.mxu0 0
        %1532 = vmatmul.mubr.bf16.gmra.mrb[0].mxu0 %v1106
        %v1533 = vpop.f32.mrb[0].mxu0
        %v1534 = vadd.f32 %v973, %v1533
        %v1535 = vpop.f32.mrb[0].mxu0
        %v1536 = vadd.f32 %v975, %v1535
        %v1537 = vpop.f32.mrb[0].mxu0
        %v1538 = vadd.f32 %v977, %v1537
        %v1539 = vpop.f32.mrb[0].mxu0
        %v1540 = vadd.f32 %v979, %v1539
        %1541 = vmatprep.mubr.bf16.mxu0 0
        %1542 = vmatmul.mubr.bf16.gmra.mrb[0].mxu0 %v1109
        %v1543 = vpop.f32.mrb[0].mxu0
        %v1544 = vadd.f32 %v983, %v1543
        %v1545 = vpop.f32.mrb[0].mxu0
        %v1546 = vadd.f32 %v985, %v1545
        %v1547 = vpop.f32.mrb[0].mxu0
        %v1548 = vadd.f32 %v987, %v1547
        %v1549 = vpop.f32.mrb[0].mxu0
        %v1550 = vadd.f32 %v989, %v1549
        %1551 = vmatprep.mubr.bf16.mxu0 0
        %1552 = vmatmul.mubr.bf16.gmra.mrb[0].mxu0 %v1112
        %v1553 = vpop.f32.mrb[0].mxu0
        %v1554 = vadd.f32 %v993, %v1553
        %v1555 = vpop.f32.mrb[0].mxu0
        %v1556 = vadd.f32 %v995, %v1555
        %v1557 = vpop.f32.mrb[0].mxu0
        %v1558 = vadd.f32 %v997, %v1557
        %v1559 = vpop.f32.mrb[0].mxu0
        %v1560 = vadd.f32 %v999, %v1559
        %1561 = vmatprep.mubr.bf16.mxu0 0
        %1562 = vmatmul.mubr.bf16.gmra.mrb[0].mxu0 %v1115
        %v1563 = vpop.f32.mrb[0].mxu0
        %v1564 = vadd.f32 %v1003, %v1563
        %v1565 = vpop.f32.mrb[0].mxu0
        %v1566 = vadd.f32 %v1005, %v1565
        %v1567 = vpop.f32.mrb[0].mxu0
        %v1568 = vadd.f32 %v1007, %v1567
        %v1569 = vpop.f32.mrb[0].mxu0
        %v1570 = vadd.f32 %v1009, %v1569
        %1571 = vmatprep.mubr.bf16.mxu0 0
        %1572 = vmatmul.mubr.bf16.gmra.mrb[0].mxu0 %v1118
        %v1573 = vpop.f32.mrb[0].mxu0
        %v1574 = vadd.f32 %v1013, %v1573
        %v1575 = vpop.f32.mrb[0].mxu0
        %v1576 = vadd.f32 %v1015, %v1575
        %v1577 = vpop.f32.mrb[0].mxu0
        %v1578 = vadd.f32 %v1017, %v1577
        %v1579 = vpop.f32.mrb[0].mxu0
        %v1580 = vadd.f32 %v1019, %v1579
        %1581 = vmatprep.mubr.bf16.mxu0 0
        %1582 = vmatmul.mubr.bf16.gmra.mrb[0].mxu0 %v1121
        %v1583 = vpop.f32.mrb[0].mxu0
        %v1584 = vadd.f32 %v1023, %v1583
        %v1585 = vpop.f32.mrb[0].mxu0
        %v1586 = vadd.f32 %v1025, %v1585
        %v1587 = vpop.f32.mrb[0].mxu0
        %v1588 = vadd.f32 %v1027, %v1587
        %v1589 = vpop.f32.mrb[0].mxu0
        %v1590 = vadd.f32 %v1029, %v1589
        %1591 = vmatprep.mubr.bf16.mxu0 0
        %1592 = vmatmul.mubr.bf16.gmra.mrb[0].mxu0 %v1124
        %v1593 = vpop.f32.mrb[0].mxu0
        %v1594 = vadd.f32 %v1033, %v1593
        %v1595 = vpop.f32.mrb[0].mxu0
        %v1596 = vadd.f32 %v1035, %v1595
        %v1597 = vpop.f32.mrb[0].mxu0
        %v1598 = vadd.f32 %v1037, %v1597
        %v1599 = vpop.f32.mrb[0].mxu0
        %v1600 = vadd.f32 %v1039, %v1599
        %1601 = vdwg.mxu0
        %v1602 = vld [vmem:[%s4] sm:$0xff]
        %v1604 = vlaneseq
        %v1605 = vshrl.u32 %v1604, 7
        %v1606 = vsub.s32 0, %v1605
        %v1607 = vrot.slane %v1602, %v1606
        %v1608 = vlaneseq
        %v1609 = vshrl.u32 %v1608, 7
        %v1610 = vsub.s32 1, %v1609
        %v1611 = vrot.slane %v1602, %v1610
        %v1612 = vlaneseq
        %v1613 = vshrl.u32 %v1612, 7
        %v1614 = vsub.s32 2, %v1613
        %v1615 = vrot.slane %v1602, %v1614
        %v1616 = vlaneseq
        %v1617 = vshrl.u32 %v1616, 7
        %v1618 = vsub.s32 3, %v1617
        %v1619 = vrot.slane %v1602, %v1618
        %v1620 = vlaneseq
        %v1621 = vshrl.u32 %v1620, 7
        %v1622 = vsub.s32 4, %v1621
        %v1623 = vrot.slane %v1602, %v1622
        %v1624 = vlaneseq
        %v1625 = vshrl.u32 %v1624, 7
        %v1626 = vsub.s32 5, %v1625
        %v1627 = vrot.slane %v1602, %v1626
        %v1628 = vlaneseq
        %v1629 = vshrl.u32 %v1628, 7
        %v1630 = vsub.s32 6, %v1629
        %v1631 = vrot.slane %v1602, %v1630
        %v1632 = vlaneseq
        %v1633 = vshrl.u32 %v1632, 7
        %v1634 = vsub.s32 7, %v1633
        %v1635 = vrot.slane %v1602, %v1634
        %v1644 = vadd.f32 %v1185, %v1607
        %v1645 = vadd.f32 %v1187, %v1611
        %v1646 = vadd.f32 %v1298, %v1615
        %v1647 = vadd.f32 %v1300, %v1619
        %v1648 = vadd.f32 %v1411, %v1623
        %v1649 = vadd.f32 %v1413, %v1627
        %v1650 = vadd.f32 %v1524, %v1631
        %v1651 = vadd.f32 %v1526, %v1635
        %v1652 = vadd.f32 %v1189, %v1607
        %v1653 = vadd.f32 %v1191, %v1611
        %v1654 = vadd.f32 %v1302, %v1615
        %v1655 = vadd.f32 %v1304, %v1619
        %v1656 = vadd.f32 %v1415, %v1623
        %v1657 = vadd.f32 %v1417, %v1627
        %v1658 = vadd.f32 %v1528, %v1631
        %v1659 = vadd.f32 %v1530, %v1635
        %v1660 = vadd.f32 %v1195, %v1607
        %v1661 = vadd.f32 %v1197, %v1611
        %v1662 = vadd.f32 %v1308, %v1615
        %v1663 = vadd.f32 %v1310, %v1619
        %v1664 = vadd.f32 %v1421, %v1623
        %v1665 = vadd.f32 %v1423, %v1627
        %v1666 = vadd.f32 %v1534, %v1631
        %v1667 = vadd.f32 %v1536, %v1635
        %v1668 = vadd.f32 %v1199, %v1607
        %v1669 = vadd.f32 %v1201, %v1611
        %v1670 = vadd.f32 %v1312, %v1615
        %v1671 = vadd.f32 %v1314, %v1619
        %v1672 = vadd.f32 %v1425, %v1623
        %v1673 = vadd.f32 %v1427, %v1627
        %v1674 = vadd.f32 %v1538, %v1631
        %v1675 = vadd.f32 %v1540, %v1635
        %v1676 = vadd.f32 %v1205, %v1607
        %v1677 = vadd.f32 %v1207, %v1611
        %v1678 = vadd.f32 %v1318, %v1615
        %v1679 = vadd.f32 %v1320, %v1619
        %v1680 = vadd.f32 %v1431, %v1623
        %v1681 = vadd.f32 %v1433, %v1627
        %v1682 = vadd.f32 %v1544, %v1631
        %v1683 = vadd.f32 %v1546, %v1635
        %v1684 = vadd.f32 %v1209, %v1607
        %v1685 = vadd.f32 %v1211, %v1611
        %v1686 = vadd.f32 %v1322, %v1615
        %v1687 = vadd.f32 %v1324, %v1619
        %v1688 = vadd.f32 %v1435, %v1623
        %v1689 = vadd.f32 %v1437, %v1627
        %v1690 = vadd.f32 %v1548, %v1631
        %v1691 = vadd.f32 %v1550, %v1635
        %v1692 = vadd.f32 %v1215, %v1607
        %v1693 = vadd.f32 %v1217, %v1611
        %v1694 = vadd.f32 %v1328, %v1615
        %v1695 = vadd.f32 %v1330, %v1619
        %v1696 = vadd.f32 %v1441, %v1623
        %v1697 = vadd.f32 %v1443, %v1627
        %v1698 = vadd.f32 %v1554, %v1631
        %v1699 = vadd.f32 %v1556, %v1635
        %v1700 = vadd.f32 %v1219, %v1607
        %v1701 = vadd.f32 %v1221, %v1611
        %v1702 = vadd.f32 %v1332, %v1615
        %v1703 = vadd.f32 %v1334, %v1619
        %v1704 = vadd.f32 %v1445, %v1623
        %v1705 = vadd.f32 %v1447, %v1627
        %v1706 = vadd.f32 %v1558, %v1631
        %v1707 = vadd.f32 %v1560, %v1635
        %v1708 = vadd.f32 %v1225, %v1607
        %v1709 = vadd.f32 %v1227, %v1611
        %v1710 = vadd.f32 %v1338, %v1615
        %v1711 = vadd.f32 %v1340, %v1619
        %v1712 = vadd.f32 %v1451, %v1623
        %v1713 = vadd.f32 %v1453, %v1627
        %v1714 = vadd.f32 %v1564, %v1631
        %v1715 = vadd.f32 %v1566, %v1635
        %v1716 = vadd.f32 %v1229, %v1607
        %v1717 = vadd.f32 %v1231, %v1611
        %v1718 = vadd.f32 %v1342, %v1615
        %v1719 = vadd.f32 %v1344, %v1619
        %v1720 = vadd.f32 %v1455, %v1623
        %v1721 = vadd.f32 %v1457, %v1627
        %v1722 = vadd.f32 %v1568, %v1631
        %v1723 = vadd.f32 %v1570, %v1635
        %v1724 = vadd.f32 %v1235, %v1607
        %v1725 = vadd.f32 %v1237, %v1611
        %v1726 = vadd.f32 %v1348, %v1615
        %v1727 = vadd.f32 %v1350, %v1619
        %v1728 = vadd.f32 %v1461, %v1623
        %v1729 = vadd.f32 %v1463, %v1627
        %v1730 = vadd.f32 %v1574, %v1631
        %v1731 = vadd.f32 %v1576, %v1635
        %v1732 = vadd.f32 %v1239, %v1607
        %v1733 = vadd.f32 %v1241, %v1611
        %v1734 = vadd.f32 %v1352, %v1615
        %v1735 = vadd.f32 %v1354, %v1619
        %v1736 = vadd.f32 %v1465, %v1623
        %v1737 = vadd.f32 %v1467, %v1627
        %v1738 = vadd.f32 %v1578, %v1631
        %v1739 = vadd.f32 %v1580, %v1635
        %v1740 = vadd.f32 %v1245, %v1607
        %v1741 = vadd.f32 %v1247, %v1611
        %v1742 = vadd.f32 %v1358, %v1615
        %v1743 = vadd.f32 %v1360, %v1619
        %v1744 = vadd.f32 %v1471, %v1623
        %v1745 = vadd.f32 %v1473, %v1627
        %v1746 = vadd.f32 %v1584, %v1631
        %v1747 = vadd.f32 %v1586, %v1635
        %v1748 = vadd.f32 %v1249, %v1607
        %v1749 = vadd.f32 %v1251, %v1611
        %v1750 = vadd.f32 %v1362, %v1615
        %v1751 = vadd.f32 %v1364, %v1619
        %v1752 = vadd.f32 %v1475, %v1623
        %v1753 = vadd.f32 %v1477, %v1627
        %v1754 = vadd.f32 %v1588, %v1631
        %v1755 = vadd.f32 %v1590, %v1635
        %v1756 = vadd.f32 %v1255, %v1607
        %v1757 = vadd.f32 %v1257, %v1611
        %v1758 = vadd.f32 %v1368, %v1615
        %v1759 = vadd.f32 %v1370, %v1619
        %v1760 = vadd.f32 %v1481, %v1623
        %v1761 = vadd.f32 %v1483, %v1627
        %v1762 = vadd.f32 %v1594, %v1631
        %v1763 = vadd.f32 %v1596, %v1635
        %v1764 = vadd.f32 %v1259, %v1607
        %v1765 = vadd.f32 %v1261, %v1611
        %v1766 = vadd.f32 %v1372, %v1615
        %v1767 = vadd.f32 %v1374, %v1619
        %v1768 = vadd.f32 %v1485, %v1623
        %v1769 = vadd.f32 %v1487, %v1627
        %v1770 = vadd.f32 %v1598, %v1631
        %v1771 = vadd.f32 %v1600, %v1635
        %v1772 = vmax.f32 %v1644, 0.0
        %v1773 = vmax.f32 %v1645, 0.0
        %v1774 = vmax.f32 %v1646, 0.0
        %v1775 = vmax.f32 %v1647, 0.0
        %v1776 = vmax.f32 %v1648, 0.0
        %v1777 = vmax.f32 %v1649, 0.0
        %v1778 = vmax.f32 %v1650, 0.0
        %v1779 = vmax.f32 %v1651, 0.0
        %v1780 = vmax.f32 %v1652, 0.0
        %v1781 = vmax.f32 %v1653, 0.0
        %v1782 = vmax.f32 %v1654, 0.0
        %v1783 = vmax.f32 %v1655, 0.0
        %v1784 = vmax.f32 %v1656, 0.0
        %v1785 = vmax.f32 %v1657, 0.0
        %v1786 = vmax.f32 %v1658, 0.0
        %v1787 = vmax.f32 %v1659, 0.0
        %v1788 = vmax.f32 %v1660, 0.0
        %v1789 = vmax.f32 %v1661, 0.0
        %v1790 = vmax.f32 %v1662, 0.0
        %v1791 = vmax.f32 %v1663, 0.0
        %v1792 = vmax.f32 %v1664, 0.0
        %v1793 = vmax.f32 %v1665, 0.0
        %v1794 = vmax.f32 %v1666, 0.0
        %v1795 = vmax.f32 %v1667, 0.0
        %v1796 = vmax.f32 %v1668, 0.0
        %v1797 = vmax.f32 %v1669, 0.0
        %v1798 = vmax.f32 %v1670, 0.0
        %v1799 = vmax.f32 %v1671, 0.0
        %v1800 = vmax.f32 %v1672, 0.0
        %v1801 = vmax.f32 %v1673, 0.0
        %v1802 = vmax.f32 %v1674, 0.0
        %v1803 = vmax.f32 %v1675, 0.0
        %v1804 = vmax.f32 %v1676, 0.0
        %v1805 = vmax.f32 %v1677, 0.0
        %v1806 = vmax.f32 %v1678, 0.0
        %v1807 = vmax.f32 %v1679, 0.0
        %v1808 = vmax.f32 %v1680, 0.0
        %v1809 = vmax.f32 %v1681, 0.0
        %v1810 = vmax.f32 %v1682, 0.0
        %v1811 = vmax.f32 %v1683, 0.0
        %v1812 = vmax.f32 %v1684, 0.0
        %v1813 = vmax.f32 %v1685, 0.0
        %v1814 = vmax.f32 %v1686, 0.0
        %v1815 = vmax.f32 %v1687, 0.0
        %v1816 = vmax.f32 %v1688, 0.0
        %v1817 = vmax.f32 %v1689, 0.0
        %v1818 = vmax.f32 %v1690, 0.0
        %v1819 = vmax.f32 %v1691, 0.0
        %v1820 = vmax.f32 %v1692, 0.0
        %v1821 = vmax.f32 %v1693, 0.0
        %v1822 = vmax.f32 %v1694, 0.0
        %v1823 = vmax.f32 %v1695, 0.0
        %v1824 = vmax.f32 %v1696, 0.0
        %v1825 = vmax.f32 %v1697, 0.0
        %v1826 = vmax.f32 %v1698, 0.0
        %v1827 = vmax.f32 %v1699, 0.0
        %v1828 = vmax.f32 %v1700, 0.0
        %v1829 = vmax.f32 %v1701, 0.0
        %v1830 = vmax.f32 %v1702, 0.0
        %v1831 = vmax.f32 %v1703, 0.0
        %v1832 = vmax.f32 %v1704, 0.0
        %v1833 = vmax.f32 %v1705, 0.0
        %v1834 = vmax.f32 %v1706, 0.0
        %v1835 = vmax.f32 %v1707, 0.0
        %v1836 = vmax.f32 %v1708, 0.0
        %v1837 = vmax.f32 %v1709, 0.0
        %v1838 = vmax.f32 %v1710, 0.0
        %v1839 = vmax.f32 %v1711, 0.0
        %v1840 = vmax.f32 %v1712, 0.0
        %v1841 = vmax.f32 %v1713, 0.0
        %v1842 = vmax.f32 %v1714, 0.0
        %v1843 = vmax.f32 %v1715, 0.0
        %v1844 = vmax.f32 %v1716, 0.0
        %v1845 = vmax.f32 %v1717, 0.0
        %v1846 = vmax.f32 %v1718, 0.0
        %v1847 = vmax.f32 %v1719, 0.0
        %v1848 = vmax.f32 %v1720, 0.0
        %v1849 = vmax.f32 %v1721, 0.0
        %v1850 = vmax.f32 %v1722, 0.0
        %v1851 = vmax.f32 %v1723, 0.0
        %v1852 = vmax.f32 %v1724, 0.0
        %v1853 = vmax.f32 %v1725, 0.0
        %v1854 = vmax.f32 %v1726, 0.0
        %v1855 = vmax.f32 %v1727, 0.0
        %v1856 = vmax.f32 %v1728, 0.0
        %v1857 = vmax.f32 %v1729, 0.0
        %v1858 = vmax.f32 %v1730, 0.0
        %v1859 = vmax.f32 %v1731, 0.0
        %v1860 = vmax.f32 %v1732, 0.0
        %v1861 = vmax.f32 %v1733, 0.0
        %v1862 = vmax.f32 %v1734, 0.0
        %v1863 = vmax.f32 %v1735, 0.0
        %v1864 = vmax.f32 %v1736, 0.0
        %v1865 = vmax.f32 %v1737, 0.0
        %v1866 = vmax.f32 %v1738, 0.0
        %v1867 = vmax.f32 %v1739, 0.0
        %v1868 = vmax.f32 %v1740, 0.0
        %v1869 = vmax.f32 %v1741, 0.0
        %v1870 = vmax.f32 %v1742, 0.0
        %v1871 = vmax.f32 %v1743, 0.0
        %v1872 = vmax.f32 %v1744, 0.0
        %v1873 = vmax.f32 %v1745, 0.0
        %v1874 = vmax.f32 %v1746, 0.0
        %v1875 = vmax.f32 %v1747, 0.0
        %v1876 = vmax.f32 %v1748, 0.0
        %v1877 = vmax.f32 %v1749, 0.0
        %v1878 = vmax.f32 %v1750, 0.0
        %v1879 = vmax.f32 %v1751, 0.0
        %v1880 = vmax.f32 %v1752, 0.0
        %v1881 = vmax.f32 %v1753, 0.0
        %v1882 = vmax.f32 %v1754, 0.0
        %v1883 = vmax.f32 %v1755, 0.0
        %v1884 = vmax.f32 %v1756, 0.0
        %v1885 = vmax.f32 %v1757, 0.0
        %v1886 = vmax.f32 %v1758, 0.0
        %v1887 = vmax.f32 %v1759, 0.0
        %v1888 = vmax.f32 %v1760, 0.0
        %v1889 = vmax.f32 %v1761, 0.0
        %v1890 = vmax.f32 %v1762, 0.0
        %v1891 = vmax.f32 %v1763, 0.0
        %v1892 = vmax.f32 %v1764, 0.0
        %v1893 = vmax.f32 %v1765, 0.0
        %v1894 = vmax.f32 %v1766, 0.0
        %v1895 = vmax.f32 %v1767, 0.0
        %v1896 = vmax.f32 %v1768, 0.0
        %v1897 = vmax.f32 %v1769, 0.0
        %v1898 = vmax.f32 %v1770, 0.0
        %v1899 = vmax.f32 %v1771, 0.0
        %v1900 = vpack.c.bf16 %v1780, %v1772
        %v1901 = vpack.c.bf16 %v1781, %v1773
        %v1902 = vpack.c.bf16 %v1782, %v1774
        %v1903 = vpack.c.bf16 %v1783, %v1775
        %v1904 = vpack.c.bf16 %v1796, %v1788
        %v1905 = vpack.c.bf16 %v1797, %v1789
        %v1906 = vpack.c.bf16 %v1798, %v1790
        %v1907 = vpack.c.bf16 %v1799, %v1791
        %v1908 = vpack.c.bf16 %v1812, %v1804
        %v1909 = vpack.c.bf16 %v1813, %v1805
        %v1910 = vpack.c.bf16 %v1814, %v1806
        %v1911 = vpack.c.bf16 %v1815, %v1807
        %v1912 = vpack.c.bf16 %v1828, %v1820
        %v1913 = vpack.c.bf16 %v1829, %v1821
        %v1914 = vpack.c.bf16 %v1830, %v1822
        %v1915 = vpack.c.bf16 %v1831, %v1823
        %v1916 = vpack.c.bf16 %v1844, %v1836
        %v1917 = vpack.c.bf16 %v1845, %v1837
        %v1918 = vpack.c.bf16 %v1846, %v1838
        %v1919 = vpack.c.bf16 %v1847, %v1839
        %v1920 = vpack.c.bf16 %v1860, %v1852
        %v1921 = vpack.c.bf16 %v1861, %v1853
        %v1922 = vpack.c.bf16 %v1862, %v1854
        %v1923 = vpack.c.bf16 %v1863, %v1855
        %v1924 = vpack.c.bf16 %v1876, %v1868
        %v1925 = vpack.c.bf16 %v1877, %v1869
        %v1926 = vpack.c.bf16 %v1878, %v1870
        %v1927 = vpack.c.bf16 %v1879, %v1871
        %v1928 = vpack.c.bf16 %v1892, %v1884
        %v1929 = vpack.c.bf16 %v1893, %v1885
        %v1930 = vpack.c.bf16 %v1894, %v1886
        %v1931 = vpack.c.bf16 %v1895, %v1887
        %v1932 = vpack.c.bf16 %v1784, %v1776
        %v1933 = vpack.c.bf16 %v1785, %v1777
        %v1934 = vpack.c.bf16 %v1786, %v1778
        %v1935 = vpack.c.bf16 %v1787, %v1779
        %v1936 = vpack.c.bf16 %v1800, %v1792
        %v1937 = vpack.c.bf16 %v1801, %v1793
        %v1938 = vpack.c.bf16 %v1802, %v1794
        %v1939 = vpack.c.bf16 %v1803, %v1795
        %v1940 = vpack.c.bf16 %v1816, %v1808
        %v1941 = vpack.c.bf16 %v1817, %v1809
        %v1942 = vpack.c.bf16 %v1818, %v1810
        %v1943 = vpack.c.bf16 %v1819, %v1811
        %v1944 = vpack.c.bf16 %v1832, %v1824
        %v1945 = vpack.c.bf16 %v1833, %v1825
        %v1946 = vpack.c.bf16 %v1834, %v1826
        %v1947 = vpack.c.bf16 %v1835, %v1827
        %v1948 = vpack.c.bf16 %v1848, %v1840
        %v1949 = vpack.c.bf16 %v1849, %v1841
        %v1950 = vpack.c.bf16 %v1850, %v1842
        %v1951 = vpack.c.bf16 %v1851, %v1843
        %v1952 = vpack.c.bf16 %v1864, %v1856
        %v1953 = vpack.c.bf16 %v1865, %v1857
        %v1954 = vpack.c.bf16 %v1866, %v1858
        %v1955 = vpack.c.bf16 %v1867, %v1859
        %v1956 = vpack.c.bf16 %v1880, %v1872
        %v1957 = vpack.c.bf16 %v1881, %v1873
        %v1958 = vpack.c.bf16 %v1882, %v1874
        %v1959 = vpack.c.bf16 %v1883, %v1875
        %v1960 = vpack.c.bf16 %v1896, %v1888
        %v1961 = vpack.c.bf16 %v1897, %v1889
        %v1962 = vpack.c.bf16 %v1898, %v1890
        %v1963 = vpack.c.bf16 %v1899, %v1891
        %v1964 = vld [vmem:[%s5] sm:$0xff]
        %v1965 = vld [vmem:[%s5 + $0x8] sm:$0xf]
        %v1966 = vld [vmem:[%s5 + $0xc] sm:$0xff]
        %v1967 = vld [vmem:[%s5 + $0x14] sm:$0xf]
        %v1968 = vld [vmem:[%s5 + $0x18] sm:$0xff]
        %v1969 = vld [vmem:[%s5 + $0x20] sm:$0xf]
        %v1970 = vld [vmem:[%s5 + $0x24] sm:$0xff]
        %v1971 = vld [vmem:[%s5 + $0x2c] sm:$0xf]
        %v1972 = vld [vmem:[%s5 + $0x30] sm:$0xff]
        %v1973 = vld [vmem:[%s5 + $0x38] sm:$0xf]
        %v1974 = vld [vmem:[%s5 + $0x3c] sm:$0xff]
        %v1975 = vld [vmem:[%s5 + $0x44] sm:$0xf]
        %v1976 = vld [vmem:[%s5 + $0x48] sm:$0xff]
        %v1977 = vld [vmem:[%s5 + $0x50] sm:$0xf]
        %v1978 = vld [vmem:[%s5 + $0x54] sm:$0xff]
        %v1979 = vld [vmem:[%s5 + $0x5c] sm:$0xf]
        %v1980 = vld [vmem:[%s5 + $0x60] sm:$0xff]
        %v1981 = vld [vmem:[%s5 + $0x68] sm:$0xf]
        %v1982 = vld [vmem:[%s5 + $0x6c] sm:$0xff]
        %v1983 = vld [vmem:[%s5 + $0x74] sm:$0xf]
        %v1984 = vld [vmem:[%s5 + $0x78] sm:$0xff]
        %v1985 = vld [vmem:[%s5 + $0x80] sm:$0xf]
        %v1986 = vld [vmem:[%s5 + $0x84] sm:$0xff]
        %v1987 = vld [vmem:[%s5 + $0x8c] sm:$0xf]
        %v1988 = vld [vmem:[%s5 + $0x90] sm:$0xff]
        %v1989 = vld [vmem:[%s5 + $0x98] sm:$0xf]
        %v1990 = vld [vmem:[%s5 + $0x9c] sm:$0xff]
        %v1991 = vld [vmem:[%s5 + $0xa4] sm:$0xf]
        %v1992 = vld [vmem:[%s5 + $0xa8] sm:$0xff]
        %v1993 = vld [vmem:[%s5 + $0xb0] sm:$0xf]
        %v1994 = vld [vmem:[%s5 + $0xb4] sm:$0xff]
        %v1995 = vld [vmem:[%s5 + $0xbc] sm:$0xf]
        %v1996 = vld [vmem:[%s5 + $0xc0] sm:$0xff]
        %v1997 = vld [vmem:[%s5 + $0xc8] sm:$0xf]
        %v1998 = vld [vmem:[%s5 + $0xcc] sm:$0xff]
        %v1999 = vld [vmem:[%s5 + $0xd4] sm:$0xf]
        %v2000 = vld [vmem:[%s5 + $0xd8] sm:$0xff]
        %v2001 = vld [vmem:[%s5 + $0xe0] sm:$0xf]
        %v2002 = vld [vmem:[%s5 + $0xe4] sm:$0xff]
        %v2003 = vld [vmem:[%s5 + $0xec] sm:$0xf]
        %v2004 = vld [vmem:[%s5 + $0xf0] sm:$0xff]
        %v2005 = vld [vmem:[%s5 + $0xf8] sm:$0xf]
        %v2006 = vld [vmem:[%s5 + $0xfc] sm:$0xff]
        %v2007 = vld [vmem:[%s5 + $0x104] sm:$0xf]
        %v2008 = vld [vmem:[%s5 + $0x108] sm:$0xff]
        %v2009 = vld [vmem:[%s5 + $0x110] sm:$0xf]
        %v2010 = vld [vmem:[%s5 + $0x114] sm:$0xff]
        %v2011 = vld [vmem:[%s5 + $0x11c] sm:$0xf]
        %v2012 = vld [vmem:[%s5 + $0x120] sm:$0xff]
        %v2013 = vld [vmem:[%s5 + $0x128] sm:$0xf]
        %v2014 = vld [vmem:[%s5 + $0x12c] sm:$0xff]
        %v2015 = vld [vmem:[%s5 + $0x134] sm:$0xf]
        %v2016 = vld [vmem:[%s5 + $0x138] sm:$0xff]
        %v2017 = vld [vmem:[%s5 + $0x140] sm:$0xf]
        %v2018 = vld [vmem:[%s5 + $0x144] sm:$0xff]
        %v2019 = vld [vmem:[%s5 + $0x14c] sm:$0xf]
        %v2020 = vld [vmem:[%s5 + $0x150] sm:$0xff]
        %v2021 = vld [vmem:[%s5 + $0x158] sm:$0xf]
        %v2022 = vld [vmem:[%s5 + $0x15c] sm:$0xff]
        %v2023 = vld [vmem:[%s5 + $0x164] sm:$0xf]
        %v2024 = vld [vmem:[%s5 + $0x168] sm:$0xff]
        %v2025 = vld [vmem:[%s5 + $0x170] sm:$0xf]
        %v2026 = vld [vmem:[%s5 + $0x174] sm:$0xff]
        %v2027 = vld [vmem:[%s5 + $0x17c] sm:$0xf]
        %v2028 = vld [vmem:[%s5 + $0x180] sm:$0xff]
        %v2029 = vld [vmem:[%s5 + $0x188] sm:$0xf]
        %v2030 = vld [vmem:[%s5 + $0x18c] sm:$0xff]
        %v2031 = vld [vmem:[%s5 + $0x194] sm:$0xf]
        %v2032 = vld [vmem:[%s5 + $0x198] sm:$0xff]
        %v2033 = vld [vmem:[%s5 + $0x1a0] sm:$0xf]
        %v2034 = vld [vmem:[%s5 + $0x1a4] sm:$0xff]
        %v2035 = vld [vmem:[%s5 + $0x1ac] sm:$0xf]
        %v2036 = vld [vmem:[%s5 + $0x1b0] sm:$0xff]
        %v2037 = vld [vmem:[%s5 + $0x1b8] sm:$0xf]
        %v2038 = vld [vmem:[%s5 + $0x1bc] sm:$0xff]
        %v2039 = vld [vmem:[%s5 + $0x1c4] sm:$0xf]
        %v2040 = vld [vmem:[%s5 + $0x1c8] sm:$0xff]
        %v2041 = vld [vmem:[%s5 + $0x1d0] sm:$0xf]
        %v2042 = vld [vmem:[%s5 + $0x1d4] sm:$0xff]
        %v2043 = vld [vmem:[%s5 + $0x1dc] sm:$0xf]
        %v2044 = vld [vmem:[%s5 + $0x1e0] sm:$0xff]
        %v2045 = vld [vmem:[%s5 + $0x1e8] sm:$0xf]
        %v2046 = vld [vmem:[%s5 + $0x1ec] sm:$0xff]
        %v2047 = vld [vmem:[%s5 + $0x1f4] sm:$0xf]
        %v2048 = vld [vmem:[%s5 + $0x1f8] sm:$0xff]
        %v2049 = vld [vmem:[%s5 + $0x200] sm:$0xf]
        %v2050 = vld [vmem:[%s5 + $0x204] sm:$0xff]
        %v2051 = vld [vmem:[%s5 + $0x20c] sm:$0xf]
        %v2052 = vld [vmem:[%s5 + $0x210] sm:$0xff]
        %v2053 = vld [vmem:[%s5 + $0x218] sm:$0xf]
        %v2054 = vld [vmem:[%s5 + $0x21c] sm:$0xff]
        %v2055 = vld [vmem:[%s5 + $0x224] sm:$0xf]
        %v2056 = vld [vmem:[%s5 + $0x228] sm:$0xff]
        %v2057 = vld [vmem:[%s5 + $0x230] sm:$0xf]
        %v2058 = vld [vmem:[%s5 + $0x234] sm:$0xff]
        %v2059 = vld [vmem:[%s5 + $0x23c] sm:$0xf]
        %v2060 = vld [vmem:[%s5 + $0x240] sm:$0xff]
        %v2061 = vld [vmem:[%s5 + $0x248] sm:$0xf]
        %v2062 = vld [vmem:[%s5 + $0x24c] sm:$0xff]
        %v2063 = vld [vmem:[%s5 + $0x254] sm:$0xf]
        %v2064 = vld [vmem:[%s5 + $0x258] sm:$0xff]
        %v2065 = vld [vmem:[%s5 + $0x260] sm:$0xf]
        %v2066 = vld [vmem:[%s5 + $0x264] sm:$0xff]
        %v2067 = vld [vmem:[%s5 + $0x26c] sm:$0xf]
        %v2068 = vld [vmem:[%s5 + $0x270] sm:$0xff]
        %v2069 = vld [vmem:[%s5 + $0x278] sm:$0xf]
        %v2070 = vld [vmem:[%s5 + $0x27c] sm:$0xff]
        %v2071 = vld [vmem:[%s5 + $0x284] sm:$0xf]
        %v2072 = vld [vmem:[%s5 + $0x288] sm:$0xff]
        %v2073 = vld [vmem:[%s5 + $0x290] sm:$0xf]
        %v2074 = vld [vmem:[%s5 + $0x294] sm:$0xff]
        %v2075 = vld [vmem:[%s5 + $0x29c] sm:$0xf]
        %v2076 = vld [vmem:[%s5 + $0x2a0] sm:$0xff]
        %v2077 = vld [vmem:[%s5 + $0x2a8] sm:$0xf]
        %v2078 = vld [vmem:[%s5 + $0x2ac] sm:$0xff]
        %v2079 = vld [vmem:[%s5 + $0x2b4] sm:$0xf]
        %v2080 = vld [vmem:[%s5 + $0x2b8] sm:$0xff]
        %v2081 = vld [vmem:[%s5 + $0x2c0] sm:$0xf]
        %v2082 = vld [vmem:[%s5 + $0x2c4] sm:$0xff]
        %v2083 = vld [vmem:[%s5 + $0x2cc] sm:$0xf]
        %v2084 = vld [vmem:[%s5 + $0x2d0] sm:$0xff]
        %v2085 = vld [vmem:[%s5 + $0x2d8] sm:$0xf]
        %v2086 = vld [vmem:[%s5 + $0x2dc] sm:$0xff]
        %v2087 = vld [vmem:[%s5 + $0x2e4] sm:$0xf]
        %v2088 = vld [vmem:[%s5 + $0x2e8] sm:$0xff]
        %v2089 = vld [vmem:[%s5 + $0x2f0] sm:$0xf]
        %v2090 = vld [vmem:[%s5 + $0x2f4] sm:$0xff]
        %v2091 = vld [vmem:[%s5 + $0x2fc] sm:$0xf]
        %v2092 = vld [vmem:[%s6] sm:$0x7]
        %v2094 = vlaneseq
        %v2095 = vshrl.u32 %v2094, 7
        %v2096 = vsub.s32 0, %v2095
        %v2097 = vrot.slane %v2092, %v2096
        %v2098 = vlaneseq
        %v2099 = vshrl.u32 %v2098, 7
        %v2100 = vsub.s32 1, %v2099
        %v2101 = vrot.slane %v2092, %v2100
        %v2102 = vlaneseq
        %v2103 = vshrl.u32 %v2102, 7
        %v2104 = vsub.s32 2, %v2103
        %v2105 = vrot.slane %v2092, %v2104
        %v2237 = vunpack.c.l.b16 %v1964
        %v2238 = vunpack.c.h.b16 %v1964
        %v2239 = vunpack.c.l.b16 %v1965
        %v2240 = vunpack.c.l.b16 %v1966
        %v2241 = vunpack.c.h.b16 %v1966
        %v2242 = vunpack.c.l.b16 %v1967
        %v2243 = vunpack.c.l.b16 %v1968
        %v2244 = vunpack.c.h.b16 %v1968
        %v2245 = vunpack.c.l.b16 %v1969
        %v2246 = vunpack.c.l.b16 %v1970
        %v2247 = vunpack.c.h.b16 %v1970
        %v2248 = vunpack.c.l.b16 %v1971
        %v2249 = vunpack.c.l.b16 %v1972
        %v2250 = vunpack.c.h.b16 %v1972
        %v2251 = vunpack.c.l.b16 %v1973
        %v2252 = vunpack.c.l.b16 %v1974
        %v2253 = vunpack.c.h.b16 %v1974
        %v2254 = vunpack.c.l.b16 %v1975
        %v2255 = vunpack.c.l.b16 %v1976
        %v2256 = vunpack.c.h.b16 %v1976
        %v2257 = vunpack.c.l.b16 %v1977
        %v2258 = vunpack.c.l.b16 %v1978
        %v2259 = vunpack.c.h.b16 %v1978
        %v2260 = vunpack.c.l.b16 %v1979
        %v2261 = vunpack.c.l.b16 %v1980
        %v2262 = vunpack.c.h.b16 %v1980
        %v2263 = vunpack.c.l.b16 %v1981
        %v2264 = vunpack.c.l.b16 %v1982
        %v2265 = vunpack.c.h.b16 %v1982
        %v2266 = vunpack.c.l.b16 %v1983
        %v2267 = vunpack.c.l.b16 %v1984
        %v2268 = vunpack.c.h.b16 %v1984
        %v2269 = vunpack.c.l.b16 %v1985
        %v2270 = vunpack.c.l.b16 %v1986
        %v2271 = vunpack.c.h.b16 %v1986
        %v2272 = vunpack.c.l.b16 %v1987
        %v2273 = vunpack.c.l.b16 %v1988
        %v2274 = vunpack.c.h.b16 %v1988
        %v2275 = vunpack.c.l.b16 %v1989
        %v2276 = vunpack.c.l.b16 %v1990
        %v2277 = vunpack.c.h.b16 %v1990
        %v2278 = vunpack.c.l.b16 %v1991
        %v2279 = vunpack.c.l.b16 %v1992
        %v2280 = vunpack.c.h.b16 %v1992
        %v2281 = vunpack.c.l.b16 %v1993
        %v2282 = vunpack.c.l.b16 %v1994
        %v2283 = vunpack.c.h.b16 %v1994
        %v2284 = vunpack.c.l.b16 %v1995
        %v2285 = vunpack.c.l.b16 %v1996
        %v2286 = vunpack.c.h.b16 %v1996
        %v2287 = vunpack.c.l.b16 %v1997
        %v2288 = vunpack.c.l.b16 %v1998
        %v2289 = vunpack.c.h.b16 %v1998
        %v2290 = vunpack.c.l.b16 %v1999
        %v2291 = vunpack.c.l.b16 %v2000
        %v2292 = vunpack.c.h.b16 %v2000
        %v2293 = vunpack.c.l.b16 %v2001
        %v2294 = vunpack.c.l.b16 %v2002
        %v2295 = vunpack.c.h.b16 %v2002
        %v2296 = vunpack.c.l.b16 %v2003
        %v2297 = vunpack.c.l.b16 %v2004
        %v2298 = vunpack.c.h.b16 %v2004
        %v2299 = vunpack.c.l.b16 %v2005
        %v2300 = vunpack.c.l.b16 %v2006
        %v2301 = vunpack.c.h.b16 %v2006
        %v2302 = vunpack.c.l.b16 %v2007
        %v2303 = vunpack.c.l.b16 %v2008
        %v2304 = vunpack.c.h.b16 %v2008
        %v2305 = vunpack.c.l.b16 %v2009
        %v2306 = vunpack.c.l.b16 %v2010
        %v2307 = vunpack.c.h.b16 %v2010
        %v2308 = vunpack.c.l.b16 %v2011
        %v2309 = vunpack.c.l.b16 %v2012
        %v2310 = vunpack.c.h.b16 %v2012
        %v2311 = vunpack.c.l.b16 %v2013
        %v2312 = vunpack.c.l.b16 %v2014
        %v2313 = vunpack.c.h.b16 %v2014
        %v2314 = vunpack.c.l.b16 %v2015
        %v2315 = vunpack.c.l.b16 %v2016
        %v2316 = vunpack.c.h.b16 %v2016
        %v2317 = vunpack.c.l.b16 %v2017
        %v2318 = vunpack.c.l.b16 %v2018
        %v2319 = vunpack.c.h.b16 %v2018
        %v2320 = vunpack.c.l.b16 %v2019
        %v2321 = vunpack.c.l.b16 %v2020
        %v2322 = vunpack.c.h.b16 %v2020
        %v2323 = vunpack.c.l.b16 %v2021
        %v2324 = vunpack.c.l.b16 %v2022
        %v2325 = vunpack.c.h.b16 %v2022
        %v2326 = vunpack.c.l.b16 %v2023
        %v2327 = vunpack.c.l.b16 %v2024
        %v2328 = vunpack.c.h.b16 %v2024
        %v2329 = vunpack.c.l.b16 %v2025
        %v2330 = vunpack.c.l.b16 %v2026
        %v2331 = vunpack.c.h.b16 %v2026
        %v2332 = vunpack.c.l.b16 %v2027
        %v2333 = vunpack.c.l.b16 %v2028
        %v2334 = vunpack.c.h.b16 %v2028
        %v2335 = vunpack.c.l.b16 %v2029
        %v2336 = vunpack.c.l.b16 %v2030
        %v2337 = vunpack.c.h.b16 %v2030
        %v2338 = vunpack.c.l.b16 %v2031
        %v2339 = vunpack.c.l.b16 %v2032
        %v2340 = vunpack.c.h.b16 %v2032
        %v2341 = vunpack.c.l.b16 %v2033
        %v2342 = vunpack.c.l.b16 %v2034
        %v2343 = vunpack.c.h.b16 %v2034
        %v2344 = vunpack.c.l.b16 %v2035
        %v2345 = vunpack.c.l.b16 %v2036
        %v2346 = vunpack.c.h.b16 %v2036
        %v2347 = vunpack.c.l.b16 %v2037
        %v2348 = vunpack.c.l.b16 %v2038
        %v2349 = vunpack.c.h.b16 %v2038
        %v2350 = vunpack.c.l.b16 %v2039
        %v2351 = vunpack.c.l.b16 %v2040
        %v2352 = vunpack.c.h.b16 %v2040
        %v2353 = vunpack.c.l.b16 %v2041
        %v2354 = vunpack.c.l.b16 %v2042
        %v2355 = vunpack.c.h.b16 %v2042
        %v2356 = vunpack.c.l.b16 %v2043
        %v2357 = vunpack.c.l.b16 %v2044
        %v2358 = vunpack.c.h.b16 %v2044
        %v2359 = vunpack.c.l.b16 %v2045
        %v2360 = vunpack.c.l.b16 %v2046
        %v2361 = vunpack.c.h.b16 %v2046
        %v2362 = vunpack.c.l.b16 %v2047
        %v2363 = vunpack.c.l.b16 %v2048
        %v2364 = vunpack.c.h.b16 %v2048
        %v2365 = vunpack.c.l.b16 %v2049
        %v2366 = vunpack.c.l.b16 %v2050
        %v2367 = vunpack.c.h.b16 %v2050
        %v2368 = vunpack.c.l.b16 %v2051
        %v2369 = vunpack.c.l.b16 %v2052
        %v2370 = vunpack.c.h.b16 %v2052
        %v2371 = vunpack.c.l.b16 %v2053
        %v2372 = vunpack.c.l.b16 %v2054
        %v2373 = vunpack.c.h.b16 %v2054
        %v2374 = vunpack.c.l.b16 %v2055
        %v2375 = vunpack.c.l.b16 %v2056
        %v2376 = vunpack.c.h.b16 %v2056
        %v2377 = vunpack.c.l.b16 %v2057
        %v2378 = vunpack.c.l.b16 %v2058
        %v2379 = vunpack.c.h.b16 %v2058
        %v2380 = vunpack.c.l.b16 %v2059
        %v2381 = vunpack.c.l.b16 %v2060
        %v2382 = vunpack.c.h.b16 %v2060
        %v2383 = vunpack.c.l.b16 %v2061
        %v2384 = vunpack.c.l.b16 %v2062
        %v2385 = vunpack.c.h.b16 %v2062
        %v2386 = vunpack.c.l.b16 %v2063
        %v2387 = vunpack.c.l.b16 %v2064
        %v2388 = vunpack.c.h.b16 %v2064
        %v2389 = vunpack.c.l.b16 %v2065
        %v2390 = vunpack.c.l.b16 %v2066
        %v2391 = vunpack.c.h.b16 %v2066
        %v2392 = vunpack.c.l.b16 %v2067
        %v2393 = vunpack.c.l.b16 %v2068
        %v2394 = vunpack.c.h.b16 %v2068
        %v2395 = vunpack.c.l.b16 %v2069
        %v2396 = vunpack.c.l.b16 %v2070
        %v2397 = vunpack.c.h.b16 %v2070
        %v2398 = vunpack.c.l.b16 %v2071
        %v2399 = vunpack.c.l.b16 %v2072
        %v2400 = vunpack.c.h.b16 %v2072
        %v2401 = vunpack.c.l.b16 %v2073
        %v2402 = vunpack.c.l.b16 %v2074
        %v2403 = vunpack.c.h.b16 %v2074
        %v2404 = vunpack.c.l.b16 %v2075
        %v2405 = vunpack.c.l.b16 %v2076
        %v2406 = vunpack.c.h.b16 %v2076
        %v2407 = vunpack.c.l.b16 %v2077
        %v2408 = vunpack.c.l.b16 %v2078
        %v2409 = vunpack.c.h.b16 %v2078
        %v2410 = vunpack.c.l.b16 %v2079
        %v2411 = vunpack.c.l.b16 %v2080
        %v2412 = vunpack.c.h.b16 %v2080
        %v2413 = vunpack.c.l.b16 %v2081
        %v2414 = vunpack.c.l.b16 %v2082
        %v2415 = vunpack.c.h.b16 %v2082
        %v2416 = vunpack.c.l.b16 %v2083
        %v2417 = vunpack.c.l.b16 %v2084
        %v2418 = vunpack.c.h.b16 %v2084
        %v2419 = vunpack.c.l.b16 %v2085
        %v2420 = vunpack.c.l.b16 %v2086
        %v2421 = vunpack.c.h.b16 %v2086
        %v2422 = vunpack.c.l.b16 %v2087
        %v2423 = vunpack.c.l.b16 %v2088
        %v2424 = vunpack.c.h.b16 %v2088
        %v2425 = vunpack.c.l.b16 %v2089
        %v2426 = vunpack.c.l.b16 %v2090
        %v2427 = vunpack.c.h.b16 %v2090
        %v2428 = vunpack.c.l.b16 %v2091
        %v2429 = vpack.c.b16 %v2240, %v2237
        %v2430 = vpack.c.b16 %v2241, %v2238
        %v2431 = vpack.c.b16 %v2242, %v2239
        %v2432 = vpack.c.b16 %v2246, %v2243
        %v2433 = vpack.c.b16 %v2247, %v2244
        %v2434 = vpack.c.b16 %v2248, %v2245
        %v2435 = vpack.c.b16 %v2252, %v2249
        %v2436 = vpack.c.b16 %v2253, %v2250
        %v2437 = vpack.c.b16 %v2254, %v2251
        %v2438 = vpack.c.b16 %v2258, %v2255
        %v2439 = vpack.c.b16 %v2259, %v2256
        %v2440 = vpack.c.b16 %v2260, %v2257
        %v2441 = vpack.c.b16 %v2264, %v2261
        %v2442 = vpack.c.b16 %v2265, %v2262
        %v2443 = vpack.c.b16 %v2266, %v2263
        %v2444 = vpack.c.b16 %v2270, %v2267
        %v2445 = vpack.c.b16 %v2271, %v2268
        %v2446 = vpack.c.b16 %v2272, %v2269
        %v2447 = vpack.c.b16 %v2276, %v2273
        %v2448 = vpack.c.b16 %v2277, %v2274
        %v2449 = vpack.c.b16 %v2278, %v2275
        %v2450 = vpack.c.b16 %v2282, %v2279
        %v2451 = vpack.c.b16 %v2283, %v2280
        %v2452 = vpack.c.b16 %v2284, %v2281
        %v2453 = vpack.c.b16 %v2288, %v2285
        %v2454 = vpack.c.b16 %v2289, %v2286
        %v2455 = vpack.c.b16 %v2290, %v2287
        %v2456 = vpack.c.b16 %v2294, %v2291
        %v2457 = vpack.c.b16 %v2295, %v2292
        %v2458 = vpack.c.b16 %v2296, %v2293
        %v2459 = vpack.c.b16 %v2300, %v2297
        %v2460 = vpack.c.b16 %v2301, %v2298
        %v2461 = vpack.c.b16 %v2302, %v2299
        %v2462 = vpack.c.b16 %v2306, %v2303
        %v2463 = vpack.c.b16 %v2307, %v2304
        %v2464 = vpack.c.b16 %v2308, %v2305
        %v2465 = vpack.c.b16 %v2312, %v2309
        %v2466 = vpack.c.b16 %v2313, %v2310
        %v2467 = vpack.c.b16 %v2314, %v2311
        %v2468 = vpack.c.b16 %v2318, %v2315
        %v2469 = vpack.c.b16 %v2319, %v2316
        %v2470 = vpack.c.b16 %v2320, %v2317
        %v2471 = vpack.c.b16 %v2324, %v2321
        %v2472 = vpack.c.b16 %v2325, %v2322
        %v2473 = vpack.c.b16 %v2326, %v2323
        %v2474 = vpack.c.b16 %v2330, %v2327
        %v2475 = vpack.c.b16 %v2331, %v2328
        %v2476 = vpack.c.b16 %v2332, %v2329
        %v2477 = vpack.c.b16 %v2336, %v2333
        %v2478 = vpack.c.b16 %v2337, %v2334
        %v2479 = vpack.c.b16 %v2338, %v2335
        %v2480 = vpack.c.b16 %v2342, %v2339
        %v2481 = vpack.c.b16 %v2343, %v2340
        %v2482 = vpack.c.b16 %v2344, %v2341
        %v2483 = vpack.c.b16 %v2348, %v2345
        %v2484 = vpack.c.b16 %v2349, %v2346
        %v2485 = vpack.c.b16 %v2350, %v2347
        %v2486 = vpack.c.b16 %v2354, %v2351
        %v2487 = vpack.c.b16 %v2355, %v2352
        %v2488 = vpack.c.b16 %v2356, %v2353
        %v2489 = vpack.c.b16 %v2360, %v2357
        %v2490 = vpack.c.b16 %v2361, %v2358
        %v2491 = vpack.c.b16 %v2362, %v2359
        %v2492 = vpack.c.b16 %v2366, %v2363
        %v2493 = vpack.c.b16 %v2367, %v2364
        %v2494 = vpack.c.b16 %v2368, %v2365
        %v2495 = vpack.c.b16 %v2372, %v2369
        %v2496 = vpack.c.b16 %v2373, %v2370
        %v2497 = vpack.c.b16 %v2374, %v2371
        %v2498 = vpack.c.b16 %v2378, %v2375
        %v2499 = vpack.c.b16 %v2379, %v2376
        %v2500 = vpack.c.b16 %v2380, %v2377
        %v2501 = vpack.c.b16 %v2384, %v2381
        %v2502 = vpack.c.b16 %v2385, %v2382
        %v2503 = vpack.c.b16 %v2386, %v2383
        %v2504 = vpack.c.b16 %v2390, %v2387
        %v2505 = vpack.c.b16 %v2391, %v2388
        %v2506 = vpack.c.b16 %v2392, %v2389
        %v2507 = vpack.c.b16 %v2396, %v2393
        %v2508 = vpack.c.b16 %v2397, %v2394
        %v2509 = vpack.c.b16 %v2398, %v2395
        %v2510 = vpack.c.b16 %v2402, %v2399
        %v2511 = vpack.c.b16 %v2403, %v2400
        %v2512 = vpack.c.b16 %v2404, %v2401
        %v2513 = vpack.c.b16 %v2408, %v2405
        %v2514 = vpack.c.b16 %v2409, %v2406
        %v2515 = vpack.c.b16 %v2410, %v2407
        %v2516 = vpack.c.b16 %v2414, %v2411
        %v2517 = vpack.c.b16 %v2415, %v2412
        %v2518 = vpack.c.b16 %v2416, %v2413
        %v2519 = vpack.c.b16 %v2420, %v2417
        %v2520 = vpack.c.b16 %v2421, %v2418
        %v2521 = vpack.c.b16 %v2422, %v2419
        %v2522 = vpack.c.b16 %v2426, %v2423
        %v2523 = vpack.c.b16 %v2427, %v2424
        %v2524 = vpack.c.b16 %v2428, %v2425
        %2621 = vmatprep.subr.bf16.mxu0 %v2430
        %2622 = vmatpush1.bf16.msra.mxu0 %v2429
        %2623 = vmatprep.subr.bf16.mxu0 %v2433
        %2624 = vmatpush1.bf16.msra.mxu0 %v2432
        %2625 = vmatprep.subr.bf16.mxu0 %v2436
        %2626 = vmatpush1.bf16.msra.mxu0 %v2435
        %2627 = vmatprep.subr.bf16.mxu0 %v2439
        %2628 = vmatpush1.bf16.msra.mxu0 %v2438
        %2629 = vmatprep.subr.bf16.mxu0 %v2442
        %2630 = vmatpush1.bf16.msra.mxu0 %v2441
        %2631 = vmatprep.subr.bf16.mxu0 %v2445
        %2632 = vmatpush1.bf16.msra.mxu0 %v2444
        %2633 = vmatprep.subr.bf16.mxu0 %v2448
        %2634 = vmatpush1.bf16.msra.mxu0 %v2447
        %2635 = vmatprep.subr.bf16.mxu0 %v2451
        %2636 = vmatpush1.bf16.msra.mxu0 %v2450
        %2637 = vmatprep.subr.bf16.mxu0 %v2454
        %2638 = vmatpush1.bf16.msra.mxu0 %v2453
        %2639 = vmatprep.subr.bf16.mxu0 %v2457
        %2640 = vmatpush1.bf16.msra.mxu0 %v2456
        %2641 = vmatprep.subr.bf16.mxu0 %v2460
        %2642 = vmatpush1.bf16.msra.mxu0 %v2459
        %2643 = vmatprep.subr.bf16.mxu0 %v2463
        %2644 = vmatpush1.bf16.msra.mxu0 %v2462
        %2645 = vmatprep.subr.bf16.mxu0 %v2466
        %2646 = vmatpush1.bf16.msra.mxu0 %v2465
        %2647 = vmatprep.subr.bf16.mxu0 %v2469
        %2648 = vmatpush1.bf16.msra.mxu0 %v2468
        %2649 = vmatprep.subr.bf16.mxu0 %v2472
        %2650 = vmatpush1.bf16.msra.mxu0 %v2471
        %2651 = vmatprep.subr.bf16.mxu0 %v2475
        %2652 = vmatpush1.bf16.msra.mxu0 %v2474
        %2653 = vmatprep.mubr.bf16.mxu0 %v1901
        %2654 = vmatmul.mubr.bf16.gmra.mrb[0].mxu0 %v1900
        %v2655 = vpop.f32.mrb[0].mxu0
        %v2656 = vadd.f32 %v2097, %v2655
        %v2657 = vpop.f32.mrb[0].mxu0
        %v2658 = vadd.f32 %v2101, %v2657
        %v2659 = vpop.f32.mrb[0].mxu0
        %v2660 = vadd.f32 %v2097, %v2659
        %v2661 = vpop.f32.mrb[0].mxu0
        %v2662 = vadd.f32 %v2101, %v2661
        %2663 = vmatprep.mubr.bf16.mxu0 %v1905
        %2664 = vmatmul.mubr.bf16.gmra.mrb[0].mxu0 %v1904
        %v2665 = vpop.f32.mrb[0].mxu0
        %v2666 = vadd.f32 %v2097, %v2665
        %v2667 = vpop.f32.mrb[0].mxu0
        %v2668 = vadd.f32 %v2101, %v2667
        %v2669 = vpop.f32.mrb[0].mxu0
        %v2670 = vadd.f32 %v2097, %v2669
        %v2671 = vpop.f32.mrb[0].mxu0
        %v2672 = vadd.f32 %v2101, %v2671
        %2673 = vmatprep.mubr.bf16.mxu0 %v1909
        %2674 = vmatmul.mubr.bf16.gmra.mrb[0].mxu0 %v1908
        %v2675 = vpop.f32.mrb[0].mxu0
        %v2676 = vadd.f32 %v2097, %v2675
        %v2677 = vpop.f32.mrb[0].mxu0
        %v2678 = vadd.f32 %v2101, %v2677
        %v2679 = vpop.f32.mrb[0].mxu0
        %v2680 = vadd.f32 %v2097, %v2679
        %v2681 = vpop.f32.mrb[0].mxu0
        %v2682 = vadd.f32 %v2101, %v2681
        %2683 = vmatprep.mubr.bf16.mxu0 %v1913
        %2684 = vmatmul.mubr.bf16.gmra.mrb[0].mxu0 %v1912
        %v2685 = vpop.f32.mrb[0].mxu0
        %v2686 = vadd.f32 %v2097, %v2685
        %v2687 = vpop.f32.mrb[0].mxu0
        %v2688 = vadd.f32 %v2101, %v2687
        %v2689 = vpop.f32.mrb[0].mxu0
        %v2690 = vadd.f32 %v2097, %v2689
        %v2691 = vpop.f32.mrb[0].mxu0
        %v2692 = vadd.f32 %v2101, %v2691
        %2693 = vmatprep.mubr.bf16.mxu0 %v1917
        %2694 = vmatmul.mubr.bf16.gmra.mrb[0].mxu0 %v1916
        %v2695 = vpop.f32.mrb[0].mxu0
        %v2696 = vadd.f32 %v2097, %v2695
        %v2697 = vpop.f32.mrb[0].mxu0
        %v2698 = vadd.f32 %v2101, %v2697
        %v2699 = vpop.f32.mrb[0].mxu0
        %v2700 = vadd.f32 %v2097, %v2699
        %v2701 = vpop.f32.mrb[0].mxu0
        %v2702 = vadd.f32 %v2101, %v2701
        %2703 = vmatprep.mubr.bf16.mxu0 %v1921
        %2704 = vmatmul.mubr.bf16.gmra.mrb[0].mxu0 %v1920
        %v2705 = vpop.f32.mrb[0].mxu0
        %v2706 = vadd.f32 %v2097, %v2705
        %v2707 = vpop.f32.mrb[0].mxu0
        %v2708 = vadd.f32 %v2101, %v2707
        %v2709 = vpop.f32.mrb[0].mxu0
        %v2710 = vadd.f32 %v2097, %v2709
        %v2711 = vpop.f32.mrb[0].mxu0
        %v2712 = vadd.f32 %v2101, %v2711
        %2713 = vmatprep.mubr.bf16.mxu0 %v1925
        %2714 = vmatmul.mubr.bf16.gmra.mrb[0].mxu0 %v1924
        %v2715 = vpop.f32.mrb[0].mxu0
        %v2716 = vadd.f32 %v2097, %v2715
        %v2717 = vpop.f32.mrb[0].mxu0
        %v2718 = vadd.f32 %v2101, %v2717
        %v2719 = vpop.f32.mrb[0].mxu0
        %v2720 = vadd.f32 %v2097, %v2719
        %v2721 = vpop.f32.mrb[0].mxu0
        %v2722 = vadd.f32 %v2101, %v2721
        %2723 = vmatprep.mubr.bf16.mxu0 %v1929
        %2724 = vmatmul.mubr.bf16.gmra.mrb[0].mxu0 %v1928
        %v2725 = vpop.f32.mrb[0].mxu0
        %v2726 = vadd.f32 %v2097, %v2725
        %v2727 = vpop.f32.mrb[0].mxu0
        %v2728 = vadd.f32 %v2101, %v2727
        %v2729 = vpop.f32.mrb[0].mxu0
        %v2730 = vadd.f32 %v2097, %v2729
        %v2731 = vpop.f32.mrb[0].mxu0
        %v2732 = vadd.f32 %v2101, %v2731
        %2733 = vdwg.mxu0
        %2734 = vmatprep.subr.bf16.mxu0 %v2478
        %2735 = vmatpush1.bf16.msra.mxu0 %v2477
        %2736 = vmatprep.subr.bf16.mxu0 %v2481
        %2737 = vmatpush1.bf16.msra.mxu0 %v2480
        %2738 = vmatprep.subr.bf16.mxu0 %v2484
        %2739 = vmatpush1.bf16.msra.mxu0 %v2483
        %2740 = vmatprep.subr.bf16.mxu0 %v2487
        %2741 = vmatpush1.bf16.msra.mxu0 %v2486
        %2742 = vmatprep.subr.bf16.mxu0 %v2490
        %2743 = vmatpush1.bf16.msra.mxu0 %v2489
        %2744 = vmatprep.subr.bf16.mxu0 %v2493
        %2745 = vmatpush1.bf16.msra.mxu0 %v2492
        %2746 = vmatprep.subr.bf16.mxu0 %v2496
        %2747 = vmatpush1.bf16.msra.mxu0 %v2495
        %2748 = vmatprep.subr.bf16.mxu0 %v2499
        %2749 = vmatpush1.bf16.msra.mxu0 %v2498
        %2750 = vmatprep.subr.bf16.mxu0 %v2502
        %2751 = vmatpush1.bf16.msra.mxu0 %v2501
        %2752 = vmatprep.subr.bf16.mxu0 %v2505
        %2753 = vmatpush1.bf16.msra.mxu0 %v2504
        %2754 = vmatprep.subr.bf16.mxu0 %v2508
        %2755 = vmatpush1.bf16.msra.mxu0 %v2507
        %2756 = vmatprep.subr.bf16.mxu0 %v2511
        %2757 = vmatpush1.bf16.msra.mxu0 %v2510
        %2758 = vmatprep.subr.bf16.mxu0 %v2514
        %2759 = vmatpush1.bf16.msra.mxu0 %v2513
        %2760 = vmatprep.subr.bf16.mxu0 %v2517
        %2761 = vmatpush1.bf16.msra.mxu0 %v2516
        %2762 = vmatprep.subr.bf16.mxu0 %v2520
        %2763 = vmatpush1.bf16.msra.mxu0 %v2519
        %2764 = vmatprep.subr.bf16.mxu0 %v2523
        %2765 = vmatpush1.bf16.msra.mxu0 %v2522
        %2766 = vmatprep.mubr.bf16.mxu0 %v1903
        %2767 = vmatmul.mubr.bf16.gmra.mrb[0].mxu0 %v1902
        %v2768 = vpop.f32.mrb[0].mxu0
        %v2769 = vadd.f32 %v2656, %v2768
        %v2770 = vpop.f32.mrb[0].mxu0
        %v2771 = vadd.f32 %v2658, %v2770
        %v2772 = vpop.f32.mrb[0].mxu0
        %v2773 = vadd.f32 %v2660, %v2772
        %v2774 = vpop.f32.mrb[0].mxu0
        %v2775 = vadd.f32 %v2662, %v2774
        %2776 = vmatprep.mubr.bf16.mxu0 %v1907
        %2777 = vmatmul.mubr.bf16.gmra.mrb[0].mxu0 %v1906
        %v2778 = vpop.f32.mrb[0].mxu0
        %v2779 = vadd.f32 %v2666, %v2778
        %v2780 = vpop.f32.mrb[0].mxu0
        %v2781 = vadd.f32 %v2668, %v2780
        %v2782 = vpop.f32.mrb[0].mxu0
        %v2783 = vadd.f32 %v2670, %v2782
        %v2784 = vpop.f32.mrb[0].mxu0
        %v2785 = vadd.f32 %v2672, %v2784
        %2786 = vmatprep.mubr.bf16.mxu0 %v1911
        %2787 = vmatmul.mubr.bf16.gmra.mrb[0].mxu0 %v1910
        %v2788 = vpop.f32.mrb[0].mxu0
        %v2789 = vadd.f32 %v2676, %v2788
        %v2790 = vpop.f32.mrb[0].mxu0
        %v2791 = vadd.f32 %v2678, %v2790
        %v2792 = vpop.f32.mrb[0].mxu0
        %v2793 = vadd.f32 %v2680, %v2792
        %v2794 = vpop.f32.mrb[0].mxu0
        %v2795 = vadd.f32 %v2682, %v2794
        %2796 = vmatprep.mubr.bf16.mxu0 %v1915
        %2797 = vmatmul.mubr.bf16.gmra.mrb[0].mxu0 %v1914
        %v2798 = vpop.f32.mrb[0].mxu0
        %v2799 = vadd.f32 %v2686, %v2798
        %v2800 = vpop.f32.mrb[0].mxu0
        %v2801 = vadd.f32 %v2688, %v2800
        %v2802 = vpop.f32.mrb[0].mxu0
        %v2803 = vadd.f32 %v2690, %v2802
        %v2804 = vpop.f32.mrb[0].mxu0
        %v2805 = vadd.f32 %v2692, %v2804
        %2806 = vmatprep.mubr.bf16.mxu0 %v1919
        %2807 = vmatmul.mubr.bf16.gmra.mrb[0].mxu0 %v1918
        %v2808 = vpop.f32.mrb[0].mxu0
        %v2809 = vadd.f32 %v2696, %v2808
        %v2810 = vpop.f32.mrb[0].mxu0
        %v2811 = vadd.f32 %v2698, %v2810
        %v2812 = vpop.f32.mrb[0].mxu0
        %v2813 = vadd.f32 %v2700, %v2812
        %v2814 = vpop.f32.mrb[0].mxu0
        %v2815 = vadd.f32 %v2702, %v2814
        %2816 = vmatprep.mubr.bf16.mxu0 %v1923
        %2817 = vmatmul.mubr.bf16.gmra.mrb[0].mxu0 %v1922
        %v2818 = vpop.f32.mrb[0].mxu0
        %v2819 = vadd.f32 %v2706, %v2818
        %v2820 = vpop.f32.mrb[0].mxu0
        %v2821 = vadd.f32 %v2708, %v2820
        %v2822 = vpop.f32.mrb[0].mxu0
        %v2823 = vadd.f32 %v2710, %v2822
        %v2824 = vpop.f32.mrb[0].mxu0
        %v2825 = vadd.f32 %v2712, %v2824
        %2826 = vmatprep.mubr.bf16.mxu0 %v1927
        %2827 = vmatmul.mubr.bf16.gmra.mrb[0].mxu0 %v1926
        %v2828 = vpop.f32.mrb[0].mxu0
        %v2829 = vadd.f32 %v2716, %v2828
        %v2830 = vpop.f32.mrb[0].mxu0
        %v2831 = vadd.f32 %v2718, %v2830
        %v2832 = vpop.f32.mrb[0].mxu0
        %v2833 = vadd.f32 %v2720, %v2832
        %v2834 = vpop.f32.mrb[0].mxu0
        %v2835 = vadd.f32 %v2722, %v2834
        %2836 = vmatprep.mubr.bf16.mxu0 %v1931
        %2837 = vmatmul.mubr.bf16.gmra.mrb[0].mxu0 %v1930
        %v2838 = vpop.f32.mrb[0].mxu0
        %v2839 = vadd.f32 %v2726, %v2838
        %v2840 = vpop.f32.mrb[0].mxu0
        %v2841 = vadd.f32 %v2728, %v2840
        %v2842 = vpop.f32.mrb[0].mxu0
        %v2843 = vadd.f32 %v2730, %v2842
        %v2844 = vpop.f32.mrb[0].mxu0
        %v2845 = vadd.f32 %v2732, %v2844
        %2846 = vdwg.mxu0
        %2847 = vmatprep.subr.bf16.mxu0 0
        %2848 = vmatpush1.bf16.msra.mxu0 %v2431
        %2849 = vmatprep.subr.bf16.mxu0 0
        %2850 = vmatpush1.bf16.msra.mxu0 %v2434
        %2851 = vmatprep.subr.bf16.mxu0 0
        %2852 = vmatpush1.bf16.msra.mxu0 %v2437
        %2853 = vmatprep.subr.bf16.mxu0 0
        %2854 = vmatpush1.bf16.msra.mxu0 %v2440
        %2855 = vmatprep.subr.bf16.mxu0 0
        %2856 = vmatpush1.bf16.msra.mxu0 %v2443
        %2857 = vmatprep.subr.bf16.mxu0 0
        %2858 = vmatpush1.bf16.msra.mxu0 %v2446
        %2859 = vmatprep.subr.bf16.mxu0 0
        %2860 = vmatpush1.bf16.msra.mxu0 %v2449
        %2861 = vmatprep.subr.bf16.mxu0 0
        %2862 = vmatpush1.bf16.msra.mxu0 %v2452
        %2863 = vmatprep.subr.bf16.mxu0 0
        %2864 = vmatpush1.bf16.msra.mxu0 %v2455
        %2865 = vmatprep.subr.bf16.mxu0 0
        %2866 = vmatpush1.bf16.msra.mxu0 %v2458
        %2867 = vmatprep.subr.bf16.mxu0 0
        %2868 = vmatpush1.bf16.msra.mxu0 %v2461
        %2869 = vmatprep.subr.bf16.mxu0 0
        %2870 = vmatpush1.bf16.msra.mxu0 %v2464
        %2871 = vmatprep.subr.bf16.mxu0 0
        %2872 = vmatpush1.bf16.msra.mxu0 %v2467
        %2873 = vmatprep.subr.bf16.mxu0 0
        %2874 = vmatpush1.bf16.msra.mxu0 %v2470
        %2875 = vmatprep.subr.bf16.mxu0 0
        %2876 = vmatpush1.bf16.msra.mxu0 %v2473
        %2877 = vmatprep.subr.bf16.mxu0 0
        %2878 = vmatpush1.bf16.msra.mxu0 %v2476
        %2879 = vmatprep.mubr.bf16.mxu0 %v1901
        %2880 = vmatmul.mubr.bf16.gmra.mrb[0].mxu0 %v1900
        %v2881 = vpop.f32.mrb[0].mxu0
        %v2882 = vadd.f32 %v2105, %v2881
        %v2883 = vpop.f32.mrb[0].mxu0
        %v2884 = vpop.f32.mrb[0].mxu0
        %v2885 = vadd.f32 %v2105, %v2884
        %v2886 = vpop.f32.mrb[0].mxu0
        %2887 = vmatprep.mubr.bf16.mxu0 %v1905
        %2888 = vmatmul.mubr.bf16.gmra.mrb[0].mxu0 %v1904
        %v2889 = vpop.f32.mrb[0].mxu0
        %v2890 = vadd.f32 %v2105, %v2889
        %v2891 = vpop.f32.mrb[0].mxu0
        %v2892 = vpop.f32.mrb[0].mxu0
        %v2893 = vadd.f32 %v2105, %v2892
        %v2894 = vpop.f32.mrb[0].mxu0
        %2895 = vmatprep.mubr.bf16.mxu0 %v1909
        %2896 = vmatmul.mubr.bf16.gmra.mrb[0].mxu0 %v1908
        %v2897 = vpop.f32.mrb[0].mxu0
        %v2898 = vadd.f32 %v2105, %v2897
        %v2899 = vpop.f32.mrb[0].mxu0
        %v2900 = vpop.f32.mrb[0].mxu0
        %v2901 = vadd.f32 %v2105, %v2900
        %v2902 = vpop.f32.mrb[0].mxu0
        %2903 = vmatprep.mubr.bf16.mxu0 %v1913
        %2904 = vmatmul.mubr.bf16.gmra.mrb[0].mxu0 %v1912
        %v2905 = vpop.f32.mrb[0].mxu0
        %v2906 = vadd.f32 %v2105, %v2905
        %v2907 = vpop.f32.mrb[0].mxu0
        %v2908 = vpop.f32.mrb[0].mxu0
        %v2909 = vadd.f32 %v2105, %v2908
        %v2910 = vpop.f32.mrb[0].mxu0
        %2911 = vmatprep.mubr.bf16.mxu0 %v1917
        %2912 = vmatmul.mubr.bf16.gmra.mrb[0].mxu0 %v1916
        %v2913 = vpop.f32.mrb[0].mxu0
        %v2914 = vadd.f32 %v2105, %v2913
        %v2915 = vpop.f32.mrb[0].mxu0
        %v2916 = vpop.f32.mrb[0].mxu0
        %v2917 = vadd.f32 %v2105, %v2916
        %v2918 = vpop.f32.mrb[0].mxu0
        %2919 = vmatprep.mubr.bf16.mxu0 %v1921
        %2920 = vmatmul.mubr.bf16.gmra.mrb[0].mxu0 %v1920
        %v2921 = vpop.f32.mrb[0].mxu0
        %v2922 = vadd.f32 %v2105, %v2921
        %v2923 = vpop.f32.mrb[0].mxu0
        %v2924 = vpop.f32.mrb[0].mxu0
        %v2925 = vadd.f32 %v2105, %v2924
        %v2926 = vpop.f32.mrb[0].mxu0
        %2927 = vmatprep.mubr.bf16.mxu0 %v1925
        %2928 = vmatmul.mubr.bf16.gmra.mrb[0].mxu0 %v1924
        %v2929 = vpop.f32.mrb[0].mxu0
        %v2930 = vadd.f32 %v2105, %v2929
        %v2931 = vpop.f32.mrb[0].mxu0
        %v2932 = vpop.f32.mrb[0].mxu0
        %v2933 = vadd.f32 %v2105, %v2932
        %v2934 = vpop.f32.mrb[0].mxu0
        %2935 = vmatprep.mubr.bf16.mxu0 %v1929
        %2936 = vmatmul.mubr.bf16.gmra.mrb[0].mxu0 %v1928
        %v2937 = vpop.f32.mrb[0].mxu0
        %v2938 = vadd.f32 %v2105, %v2937
        %v2939 = vpop.f32.mrb[0].mxu0
        %v2940 = vpop.f32.mrb[0].mxu0
        %v2941 = vadd.f32 %v2105, %v2940
        %v2942 = vpop.f32.mrb[0].mxu0
        %2943 = vdwg.mxu0
        %2944 = vmatprep.subr.bf16.mxu0 0
        %2945 = vmatpush1.bf16.msra.mxu0 %v2479
        %2946 = vmatprep.subr.bf16.mxu0 0
        %2947 = vmatpush1.bf16.msra.mxu0 %v2482
        %2948 = vmatprep.subr.bf16.mxu0 0
        %2949 = vmatpush1.bf16.msra.mxu0 %v2485
        %2950 = vmatprep.subr.bf16.mxu0 0
        %2951 = vmatpush1.bf16.msra.mxu0 %v2488
        %2952 = vmatprep.subr.bf16.mxu0 0
        %2953 = vmatpush1.bf16.msra.mxu0 %v2491
        %2954 = vmatprep.subr.bf16.mxu0 0
        %2955 = vmatpush1.bf16.msra.mxu0 %v2494
        %2956 = vmatprep.subr.bf16.mxu0 0
        %2957 = vmatpush1.bf16.msra.mxu0 %v2497
        %2958 = vmatprep.subr.bf16.mxu0 0
        %2959 = vmatpush1.bf16.msra.mxu0 %v2500
        %2960 = vmatprep.subr.bf16.mxu0 0
        %2961 = vmatpush1.bf16.msra.mxu0 %v2503
        %2962 = vmatprep.subr.bf16.mxu0 0
        %2963 = vmatpush1.bf16.msra.mxu0 %v2506
        %2964 = vmatprep.subr.bf16.mxu0 0
        %2965 = vmatpush1.bf16.msra.mxu0 %v2509
        %2966 = vmatprep.subr.bf16.mxu0 0
        %2967 = vmatpush1.bf16.msra.mxu0 %v2512
        %2968 = vmatprep.subr.bf16.mxu0 0
        %2969 = vmatpush1.bf16.msra.mxu0 %v2515
        %2970 = vmatprep.subr.bf16.mxu0 0
        %2971 = vmatpush1.bf16.msra.mxu0 %v2518
        %2972 = vmatprep.subr.bf16.mxu0 0
        %2973 = vmatpush1.bf16.msra.mxu0 %v2521
        %2974 = vmatprep.subr.bf16.mxu0 0
        %2975 = vmatpush1.bf16.msra.mxu0 %v2524
        %2976 = vmatprep.mubr.bf16.mxu0 %v1903
        %2977 = vmatmul.mubr.bf16.gmra.mrb[0].mxu0 %v1902
        %v2978 = vpop.f32.mrb[0].mxu0
        %v2979 = vadd.f32 %v2882, %v2978
        %v2980 = vpop.f32.mrb[0].mxu0
        %v2981 = vpop.f32.mrb[0].mxu0
        %v2982 = vadd.f32 %v2885, %v2981
        %v2983 = vpop.f32.mrb[0].mxu0
        %2984 = vmatprep.mubr.bf16.mxu0 %v1907
        %2985 = vmatmul.mubr.bf16.gmra.mrb[0].mxu0 %v1906
        %v2986 = vpop.f32.mrb[0].mxu0
        %v2987 = vadd.f32 %v2890, %v2986
        %v2988 = vpop.f32.mrb[0].mxu0
        %v2989 = vpop.f32.mrb[0].mxu0
        %v2990 = vadd.f32 %v2893, %v2989
        %v2991 = vpop.f32.mrb[0].mxu0
        %2992 = vmatprep.mubr.bf16.mxu0 %v1911
        %2993 = vmatmul.mubr.bf16.gmra.mrb[0].mxu0 %v1910
        %v2994 = vpop.f32.mrb[0].mxu0
        %v2995 = vadd.f32 %v2898, %v2994
        %v2996 = vpop.f32.mrb[0].mxu0
        %v2997 = vpop.f32.mrb[0].mxu0
        %v2998 = vadd.f32 %v2901, %v2997
        %v2999 = vpop.f32.mrb[0].mxu0
        %3000 = vmatprep.mubr.bf16.mxu0 %v1915
        %3001 = vmatmul.mubr.bf16.gmra.mrb[0].mxu0 %v1914
        %v3002 = vpop.f32.mrb[0].mxu0
        %v3003 = vadd.f32 %v2906, %v3002
        %v3004 = vpop.f32.mrb[0].mxu0
        %v3005 = vpop.f32.mrb[0].mxu0
        %v3006 = vadd.f32 %v2909, %v3005
        %v3007 = vpop.f32.mrb[0].mxu0
        %3008 = vmatprep.mubr.bf16.mxu0 %v1919
        %3009 = vmatmul.mubr.bf16.gmra.mrb[0].mxu0 %v1918
        %v3010 = vpop.f32.mrb[0].mxu0
        %v3011 = vadd.f32 %v2914, %v3010
        %v3012 = vpop.f32.mrb[0].mxu0
        %v3013 = vpop.f32.mrb[0].mxu0
        %v3014 = vadd.f32 %v2917, %v3013
        %v3015 = vpop.f32.mrb[0].mxu0
        %3016 = vmatprep.mubr.bf16.mxu0 %v1923
        %3017 = vmatmul.mubr.bf16.gmra.mrb[0].mxu0 %v1922
        %v3018 = vpop.f32.mrb[0].mxu0
        %v3019 = vadd.f32 %v2922, %v3018
        %v3020 = vpop.f32.mrb[0].mxu0
        %v3021 = vpop.f32.mrb[0].mxu0
        %v3022 = vadd.f32 %v2925, %v3021
        %v3023 = vpop.f32.mrb[0].mxu0
        %3024 = vmatprep.mubr.bf16.mxu0 %v1927
        %3025 = vmatmul.mubr.bf16.gmra.mrb[0].mxu0 %v1926
        %v3026 = vpop.f32.mrb[0].mxu0
        %v3027 = vadd.f32 %v2930, %v3026
        %v3028 = vpop.f32.mrb[0].mxu0
        %v3029 = vpop.f32.mrb[0].mxu0
        %v3030 = vadd.f32 %v2933, %v3029
        %v3031 = vpop.f32.mrb[0].mxu0
        %3032 = vmatprep.mubr.bf16.mxu0 %v1931
        %3033 = vmatmul.mubr.bf16.gmra.mrb[0].mxu0 %v1930
        %v3034 = vpop.f32.mrb[0].mxu0
        %v3035 = vadd.f32 %v2938, %v3034
        %v3036 = vpop.f32.mrb[0].mxu0
        %v3037 = vpop.f32.mrb[0].mxu0
        %v3038 = vadd.f32 %v2941, %v3037
        %v3039 = vpop.f32.mrb[0].mxu0
        %3040 = vdwg.mxu0
        %v3041 = vmax.f32 %v2769, 0.0
        %v3042 = vmax.f32 %v2771, 0.0
        %v3043 = vmax.f32 %v2979, 0.0
        %v3044 = vmax.f32 %v2773, 0.0
        %v3045 = vmax.f32 %v2775, 0.0
        %v3046 = vmax.f32 %v2982, 0.0
        %v3047 = vmax.f32 %v2779, 0.0
        %v3048 = vmax.f32 %v2781, 0.0
        %v3049 = vmax.f32 %v2987, 0.0
        %v3050 = vmax.f32 %v2783, 0.0
        %v3051 = vmax.f32 %v2785, 0.0
        %v3052 = vmax.f32 %v2990, 0.0
        %v3053 = vmax.f32 %v2789, 0.0
        %v3054 = vmax.f32 %v2791, 0.0
        %v3055 = vmax.f32 %v2995, 0.0
        %v3056 = vmax.f32 %v2793, 0.0
        %v3057 = vmax.f32 %v2795, 0.0
        %v3058 = vmax.f32 %v2998, 0.0
        %v3059 = vmax.f32 %v2799, 0.0
        %v3060 = vmax.f32 %v2801, 0.0
        %v3061 = vmax.f32 %v3003, 0.0
        %v3062 = vmax.f32 %v2803, 0.0
        %v3063 = vmax.f32 %v2805, 0.0
        %v3064 = vmax.f32 %v3006, 0.0
        %v3065 = vmax.f32 %v2809, 0.0
        %v3066 = vmax.f32 %v2811, 0.0
        %v3067 = vmax.f32 %v3011, 0.0
        %v3068 = vmax.f32 %v2813, 0.0
        %v3069 = vmax.f32 %v2815, 0.0
        %v3070 = vmax.f32 %v3014, 0.0
        %v3071 = vmax.f32 %v2819, 0.0
        %v3072 = vmax.f32 %v2821, 0.0
        %v3073 = vmax.f32 %v3019, 0.0
        %v3074 = vmax.f32 %v2823, 0.0
        %v3075 = vmax.f32 %v2825, 0.0
        %v3076 = vmax.f32 %v3022, 0.0
        %v3077 = vmax.f32 %v2829, 0.0
        %v3078 = vmax.f32 %v2831, 0.0
        %v3079 = vmax.f32 %v3027, 0.0
        %v3080 = vmax.f32 %v2833, 0.0
        %v3081 = vmax.f32 %v2835, 0.0
        %v3082 = vmax.f32 %v3030, 0.0
        %v3083 = vmax.f32 %v2839, 0.0
        %v3084 = vmax.f32 %v2841, 0.0
        %v3085 = vmax.f32 %v3035, 0.0
        %v3086 = vmax.f32 %v2843, 0.0
        %v3087 = vmax.f32 %v2845, 0.0
        %v3088 = vmax.f32 %v3038, 0.0
        %v3089 = vpack.c.bf16 %v3044, %v3041
        %v3090 = vpack.c.bf16 %v3045, %v3042
        %v3091 = vpack.c.bf16 %v3046, %v3043
        %v3092 = vpack.c.bf16 %v3050, %v3047
        %v3093 = vpack.c.bf16 %v3051, %v3048
        %v3094 = vpack.c.bf16 %v3052, %v3049
        %v3095 = vpack.c.bf16 %v3056, %v3053
        %v3096 = vpack.c.bf16 %v3057, %v3054
        %v3097 = vpack.c.bf16 %v3058, %v3055
        %v3098 = vpack.c.bf16 %v3062, %v3059
        %v3099 = vpack.c.bf16 %v3063, %v3060
        %v3100 = vpack.c.bf16 %v3064, %v3061
        %v3101 = vpack.c.bf16 %v3068, %v3065
        %v3102 = vpack.c.bf16 %v3069, %v3066
        %v3103 = vpack.c.bf16 %v3070, %v3067
        %v3104 = vpack.c.bf16 %v3074, %v3071
        %v3105 = vpack.c.bf16 %v3075, %v3072
        %v3106 = vpack.c.bf16 %v3076, %v3073
        %v3107 = vpack.c.bf16 %v3080, %v3077
        %v3108 = vpack.c.bf16 %v3081, %v3078
        %v3109 = vpack.c.bf16 %v3082, %v3079
        %v3110 = vpack.c.bf16 %v3086, %v3083
        %v3111 = vpack.c.bf16 %v3087, %v3084
        %v3112 = vpack.c.bf16 %v3088, %v3085
        %v3113 = vld [vmem:[#allocation2] sm:$0xff]
        %v3114 = vld [vmem:[#allocation2 + $0x8] sm:$0xf]
        %v3115 = vld [vmem:[#allocation2 + $0xc] sm:$0xff]
        %v3116 = vld [vmem:[#allocation2 + $0x14] sm:$0xf]
        %v3117 = vld [vmem:[#allocation2 + $0x18] sm:$0xff]
        %v3118 = vld [vmem:[#allocation2 + $0x20] sm:$0xf]
        %v3119 = vld [vmem:[#allocation2 + $0x24] sm:$0xff]
        %v3120 = vld [vmem:[#allocation2 + $0x2c] sm:$0xf]
        %v3121 = vld [vmem:[#allocation2 + $0x30] sm:$0xff]
        %v3122 = vld [vmem:[#allocation2 + $0x38] sm:$0xf]
        %v3123 = vld [vmem:[#allocation2 + $0x3c] sm:$0xff]
        %v3124 = vld [vmem:[#allocation2 + $0x44] sm:$0xf]
        %v3125 = vld [vmem:[#allocation2 + $0x48] sm:$0xff]
        %v3126 = vld [vmem:[#allocation2 + $0x50] sm:$0xf]
        %v3127 = vld [vmem:[#allocation2 + $0x54] sm:$0xff]
        %v3128 = vld [vmem:[#allocation2 + $0x5c] sm:$0xf]
        %v3129 = vld [vmem:[#allocation2 + $0x60] sm:$0xff]
        %v3130 = vld [vmem:[#allocation2 + $0x68] sm:$0xf]
        %v3131 = vld [vmem:[#allocation2 + $0x6c] sm:$0xff]
        %v3132 = vld [vmem:[#allocation2 + $0x74] sm:$0xf]
        %v3133 = vld [vmem:[#allocation2 + $0x78] sm:$0xff]
        %v3134 = vld [vmem:[#allocation2 + $0x80] sm:$0xf]
        %v3135 = vld [vmem:[#allocation2 + $0x84] sm:$0xff]
        %v3136 = vld [vmem:[#allocation2 + $0x8c] sm:$0xf]
        %v3137 = vld [vmem:[#allocation2 + $0x90] sm:$0xff]
        %v3138 = vld [vmem:[#allocation2 + $0x98] sm:$0xf]
        %v3139 = vld [vmem:[#allocation2 + $0x9c] sm:$0xff]
        %v3140 = vld [vmem:[#allocation2 + $0xa4] sm:$0xf]
        %v3141 = vld [vmem:[#allocation2 + $0xa8] sm:$0xff]
        %v3142 = vld [vmem:[#allocation2 + $0xb0] sm:$0xf]
        %v3143 = vld [vmem:[#allocation2 + $0xb4] sm:$0xff]
        %v3144 = vld [vmem:[#allocation2 + $0xbc] sm:$0xf]
        %v3145 = vld [vmem:[#allocation2 + $0xc0] sm:$0xff]
        %v3146 = vld [vmem:[#allocation2 + $0xc8] sm:$0xf]
        %v3147 = vld [vmem:[#allocation2 + $0xcc] sm:$0xff]
        %v3148 = vld [vmem:[#allocation2 + $0xd4] sm:$0xf]
        %v3149 = vld [vmem:[#allocation2 + $0xd8] sm:$0xff]
        %v3150 = vld [vmem:[#allocation2 + $0xe0] sm:$0xf]
        %v3151 = vld [vmem:[#allocation2 + $0xe4] sm:$0xff]
        %v3152 = vld [vmem:[#allocation2 + $0xec] sm:$0xf]
        %v3153 = vld [vmem:[#allocation2 + $0xf0] sm:$0xff]
        %v3154 = vld [vmem:[#allocation2 + $0xf8] sm:$0xf]
        %v3155 = vld [vmem:[#allocation2 + $0xfc] sm:$0xff]
        %v3156 = vld [vmem:[#allocation2 + $0x104] sm:$0xf]
        %v3157 = vld [vmem:[#allocation2 + $0x108] sm:$0xff]
        %v3158 = vld [vmem:[#allocation2 + $0x110] sm:$0xf]
        %v3159 = vld [vmem:[#allocation2 + $0x114] sm:$0xff]
        %v3160 = vld [vmem:[#allocation2 + $0x11c] sm:$0xf]
        %v3161 = vld [vmem:[#allocation2 + $0x120] sm:$0xff]
        %v3162 = vld [vmem:[#allocation2 + $0x128] sm:$0xf]
        %v3163 = vld [vmem:[#allocation2 + $0x12c] sm:$0xff]
        %v3164 = vld [vmem:[#allocation2 + $0x134] sm:$0xf]
        %v3165 = vld [vmem:[#allocation2 + $0x138] sm:$0xff]
        %v3166 = vld [vmem:[#allocation2 + $0x140] sm:$0xf]
        %v3167 = vld [vmem:[#allocation2 + $0x144] sm:$0xff]
        %v3168 = vld [vmem:[#allocation2 + $0x14c] sm:$0xf]
        %v3169 = vld [vmem:[#allocation2 + $0x150] sm:$0xff]
        %v3170 = vld [vmem:[#allocation2 + $0x158] sm:$0xf]
        %v3171 = vld [vmem:[#allocation2 + $0x15c] sm:$0xff]
        %v3172 = vld [vmem:[#allocation2 + $0x164] sm:$0xf]
        %v3173 = vld [vmem:[#allocation2 + $0x168] sm:$0xff]
        %v3174 = vld [vmem:[#allocation2 + $0x170] sm:$0xf]
        %v3175 = vld [vmem:[#allocation2 + $0x174] sm:$0xff]
        %v3176 = vld [vmem:[#allocation2 + $0x17c] sm:$0xf]
        %v3177 = vld [vmem:[#allocation2 + $0x180] sm:$0xff]
        %v3178 = vld [vmem:[#allocation2 + $0x188] sm:$0xf]
        %v3179 = vld [vmem:[#allocation2 + $0x18c] sm:$0xff]
        %v3180 = vld [vmem:[#allocation2 + $0x194] sm:$0xf]
        %v3181 = vld [vmem:[#allocation2 + $0x198] sm:$0xff]
        %v3182 = vld [vmem:[#allocation2 + $0x1a0] sm:$0xf]
        %v3183 = vld [vmem:[#allocation2 + $0x1a4] sm:$0xff]
        %v3184 = vld [vmem:[#allocation2 + $0x1ac] sm:$0xf]
        %v3185 = vld [vmem:[#allocation2 + $0x1b0] sm:$0xff]
        %v3186 = vld [vmem:[#allocation2 + $0x1b8] sm:$0xf]
        %v3187 = vld [vmem:[#allocation2 + $0x1bc] sm:$0xff]
        %v3188 = vld [vmem:[#allocation2 + $0x1c4] sm:$0xf]
        %v3189 = vld [vmem:[#allocation2 + $0x1c8] sm:$0xff]
        %v3190 = vld [vmem:[#allocation2 + $0x1d0] sm:$0xf]
        %v3191 = vld [vmem:[#allocation2 + $0x1d4] sm:$0xff]
        %v3192 = vld [vmem:[#allocation2 + $0x1dc] sm:$0xf]
        %v3193 = vld [vmem:[#allocation2 + $0x1e0] sm:$0xff]
        %v3194 = vld [vmem:[#allocation2 + $0x1e8] sm:$0xf]
        %v3195 = vld [vmem:[#allocation2 + $0x1ec] sm:$0xff]
        %v3196 = vld [vmem:[#allocation2 + $0x1f4] sm:$0xf]
        %v3197 = vld [vmem:[#allocation2 + $0x1f8] sm:$0xff]
        %v3198 = vld [vmem:[#allocation2 + $0x200] sm:$0xf]
        %v3199 = vld [vmem:[#allocation2 + $0x204] sm:$0xff]
        %v3200 = vld [vmem:[#allocation2 + $0x20c] sm:$0xf]
        %v3201 = vld [vmem:[#allocation2 + $0x210] sm:$0xff]
        %v3202 = vld [vmem:[#allocation2 + $0x218] sm:$0xf]
        %v3203 = vld [vmem:[#allocation2 + $0x21c] sm:$0xff]
        %v3204 = vld [vmem:[#allocation2 + $0x224] sm:$0xf]
        %v3205 = vld [vmem:[#allocation2 + $0x228] sm:$0xff]
        %v3206 = vld [vmem:[#allocation2 + $0x230] sm:$0xf]
        %v3207 = vld [vmem:[#allocation2 + $0x234] sm:$0xff]
        %v3208 = vld [vmem:[#allocation2 + $0x23c] sm:$0xf]
        %v3209 = vld [vmem:[#allocation2 + $0x240] sm:$0xff]
        %v3210 = vld [vmem:[#allocation2 + $0x248] sm:$0xf]
        %v3211 = vld [vmem:[#allocation2 + $0x24c] sm:$0xff]
        %v3212 = vld [vmem:[#allocation2 + $0x254] sm:$0xf]
        %v3213 = vld [vmem:[#allocation2 + $0x258] sm:$0xff]
        %v3214 = vld [vmem:[#allocation2 + $0x260] sm:$0xf]
        %v3215 = vld [vmem:[#allocation2 + $0x264] sm:$0xff]
        %v3216 = vld [vmem:[#allocation2 + $0x26c] sm:$0xf]
        %v3217 = vld [vmem:[#allocation2 + $0x270] sm:$0xff]
        %v3218 = vld [vmem:[#allocation2 + $0x278] sm:$0xf]
        %v3219 = vld [vmem:[#allocation2 + $0x27c] sm:$0xff]
        %v3220 = vld [vmem:[#allocation2 + $0x284] sm:$0xf]
        %v3221 = vld [vmem:[#allocation2 + $0x288] sm:$0xff]
        %v3222 = vld [vmem:[#allocation2 + $0x290] sm:$0xf]
        %v3223 = vld [vmem:[#allocation2 + $0x294] sm:$0xff]
        %v3224 = vld [vmem:[#allocation2 + $0x29c] sm:$0xf]
        %v3225 = vld [vmem:[#allocation2 + $0x2a0] sm:$0xff]
        %v3226 = vld [vmem:[#allocation2 + $0x2a8] sm:$0xf]
        %v3227 = vld [vmem:[#allocation2 + $0x2ac] sm:$0xff]
        %v3228 = vld [vmem:[#allocation2 + $0x2b4] sm:$0xf]
        %v3229 = vld [vmem:[#allocation2 + $0x2b8] sm:$0xff]
        %v3230 = vld [vmem:[#allocation2 + $0x2c0] sm:$0xf]
        %v3231 = vld [vmem:[#allocation2 + $0x2c4] sm:$0xff]
        %v3232 = vld [vmem:[#allocation2 + $0x2cc] sm:$0xf]
        %v3233 = vld [vmem:[#allocation2 + $0x2d0] sm:$0xff]
        %v3234 = vld [vmem:[#allocation2 + $0x2d8] sm:$0xf]
        %v3235 = vld [vmem:[#allocation2 + $0x2dc] sm:$0xff]
        %v3236 = vld [vmem:[#allocation2 + $0x2e4] sm:$0xf]
        %v3237 = vld [vmem:[#allocation2 + $0x2e8] sm:$0xff]
        %v3238 = vld [vmem:[#allocation2 + $0x2f0] sm:$0xf]
        %v3239 = vld [vmem:[#allocation2 + $0x2f4] sm:$0xff]
        %v3240 = vld [vmem:[#allocation2 + $0x2fc] sm:$0xf]
        %v3241 = vld [vmem:[%s8] sm:$0x7]
        %v3243 = vlaneseq
        %v3244 = vshrl.u32 %v3243, 7
        %v3245 = vsub.s32 0, %v3244
        %v3246 = vrot.slane %v3241, %v3245
        %v3247 = vlaneseq
        %v3248 = vshrl.u32 %v3247, 7
        %v3249 = vsub.s32 1, %v3248
        %v3250 = vrot.slane %v3241, %v3249
        %v3251 = vlaneseq
        %v3252 = vshrl.u32 %v3251, 7
        %v3253 = vsub.s32 2, %v3252
        %v3254 = vrot.slane %v3241, %v3253
        %v3386 = vunpack.c.l.b16 %v3113
        %v3387 = vunpack.c.h.b16 %v3113
        %v3388 = vunpack.c.l.b16 %v3114
        %v3389 = vunpack.c.l.b16 %v3115
        %v3390 = vunpack.c.h.b16 %v3115
        %v3391 = vunpack.c.l.b16 %v3116
        %v3392 = vunpack.c.l.b16 %v3117
        %v3393 = vunpack.c.h.b16 %v3117
        %v3394 = vunpack.c.l.b16 %v3118
        %v3395 = vunpack.c.l.b16 %v3119
        %v3396 = vunpack.c.h.b16 %v3119
        %v3397 = vunpack.c.l.b16 %v3120
        %v3398 = vunpack.c.l.b16 %v3121
        %v3399 = vunpack.c.h.b16 %v3121
        %v3400 = vunpack.c.l.b16 %v3122
        %v3401 = vunpack.c.l.b16 %v3123
        %v3402 = vunpack.c.h.b16 %v3123
        %v3403 = vunpack.c.l.b16 %v3124
        %v3404 = vunpack.c.l.b16 %v3125
        %v3405 = vunpack.c.h.b16 %v3125
        %v3406 = vunpack.c.l.b16 %v3126
        %v3407 = vunpack.c.l.b16 %v3127
        %v3408 = vunpack.c.h.b16 %v3127
        %v3409 = vunpack.c.l.b16 %v3128
        %v3410 = vunpack.c.l.b16 %v3129
        %v3411 = vunpack.c.h.b16 %v3129
        %v3412 = vunpack.c.l.b16 %v3130
        %v3413 = vunpack.c.l.b16 %v3131
        %v3414 = vunpack.c.h.b16 %v3131
        %v3415 = vunpack.c.l.b16 %v3132
        %v3416 = vunpack.c.l.b16 %v3133
        %v3417 = vunpack.c.h.b16 %v3133
        %v3418 = vunpack.c.l.b16 %v3134
        %v3419 = vunpack.c.l.b16 %v3135
        %v3420 = vunpack.c.h.b16 %v3135
        %v3421 = vunpack.c.l.b16 %v3136
        %v3422 = vunpack.c.l.b16 %v3137
        %v3423 = vunpack.c.h.b16 %v3137
        %v3424 = vunpack.c.l.b16 %v3138
        %v3425 = vunpack.c.l.b16 %v3139
        %v3426 = vunpack.c.h.b16 %v3139
        %v3427 = vunpack.c.l.b16 %v3140
        %v3428 = vunpack.c.l.b16 %v3141
        %v3429 = vunpack.c.h.b16 %v3141
        %v3430 = vunpack.c.l.b16 %v3142
        %v3431 = vunpack.c.l.b16 %v3143
        %v3432 = vunpack.c.h.b16 %v3143
        %v3433 = vunpack.c.l.b16 %v3144
        %v3434 = vunpack.c.l.b16 %v3145
        %v3435 = vunpack.c.h.b16 %v3145
        %v3436 = vunpack.c.l.b16 %v3146
        %v3437 = vunpack.c.l.b16 %v3147
        %v3438 = vunpack.c.h.b16 %v3147
        %v3439 = vunpack.c.l.b16 %v3148
        %v3440 = vunpack.c.l.b16 %v3149
        %v3441 = vunpack.c.h.b16 %v3149
        %v3442 = vunpack.c.l.b16 %v3150
        %v3443 = vunpack.c.l.b16 %v3151
        %v3444 = vunpack.c.h.b16 %v3151
        %v3445 = vunpack.c.l.b16 %v3152
        %v3446 = vunpack.c.l.b16 %v3153
        %v3447 = vunpack.c.h.b16 %v3153
        %v3448 = vunpack.c.l.b16 %v3154
        %v3449 = vunpack.c.l.b16 %v3155
        %v3450 = vunpack.c.h.b16 %v3155
        %v3451 = vunpack.c.l.b16 %v3156
        %v3452 = vunpack.c.l.b16 %v3157
        %v3453 = vunpack.c.h.b16 %v3157
        %v3454 = vunpack.c.l.b16 %v3158
        %v3455 = vunpack.c.l.b16 %v3159
        %v3456 = vunpack.c.h.b16 %v3159
        %v3457 = vunpack.c.l.b16 %v3160
        %v3458 = vunpack.c.l.b16 %v3161
        %v3459 = vunpack.c.h.b16 %v3161
        %v3460 = vunpack.c.l.b16 %v3162
        %v3461 = vunpack.c.l.b16 %v3163
        %v3462 = vunpack.c.h.b16 %v3163
        %v3463 = vunpack.c.l.b16 %v3164
        %v3464 = vunpack.c.l.b16 %v3165
        %v3465 = vunpack.c.h.b16 %v3165
        %v3466 = vunpack.c.l.b16 %v3166
        %v3467 = vunpack.c.l.b16 %v3167
        %v3468 = vunpack.c.h.b16 %v3167
        %v3469 = vunpack.c.l.b16 %v3168
        %v3470 = vunpack.c.l.b16 %v3169
        %v3471 = vunpack.c.h.b16 %v3169
        %v3472 = vunpack.c.l.b16 %v3170
        %v3473 = vunpack.c.l.b16 %v3171
        %v3474 = vunpack.c.h.b16 %v3171
        %v3475 = vunpack.c.l.b16 %v3172
        %v3476 = vunpack.c.l.b16 %v3173
        %v3477 = vunpack.c.h.b16 %v3173
        %v3478 = vunpack.c.l.b16 %v3174
        %v3479 = vunpack.c.l.b16 %v3175
        %v3480 = vunpack.c.h.b16 %v3175
        %v3481 = vunpack.c.l.b16 %v3176
        %v3482 = vunpack.c.l.b16 %v3177
        %v3483 = vunpack.c.h.b16 %v3177
        %v3484 = vunpack.c.l.b16 %v3178
        %v3485 = vunpack.c.l.b16 %v3179
        %v3486 = vunpack.c.h.b16 %v3179
        %v3487 = vunpack.c.l.b16 %v3180
        %v3488 = vunpack.c.l.b16 %v3181
        %v3489 = vunpack.c.h.b16 %v3181
        %v3490 = vunpack.c.l.b16 %v3182
        %v3491 = vunpack.c.l.b16 %v3183
        %v3492 = vunpack.c.h.b16 %v3183
        %v3493 = vunpack.c.l.b16 %v3184
        %v3494 = vunpack.c.l.b16 %v3185
        %v3495 = vunpack.c.h.b16 %v3185
        %v3496 = vunpack.c.l.b16 %v3186
        %v3497 = vunpack.c.l.b16 %v3187
        %v3498 = vunpack.c.h.b16 %v3187
        %v3499 = vunpack.c.l.b16 %v3188
        %v3500 = vunpack.c.l.b16 %v3189
        %v3501 = vunpack.c.h.b16 %v3189
        %v3502 = vunpack.c.l.b16 %v3190
        %v3503 = vunpack.c.l.b16 %v3191
        %v3504 = vunpack.c.h.b16 %v3191
        %v3505 = vunpack.c.l.b16 %v3192
        %v3506 = vunpack.c.l.b16 %v3193
        %v3507 = vunpack.c.h.b16 %v3193
        %v3508 = vunpack.c.l.b16 %v3194
        %v3509 = vunpack.c.l.b16 %v3195
        %v3510 = vunpack.c.h.b16 %v3195
        %v3511 = vunpack.c.l.b16 %v3196
        %v3512 = vunpack.c.l.b16 %v3197
        %v3513 = vunpack.c.h.b16 %v3197
        %v3514 = vunpack.c.l.b16 %v3198
        %v3515 = vunpack.c.l.b16 %v3199
        %v3516 = vunpack.c.h.b16 %v3199
        %v3517 = vunpack.c.l.b16 %v3200
        %v3518 = vunpack.c.l.b16 %v3201
        %v3519 = vunpack.c.h.b16 %v3201
        %v3520 = vunpack.c.l.b16 %v3202
        %v3521 = vunpack.c.l.b16 %v3203
        %v3522 = vunpack.c.h.b16 %v3203
        %v3523 = vunpack.c.l.b16 %v3204
        %v3524 = vunpack.c.l.b16 %v3205
        %v3525 = vunpack.c.h.b16 %v3205
        %v3526 = vunpack.c.l.b16 %v3206
        %v3527 = vunpack.c.l.b16 %v3207
        %v3528 = vunpack.c.h.b16 %v3207
        %v3529 = vunpack.c.l.b16 %v3208
        %v3530 = vunpack.c.l.b16 %v3209
        %v3531 = vunpack.c.h.b16 %v3209
        %v3532 = vunpack.c.l.b16 %v3210
        %v3533 = vunpack.c.l.b16 %v3211
        %v3534 = vunpack.c.h.b16 %v3211
        %v3535 = vunpack.c.l.b16 %v3212
        %v3536 = vunpack.c.l.b16 %v3213
        %v3537 = vunpack.c.h.b16 %v3213
        %v3538 = vunpack.c.l.b16 %v3214
        %v3539 = vunpack.c.l.b16 %v3215
        %v3540 = vunpack.c.h.b16 %v3215
        %v3541 = vunpack.c.l.b16 %v3216
        %v3542 = vunpack.c.l.b16 %v3217
        %v3543 = vunpack.c.h.b16 %v3217
        %v3544 = vunpack.c.l.b16 %v3218
        %v3545 = vunpack.c.l.b16 %v3219
        %v3546 = vunpack.c.h.b16 %v3219
        %v3547 = vunpack.c.l.b16 %v3220
        %v3548 = vunpack.c.l.b16 %v3221
        %v3549 = vunpack.c.h.b16 %v3221
        %v3550 = vunpack.c.l.b16 %v3222
        %v3551 = vunpack.c.l.b16 %v3223
        %v3552 = vunpack.c.h.b16 %v3223
        %v3553 = vunpack.c.l.b16 %v3224
        %v3554 = vunpack.c.l.b16 %v3225
        %v3555 = vunpack.c.h.b16 %v3225
        %v3556 = vunpack.c.l.b16 %v3226
        %v3557 = vunpack.c.l.b16 %v3227
        %v3558 = vunpack.c.h.b16 %v3227
        %v3559 = vunpack.c.l.b16 %v3228
        %v3560 = vunpack.c.l.b16 %v3229
        %v3561 = vunpack.c.h.b16 %v3229
        %v3562 = vunpack.c.l.b16 %v3230
        %v3563 = vunpack.c.l.b16 %v3231
        %v3564 = vunpack.c.h.b16 %v3231
        %v3565 = vunpack.c.l.b16 %v3232
        %v3566 = vunpack.c.l.b16 %v3233
        %v3567 = vunpack.c.h.b16 %v3233
        %v3568 = vunpack.c.l.b16 %v3234
        %v3569 = vunpack.c.l.b16 %v3235
        %v3570 = vunpack.c.h.b16 %v3235
        %v3571 = vunpack.c.l.b16 %v3236
        %v3572 = vunpack.c.l.b16 %v3237
        %v3573 = vunpack.c.h.b16 %v3237
        %v3574 = vunpack.c.l.b16 %v3238
        %v3575 = vunpack.c.l.b16 %v3239
        %v3576 = vunpack.c.h.b16 %v3239
        %v3577 = vunpack.c.l.b16 %v3240
        %v3578 = vpack.c.b16 %v3389, %v3386
        %v3579 = vpack.c.b16 %v3390, %v3387
        %v3580 = vpack.c.b16 %v3391, %v3388
        %v3581 = vpack.c.b16 %v3395, %v3392
        %v3582 = vpack.c.b16 %v3396, %v3393
        %v3583 = vpack.c.b16 %v3397, %v3394
        %v3584 = vpack.c.b16 %v3401, %v3398
        %v3585 = vpack.c.b16 %v3402, %v3399
        %v3586 = vpack.c.b16 %v3403, %v3400
        %v3587 = vpack.c.b16 %v3407, %v3404
        %v3588 = vpack.c.b16 %v3408, %v3405
        %v3589 = vpack.c.b16 %v3409, %v3406
        %v3590 = vpack.c.b16 %v3413, %v3410
        %v3591 = vpack.c.b16 %v3414, %v3411
        %v3592 = vpack.c.b16 %v3415, %v3412
        %v3593 = vpack.c.b16 %v3419, %v3416
        %v3594 = vpack.c.b16 %v3420, %v3417
        %v3595 = vpack.c.b16 %v3421, %v3418
        %v3596 = vpack.c.b16 %v3425, %v3422
        %v3597 = vpack.c.b16 %v3426, %v3423
        %v3598 = vpack.c.b16 %v3427, %v3424
        %v3599 = vpack.c.b16 %v3431, %v3428
        %v3600 = vpack.c.b16 %v3432, %v3429
        %v3601 = vpack.c.b16 %v3433, %v3430
        %v3602 = vpack.c.b16 %v3437, %v3434
        %v3603 = vpack.c.b16 %v3438, %v3435
        %v3604 = vpack.c.b16 %v3439, %v3436
        %v3605 = vpack.c.b16 %v3443, %v3440
        %v3606 = vpack.c.b16 %v3444, %v3441
        %v3607 = vpack.c.b16 %v3445, %v3442
        %v3608 = vpack.c.b16 %v3449, %v3446
        %v3609 = vpack.c.b16 %v3450, %v3447
        %v3610 = vpack.c.b16 %v3451, %v3448
        %v3611 = vpack.c.b16 %v3455, %v3452
        %v3612 = vpack.c.b16 %v3456, %v3453
        %v3613 = vpack.c.b16 %v3457, %v3454
        %v3614 = vpack.c.b16 %v3461, %v3458
        %v3615 = vpack.c.b16 %v3462, %v3459
        %v3616 = vpack.c.b16 %v3463, %v3460
        %v3617 = vpack.c.b16 %v3467, %v3464
        %v3618 = vpack.c.b16 %v3468, %v3465
        %v3619 = vpack.c.b16 %v3469, %v3466
        %v3620 = vpack.c.b16 %v3473, %v3470
        %v3621 = vpack.c.b16 %v3474, %v3471
        %v3622 = vpack.c.b16 %v3475, %v3472
        %v3623 = vpack.c.b16 %v3479, %v3476
        %v3624 = vpack.c.b16 %v3480, %v3477
        %v3625 = vpack.c.b16 %v3481, %v3478
        %v3626 = vpack.c.b16 %v3485, %v3482
        %v3627 = vpack.c.b16 %v3486, %v3483
        %v3628 = vpack.c.b16 %v3487, %v3484
        %v3629 = vpack.c.b16 %v3491, %v3488
        %v3630 = vpack.c.b16 %v3492, %v3489
        %v3631 = vpack.c.b16 %v3493, %v3490
        %v3632 = vpack.c.b16 %v3497, %v3494
        %v3633 = vpack.c.b16 %v3498, %v3495
        %v3634 = vpack.c.b16 %v3499, %v3496
        %v3635 = vpack.c.b16 %v3503, %v3500
        %v3636 = vpack.c.b16 %v3504, %v3501
        %v3637 = vpack.c.b16 %v3505, %v3502
        %v3638 = vpack.c.b16 %v3509, %v3506
        %v3639 = vpack.c.b16 %v3510, %v3507
        %v3640 = vpack.c.b16 %v3511, %v3508
        %v3641 = vpack.c.b16 %v3515, %v3512
        %v3642 = vpack.c.b16 %v3516, %v3513
        %v3643 = vpack.c.b16 %v3517, %v3514
        %v3644 = vpack.c.b16 %v3521, %v3518
        %v3645 = vpack.c.b16 %v3522, %v3519
        %v3646 = vpack.c.b16 %v3523, %v3520
        %v3647 = vpack.c.b16 %v3527, %v3524
        %v3648 = vpack.c.b16 %v3528, %v3525
        %v3649 = vpack.c.b16 %v3529, %v3526
        %v3650 = vpack.c.b16 %v3533, %v3530
        %v3651 = vpack.c.b16 %v3534, %v3531
        %v3652 = vpack.c.b16 %v3535, %v3532
        %v3653 = vpack.c.b16 %v3539, %v3536
        %v3654 = vpack.c.b16 %v3540, %v3537
        %v3655 = vpack.c.b16 %v3541, %v3538
        %v3656 = vpack.c.b16 %v3545, %v3542
        %v3657 = vpack.c.b16 %v3546, %v3543
        %v3658 = vpack.c.b16 %v3547, %v3544
        %v3659 = vpack.c.b16 %v3551, %v3548
        %v3660 = vpack.c.b16 %v3552, %v3549
        %v3661 = vpack.c.b16 %v3553, %v3550
        %v3662 = vpack.c.b16 %v3557, %v3554
        %v3663 = vpack.c.b16 %v3558, %v3555
        %v3664 = vpack.c.b16 %v3559, %v3556
        %v3665 = vpack.c.b16 %v3563, %v3560
        %v3666 = vpack.c.b16 %v3564, %v3561
        %v3667 = vpack.c.b16 %v3565, %v3562
        %v3668 = vpack.c.b16 %v3569, %v3566
        %v3669 = vpack.c.b16 %v3570, %v3567
        %v3670 = vpack.c.b16 %v3571, %v3568
        %v3671 = vpack.c.b16 %v3575, %v3572
        %v3672 = vpack.c.b16 %v3576, %v3573
        %v3673 = vpack.c.b16 %v3577, %v3574
        %3770 = vmatprep.subr.bf16.mxu0 %v3579
        %3771 = vmatpush1.bf16.msra.mxu0 %v3578
        %3772 = vmatprep.subr.bf16.mxu0 %v3582
        %3773 = vmatpush1.bf16.msra.mxu0 %v3581
        %3774 = vmatprep.subr.bf16.mxu0 %v3585
        %3775 = vmatpush1.bf16.msra.mxu0 %v3584
        %3776 = vmatprep.subr.bf16.mxu0 %v3588
        %3777 = vmatpush1.bf16.msra.mxu0 %v3587
        %3778 = vmatprep.subr.bf16.mxu0 %v3591
        %3779 = vmatpush1.bf16.msra.mxu0 %v3590
        %3780 = vmatprep.subr.bf16.mxu0 %v3594
        %3781 = vmatpush1.bf16.msra.mxu0 %v3593
        %3782 = vmatprep.subr.bf16.mxu0 %v3597
        %3783 = vmatpush1.bf16.msra.mxu0 %v3596
        %3784 = vmatprep.subr.bf16.mxu0 %v3600
        %3785 = vmatpush1.bf16.msra.mxu0 %v3599
        %3786 = vmatprep.subr.bf16.mxu0 %v3603
        %3787 = vmatpush1.bf16.msra.mxu0 %v3602
        %3788 = vmatprep.subr.bf16.mxu0 %v3606
        %3789 = vmatpush1.bf16.msra.mxu0 %v3605
        %3790 = vmatprep.subr.bf16.mxu0 %v3609
        %3791 = vmatpush1.bf16.msra.mxu0 %v3608
        %3792 = vmatprep.subr.bf16.mxu0 %v3612
        %3793 = vmatpush1.bf16.msra.mxu0 %v3611
        %3794 = vmatprep.subr.bf16.mxu0 %v3615
        %3795 = vmatpush1.bf16.msra.mxu0 %v3614
        %3796 = vmatprep.subr.bf16.mxu0 %v3618
        %3797 = vmatpush1.bf16.msra.mxu0 %v3617
        %3798 = vmatprep.subr.bf16.mxu0 %v3621
        %3799 = vmatpush1.bf16.msra.mxu0 %v3620
        %3800 = vmatprep.subr.bf16.mxu0 %v3624
        %3801 = vmatpush1.bf16.msra.mxu0 %v3623
        %3802 = vmatprep.mubr.bf16.mxu0 %v1933
        %3803 = vmatmul.mubr.bf16.gmra.mrb[0].mxu0 %v1932
        %v3804 = vpop.f32.mrb[0].mxu0
        %v3805 = vadd.f32 %v3246, %v3804
        %v3806 = vpop.f32.mrb[0].mxu0
        %v3807 = vadd.f32 %v3250, %v3806
        %v3808 = vpop.f32.mrb[0].mxu0
        %v3809 = vadd.f32 %v3246, %v3808
        %v3810 = vpop.f32.mrb[0].mxu0
        %v3811 = vadd.f32 %v3250, %v3810
        %3812 = vmatprep.mubr.bf16.mxu0 %v1937
        %3813 = vmatmul.mubr.bf16.gmra.mrb[0].mxu0 %v1936
        %v3814 = vpop.f32.mrb[0].mxu0
        %v3815 = vadd.f32 %v3246, %v3814
        %v3816 = vpop.f32.mrb[0].mxu0
        %v3817 = vadd.f32 %v3250, %v3816
        %v3818 = vpop.f32.mrb[0].mxu0
        %v3819 = vadd.f32 %v3246, %v3818
        %v3820 = vpop.f32.mrb[0].mxu0
        %v3821 = vadd.f32 %v3250, %v3820
        %3822 = vmatprep.mubr.bf16.mxu0 %v1941
        %3823 = vmatmul.mubr.bf16.gmra.mrb[0].mxu0 %v1940
        %v3824 = vpop.f32.mrb[0].mxu0
        %v3825 = vadd.f32 %v3246, %v3824
        %v3826 = vpop.f32.mrb[0].mxu0
        %v3827 = vadd.f32 %v3250, %v3826
        %v3828 = vpop.f32.mrb[0].mxu0
        %v3829 = vadd.f32 %v3246, %v3828
        %v3830 = vpop.f32.mrb[0].mxu0
        %v3831 = vadd.f32 %v3250, %v3830
        %3832 = vmatprep.mubr.bf16.mxu0 %v1945
        %3833 = vmatmul.mubr.bf16.gmra.mrb[0].mxu0 %v1944
        %v3834 = vpop.f32.mrb[0].mxu0
        %v3835 = vadd.f32 %v3246, %v3834
        %v3836 = vpop.f32.mrb[0].mxu0
        %v3837 = vadd.f32 %v3250, %v3836
        %v3838 = vpop.f32.mrb[0].mxu0
        %v3839 = vadd.f32 %v3246, %v3838
        %v3840 = vpop.f32.mrb[0].mxu0
        %v3841 = vadd.f32 %v3250, %v3840
        %3842 = vmatprep.mubr.bf16.mxu0 %v1949
        %3843 = vmatmul.mubr.bf16.gmra.mrb[0].mxu0 %v1948
        %v3844 = vpop.f32.mrb[0].mxu0
        %v3845 = vadd.f32 %v3246, %v3844
        %v3846 = vpop.f32.mrb[0].mxu0
        %v3847 = vadd.f32 %v3250, %v3846
        %v3848 = vpop.f32.mrb[0].mxu0
        %v3849 = vadd.f32 %v3246, %v3848
        %v3850 = vpop.f32.mrb[0].mxu0
        %v3851 = vadd.f32 %v3250, %v3850
        %3852 = vmatprep.mubr.bf16.mxu0 %v1953
        %3853 = vmatmul.mubr.bf16.gmra.mrb[0].mxu0 %v1952
        %v3854 = vpop.f32.mrb[0].mxu0
        %v3855 = vadd.f32 %v3246, %v3854
        %v3856 = vpop.f32.mrb[0].mxu0
        %v3857 = vadd.f32 %v3250, %v3856
        %v3858 = vpop.f32.mrb[0].mxu0
        %v3859 = vadd.f32 %v3246, %v3858
        %v3860 = vpop.f32.mrb[0].mxu0
        %v3861 = vadd.f32 %v3250, %v3860
        %3862 = vmatprep.mubr.bf16.mxu0 %v1957
        %3863 = vmatmul.mubr.bf16.gmra.mrb[0].mxu0 %v1956
        %v3864 = vpop.f32.mrb[0].mxu0
        %v3865 = vadd.f32 %v3246, %v3864
        %v3866 = vpop.f32.mrb[0].mxu0
        %v3867 = vadd.f32 %v3250, %v3866
        %v3868 = vpop.f32.mrb[0].mxu0
        %v3869 = vadd.f32 %v3246, %v3868
        %v3870 = vpop.f32.mrb[0].mxu0
        %v3871 = vadd.f32 %v3250, %v3870
        %3872 = vmatprep.mubr.bf16.mxu0 %v1961
        %3873 = vmatmul.mubr.bf16.gmra.mrb[0].mxu0 %v1960
        %v3874 = vpop.f32.mrb[0].mxu0
        %v3875 = vadd.f32 %v3246, %v3874
        %v3876 = vpop.f32.mrb[0].mxu0
        %v3877 = vadd.f32 %v3250, %v3876
        %v3878 = vpop.f32.mrb[0].mxu0
        %v3879 = vadd.f32 %v3246, %v3878
        %v3880 = vpop.f32.mrb[0].mxu0
        %v3881 = vadd.f32 %v3250, %v3880
        %3882 = vdwg.mxu0
        %3883 = vmatprep.subr.bf16.mxu0 %v3627
        %3884 = vmatpush1.bf16.msra.mxu0 %v3626
        %3885 = vmatprep.subr.bf16.mxu0 %v3630
        %3886 = vmatpush1.bf16.msra.mxu0 %v3629
        %3887 = vmatprep.subr.bf16.mxu0 %v3633
        %3888 = vmatpush1.bf16.msra.mxu0 %v3632
        %3889 = vmatprep.subr.bf16.mxu0 %v3636
        %3890 = vmatpush1.bf16.msra.mxu0 %v3635
        %3891 = vmatprep.subr.bf16.mxu0 %v3639
        %3892 = vmatpush1.bf16.msra.mxu0 %v3638
        %3893 = vmatprep.subr.bf16.mxu0 %v3642
        %3894 = vmatpush1.bf16.msra.mxu0 %v3641
        %3895 = vmatprep.subr.bf16.mxu0 %v3645
        %3896 = vmatpush1.bf16.msra.mxu0 %v3644
        %3897 = vmatprep.subr.bf16.mxu0 %v3648
        %3898 = vmatpush1.bf16.msra.mxu0 %v3647
        %3899 = vmatprep.subr.bf16.mxu0 %v3651
        %3900 = vmatpush1.bf16.msra.mxu0 %v3650
        %3901 = vmatprep.subr.bf16.mxu0 %v3654
        %3902 = vmatpush1.bf16.msra.mxu0 %v3653
        %3903 = vmatprep.subr.bf16.mxu0 %v3657
        %3904 = vmatpush1.bf16.msra.mxu0 %v3656
        %3905 = vmatprep.subr.bf16.mxu0 %v3660
        %3906 = vmatpush1.bf16.msra.mxu0 %v3659
        %3907 = vmatprep.subr.bf16.mxu0 %v3663
        %3908 = vmatpush1.bf16.msra.mxu0 %v3662
        %3909 = vmatprep.subr.bf16.mxu0 %v3666
        %3910 = vmatpush1.bf16.msra.mxu0 %v3665
        %3911 = vmatprep.subr.bf16.mxu0 %v3669
        %3912 = vmatpush1.bf16.msra.mxu0 %v3668
        %3913 = vmatprep.subr.bf16.mxu0 %v3672
        %3914 = vmatpush1.bf16.msra.mxu0 %v3671
        %3915 = vmatprep.mubr.bf16.mxu0 %v1935
        %3916 = vmatmul.mubr.bf16.gmra.mrb[0].mxu0 %v1934
        %v3917 = vpop.f32.mrb[0].mxu0
        %v3918 = vadd.f32 %v3805, %v3917
        %v3919 = vpop.f32.mrb[0].mxu0
        %v3920 = vadd.f32 %v3807, %v3919
        %v3921 = vpop.f32.mrb[0].mxu0
        %v3922 = vadd.f32 %v3809, %v3921
        %v3923 = vpop.f32.mrb[0].mxu0
        %v3924 = vadd.f32 %v3811, %v3923
        %3925 = vmatprep.mubr.bf16.mxu0 %v1939
        %3926 = vmatmul.mubr.bf16.gmra.mrb[0].mxu0 %v1938
        %v3927 = vpop.f32.mrb[0].mxu0
        %v3928 = vadd.f32 %v3815, %v3927
        %v3929 = vpop.f32.mrb[0].mxu0
        %v3930 = vadd.f32 %v3817, %v3929
        %v3931 = vpop.f32.mrb[0].mxu0
        %v3932 = vadd.f32 %v3819, %v3931
        %v3933 = vpop.f32.mrb[0].mxu0
        %v3934 = vadd.f32 %v3821, %v3933
        %3935 = vmatprep.mubr.bf16.mxu0 %v1943
        %3936 = vmatmul.mubr.bf16.gmra.mrb[0].mxu0 %v1942
        %v3937 = vpop.f32.mrb[0].mxu0
        %v3938 = vadd.f32 %v3825, %v3937
        %v3939 = vpop.f32.mrb[0].mxu0
        %v3940 = vadd.f32 %v3827, %v3939
        %v3941 = vpop.f32.mrb[0].mxu0
        %v3942 = vadd.f32 %v3829, %v3941
        %v3943 = vpop.f32.mrb[0].mxu0
        %v3944 = vadd.f32 %v3831, %v3943
        %3945 = vmatprep.mubr.bf16.mxu0 %v1947
        %3946 = vmatmul.mubr.bf16.gmra.mrb[0].mxu0 %v1946
        %v3947 = vpop.f32.mrb[0].mxu0
        %v3948 = vadd.f32 %v3835, %v3947
        %v3949 = vpop.f32.mrb[0].mxu0
        %v3950 = vadd.f32 %v3837, %v3949
        %v3951 = vpop.f32.mrb[0].mxu0
        %v3952 = vadd.f32 %v3839, %v3951
        %v3953 = vpop.f32.mrb[0].mxu0
        %v3954 = vadd.f32 %v3841, %v3953
        %3955 = vmatprep.mubr.bf16.mxu0 %v1951
        %3956 = vmatmul.mubr.bf16.gmra.mrb[0].mxu0 %v1950
        %v3957 = vpop.f32.mrb[0].mxu0
        %v3958 = vadd.f32 %v3845, %v3957
        %v3959 = vpop.f32.mrb[0].mxu0
        %v3960 = vadd.f32 %v3847, %v3959
        %v3961 = vpop.f32.mrb[0].mxu0
        %v3962 = vadd.f32 %v3849, %v3961
        %v3963 = vpop.f32.mrb[0].mxu0
        %v3964 = vadd.f32 %v3851, %v3963
        %3965 = vmatprep.mubr.bf16.mxu0 %v1955
        %3966 = vmatmul.mubr.bf16.gmra.mrb[0].mxu0 %v1954
        %v3967 = vpop.f32.mrb[0].mxu0
        %v3968 = vadd.f32 %v3855, %v3967
        %v3969 = vpop.f32.mrb[0].mxu0
        %v3970 = vadd.f32 %v3857, %v3969
        %v3971 = vpop.f32.mrb[0].mxu0
        %v3972 = vadd.f32 %v3859, %v3971
        %v3973 = vpop.f32.mrb[0].mxu0
        %v3974 = vadd.f32 %v3861, %v3973
        %3975 = vmatprep.mubr.bf16.mxu0 %v1959
        %3976 = vmatmul.mubr.bf16.gmra.mrb[0].mxu0 %v1958
        %v3977 = vpop.f32.mrb[0].mxu0
        %v3978 = vadd.f32 %v3865, %v3977
        %v3979 = vpop.f32.mrb[0].mxu0
        %v3980 = vadd.f32 %v3867, %v3979
        %v3981 = vpop.f32.mrb[0].mxu0
        %v3982 = vadd.f32 %v3869, %v3981
        %v3983 = vpop.f32.mrb[0].mxu0
        %v3984 = vadd.f32 %v3871, %v3983
        %3985 = vmatprep.mubr.bf16.mxu0 %v1963
        %3986 = vmatmul.mubr.bf16.gmra.mrb[0].mxu0 %v1962
        %v3987 = vpop.f32.mrb[0].mxu0
        %v3988 = vadd.f32 %v3875, %v3987
        %v3989 = vpop.f32.mrb[0].mxu0
        %v3990 = vadd.f32 %v3877, %v3989
        %v3991 = vpop.f32.mrb[0].mxu0
        %v3992 = vadd.f32 %v3879, %v3991
        %v3993 = vpop.f32.mrb[0].mxu0
        %v3994 = vadd.f32 %v3881, %v3993
        %3995 = vdwg.mxu0
        %3996 = vmatprep.subr.bf16.mxu0 0
        %3997 = vmatpush1.bf16.msra.mxu0 %v3580
        %3998 = vmatprep.subr.bf16.mxu0 0
        %3999 = vmatpush1.bf16.msra.mxu0 %v3583
        %4000 = vmatprep.subr.bf16.mxu0 0
        %4001 = vmatpush1.bf16.msra.mxu0 %v3586
        %4002 = vmatprep.subr.bf16.mxu0 0
        %4003 = vmatpush1.bf16.msra.mxu0 %v3589
        %4004 = vmatprep.subr.bf16.mxu0 0
        %4005 = vmatpush1.bf16.msra.mxu0 %v3592
        %4006 = vmatprep.subr.bf16.mxu0 0
        %4007 = vmatpush1.bf16.msra.mxu0 %v3595
        %4008 = vmatprep.subr.bf16.mxu0 0
        %4009 = vmatpush1.bf16.msra.mxu0 %v3598
        %4010 = vmatprep.subr.bf16.mxu0 0
        %4011 = vmatpush1.bf16.msra.mxu0 %v3601
        %4012 = vmatprep.subr.bf16.mxu0 0
        %4013 = vmatpush1.bf16.msra.mxu0 %v3604
        %4014 = vmatprep.subr.bf16.mxu0 0
        %4015 = vmatpush1.bf16.msra.mxu0 %v3607
        %4016 = vmatprep.subr.bf16.mxu0 0
        %4017 = vmatpush1.bf16.msra.mxu0 %v3610
        %4018 = vmatprep.subr.bf16.mxu0 0
        %4019 = vmatpush1.bf16.msra.mxu0 %v3613
        %4020 = vmatprep.subr.bf16.mxu0 0
        %4021 = vmatpush1.bf16.msra.mxu0 %v3616
        %4022 = vmatprep.subr.bf16.mxu0 0
        %4023 = vmatpush1.bf16.msra.mxu0 %v3619
        %4024 = vmatprep.subr.bf16.mxu0 0
        %4025 = vmatpush1.bf16.msra.mxu0 %v3622
        %4026 = vmatprep.subr.bf16.mxu0 0
        %4027 = vmatpush1.bf16.msra.mxu0 %v3625
        %4028 = vmatprep.mubr.bf16.mxu0 %v1933
        %4029 = vmatmul.mubr.bf16.gmra.mrb[0].mxu0 %v1932
        %v4030 = vpop.f32.mrb[0].mxu0
        %v4031 = vadd.f32 %v3254, %v4030
        %v4032 = vpop.f32.mrb[0].mxu0
        %v4033 = vpop.f32.mrb[0].mxu0
        %v4034 = vadd.f32 %v3254, %v4033
        %v4035 = vpop.f32.mrb[0].mxu0
        %4036 = vmatprep.mubr.bf16.mxu0 %v1937
        %4037 = vmatmul.mubr.bf16.gmra.mrb[0].mxu0 %v1936
        %v4038 = vpop.f32.mrb[0].mxu0
        %v4039 = vadd.f32 %v3254, %v4038
        %v4040 = vpop.f32.mrb[0].mxu0
        %v4041 = vpop.f32.mrb[0].mxu0
        %v4042 = vadd.f32 %v3254, %v4041
        %v4043 = vpop.f32.mrb[0].mxu0
        %4044 = vmatprep.mubr.bf16.mxu0 %v1941
        %4045 = vmatmul.mubr.bf16.gmra.mrb[0].mxu0 %v1940
        %v4046 = vpop.f32.mrb[0].mxu0
        %v4047 = vadd.f32 %v3254, %v4046
        %v4048 = vpop.f32.mrb[0].mxu0
        %v4049 = vpop.f32.mrb[0].mxu0
        %v4050 = vadd.f32 %v3254, %v4049
        %v4051 = vpop.f32.mrb[0].mxu0
        %4052 = vmatprep.mubr.bf16.mxu0 %v1945
        %4053 = vmatmul.mubr.bf16.gmra.mrb[0].mxu0 %v1944
        %v4054 = vpop.f32.mrb[0].mxu0
        %v4055 = vadd.f32 %v3254, %v4054
        %v4056 = vpop.f32.mrb[0].mxu0
        %v4057 = vpop.f32.mrb[0].mxu0
        %v4058 = vadd.f32 %v3254, %v4057
        %v4059 = vpop.f32.mrb[0].mxu0
        %4060 = vmatprep.mubr.bf16.mxu0 %v1949
        %4061 = vmatmul.mubr.bf16.gmra.mrb[0].mxu0 %v1948
        %v4062 = vpop.f32.mrb[0].mxu0
        %v4063 = vadd.f32 %v3254, %v4062
        %v4064 = vpop.f32.mrb[0].mxu0
        %v4065 = vpop.f32.mrb[0].mxu0
        %v4066 = vadd.f32 %v3254, %v4065
        %v4067 = vpop.f32.mrb[0].mxu0
        %4068 = vmatprep.mubr.bf16.mxu0 %v1953
        %4069 = vmatmul.mubr.bf16.gmra.mrb[0].mxu0 %v1952
        %v4070 = vpop.f32.mrb[0].mxu0
        %v4071 = vadd.f32 %v3254, %v4070
        %v4072 = vpop.f32.mrb[0].mxu0
        %v4073 = vpop.f32.mrb[0].mxu0
        %v4074 = vadd.f32 %v3254, %v4073
        %v4075 = vpop.f32.mrb[0].mxu0
        %4076 = vmatprep.mubr.bf16.mxu0 %v1957
        %4077 = vmatmul.mubr.bf16.gmra.mrb[0].mxu0 %v1956
        %v4078 = vpop.f32.mrb[0].mxu0
        %v4079 = vadd.f32 %v3254, %v4078
        %v4080 = vpop.f32.mrb[0].mxu0
        %v4081 = vpop.f32.mrb[0].mxu0
        %v4082 = vadd.f32 %v3254, %v4081
        %v4083 = vpop.f32.mrb[0].mxu0
        %4084 = vmatprep.mubr.bf16.mxu0 %v1961
        %4085 = vmatmul.mubr.bf16.gmra.mrb[0].mxu0 %v1960
        %v4086 = vpop.f32.mrb[0].mxu0
        %v4087 = vadd.f32 %v3254, %v4086
        %v4088 = vpop.f32.mrb[0].mxu0
        %v4089 = vpop.f32.mrb[0].mxu0
        %v4090 = vadd.f32 %v3254, %v4089
        %v4091 = vpop.f32.mrb[0].mxu0
        %4092 = vdwg.mxu0
        %4093 = vmatprep.subr.bf16.mxu0 0
        %4094 = vmatpush1.bf16.msra.mxu0 %v3628
        %4095 = vmatprep.subr.bf16.mxu0 0
        %4096 = vmatpush1.bf16.msra.mxu0 %v3631
        %4097 = vmatprep.subr.bf16.mxu0 0
        %4098 = vmatpush1.bf16.msra.mxu0 %v3634
        %4099 = vmatprep.subr.bf16.mxu0 0
        %4100 = vmatpush1.bf16.msra.mxu0 %v3637
        %4101 = vmatprep.subr.bf16.mxu0 0
        %4102 = vmatpush1.bf16.msra.mxu0 %v3640
        %4103 = vmatprep.subr.bf16.mxu0 0
        %4104 = vmatpush1.bf16.msra.mxu0 %v3643
        %4105 = vmatprep.subr.bf16.mxu0 0
        %4106 = vmatpush1.bf16.msra.mxu0 %v3646
        %4107 = vmatprep.subr.bf16.mxu0 0
        %4108 = vmatpush1.bf16.msra.mxu0 %v3649
        %4109 = vmatprep.subr.bf16.mxu0 0
        %4110 = vmatpush1.bf16.msra.mxu0 %v3652
        %4111 = vmatprep.subr.bf16.mxu0 0
        %4112 = vmatpush1.bf16.msra.mxu0 %v3655
        %4113 = vmatprep.subr.bf16.mxu0 0
        %4114 = vmatpush1.bf16.msra.mxu0 %v3658
        %4115 = vmatprep.subr.bf16.mxu0 0
        %4116 = vmatpush1.bf16.msra.mxu0 %v3661
        %4117 = vmatprep.subr.bf16.mxu0 0
        %4118 = vmatpush1.bf16.msra.mxu0 %v3664
        %4119 = vmatprep.subr.bf16.mxu0 0
        %4120 = vmatpush1.bf16.msra.mxu0 %v3667
        %4121 = vmatprep.subr.bf16.mxu0 0
        %4122 = vmatpush1.bf16.msra.mxu0 %v3670
        %4123 = vmatprep.subr.bf16.mxu0 0
        %4124 = vmatpush1.bf16.msra.mxu0 %v3673
        %4125 = vmatprep.mubr.bf16.mxu0 %v1935
        %4126 = vmatmul.mubr.bf16.gmra.mrb[0].mxu0 %v1934
        %v4127 = vpop.f32.mrb[0].mxu0
        %v4128 = vadd.f32 %v4031, %v4127
        %v4129 = vpop.f32.mrb[0].mxu0
        %v4130 = vpop.f32.mrb[0].mxu0
        %v4131 = vadd.f32 %v4034, %v4130
        %v4132 = vpop.f32.mrb[0].mxu0
        %4133 = vmatprep.mubr.bf16.mxu0 %v1939
        %4134 = vmatmul.mubr.bf16.gmra.mrb[0].mxu0 %v1938
        %v4135 = vpop.f32.mrb[0].mxu0
        %v4136 = vadd.f32 %v4039, %v4135
        %v4137 = vpop.f32.mrb[0].mxu0
        %v4138 = vpop.f32.mrb[0].mxu0
        %v4139 = vadd.f32 %v4042, %v4138
        %v4140 = vpop.f32.mrb[0].mxu0
        %4141 = vmatprep.mubr.bf16.mxu0 %v1943
        %4142 = vmatmul.mubr.bf16.gmra.mrb[0].mxu0 %v1942
        %v4143 = vpop.f32.mrb[0].mxu0
        %v4144 = vadd.f32 %v4047, %v4143
        %v4145 = vpop.f32.mrb[0].mxu0
        %v4146 = vpop.f32.mrb[0].mxu0
        %v4147 = vadd.f32 %v4050, %v4146
        %v4148 = vpop.f32.mrb[0].mxu0
        %4149 = vmatprep.mubr.bf16.mxu0 %v1947
        %4150 = vmatmul.mubr.bf16.gmra.mrb[0].mxu0 %v1946
        %v4151 = vpop.f32.mrb[0].mxu0
        %v4152 = vadd.f32 %v4055, %v4151
        %v4153 = vpop.f32.mrb[0].mxu0
        %v4154 = vpop.f32.mrb[0].mxu0
        %v4155 = vadd.f32 %v4058, %v4154
        %v4156 = vpop.f32.mrb[0].mxu0
        %4157 = vmatprep.mubr.bf16.mxu0 %v1951
        %4158 = vmatmul.mubr.bf16.gmra.mrb[0].mxu0 %v1950
        %v4159 = vpop.f32.mrb[0].mxu0
        %v4160 = vadd.f32 %v4063, %v4159
        %v4161 = vpop.f32.mrb[0].mxu0
        %v4162 = vpop.f32.mrb[0].mxu0
        %v4163 = vadd.f32 %v4066, %v4162
        %v4164 = vpop.f32.mrb[0].mxu0
        %4165 = vmatprep.mubr.bf16.mxu0 %v1955
        %4166 = vmatmul.mubr.bf16.gmra.mrb[0].mxu0 %v1954
        %v4167 = vpop.f32.mrb[0].mxu0
        %v4168 = vadd.f32 %v4071, %v4167
        %v4169 = vpop.f32.mrb[0].mxu0
        %v4170 = vpop.f32.mrb[0].mxu0
        %v4171 = vadd.f32 %v4074, %v4170
        %v4172 = vpop.f32.mrb[0].mxu0
        %4173 = vmatprep.mubr.bf16.mxu0 %v1959
        %4174 = vmatmul.mubr.bf16.gmra.mrb[0].mxu0 %v1958
        %v4175 = vpop.f32.mrb[0].mxu0
        %v4176 = vadd.f32 %v4079, %v4175
        %v4177 = vpop.f32.mrb[0].mxu0
        %v4178 = vpop.f32.mrb[0].mxu0
        %v4179 = vadd.f32 %v4082, %v4178
        %v4180 = vpop.f32.mrb[0].mxu0
        %4181 = vmatprep.mubr.bf16.mxu0 %v1963
        %4182 = vmatmul.mubr.bf16.gmra.mrb[0].mxu0 %v1962
        %v4183 = vpop.f32.mrb[0].mxu0
        %v4184 = vadd.f32 %v4087, %v4183
        %v4185 = vpop.f32.mrb[0].mxu0
        %v4186 = vpop.f32.mrb[0].mxu0
        %v4187 = vadd.f32 %v4090, %v4186
        %v4188 = vpop.f32.mrb[0].mxu0
        %4189 = vdwg.mxu0
        %v4190 = vmax.f32 %v3918, 0.0
        %v4191 = vmax.f32 %v3920, 0.0
        %v4192 = vmax.f32 %v4128, 0.0
        %v4193 = vmax.f32 %v3922, 0.0
        %v4194 = vmax.f32 %v3924, 0.0
        %v4195 = vmax.f32 %v4131, 0.0
        %v4196 = vmax.f32 %v3928, 0.0
        %v4197 = vmax.f32 %v3930, 0.0
        %v4198 = vmax.f32 %v4136, 0.0
        %v4199 = vmax.f32 %v3932, 0.0
        %v4200 = vmax.f32 %v3934, 0.0
        %v4201 = vmax.f32 %v4139, 0.0
        %v4202 = vmax.f32 %v3938, 0.0
        %v4203 = vmax.f32 %v3940, 0.0
        %v4204 = vmax.f32 %v4144, 0.0
        %v4205 = vmax.f32 %v3942, 0.0
        %v4206 = vmax.f32 %v3944, 0.0
        %v4207 = vmax.f32 %v4147, 0.0
        %v4208 = vmax.f32 %v3948, 0.0
        %v4209 = vmax.f32 %v3950, 0.0
        %v4210 = vmax.f32 %v4152, 0.0
        %v4211 = vmax.f32 %v3952, 0.0
        %v4212 = vmax.f32 %v3954, 0.0
        %v4213 = vmax.f32 %v4155, 0.0
        %v4214 = vmax.f32 %v3958, 0.0
        %v4215 = vmax.f32 %v3960, 0.0
        %v4216 = vmax.f32 %v4160, 0.0
        %v4217 = vmax.f32 %v3962, 0.0
        %v4218 = vmax.f32 %v3964, 0.0
        %v4219 = vmax.f32 %v4163, 0.0
        %v4220 = vmax.f32 %v3968, 0.0
        %v4221 = vmax.f32 %v3970, 0.0
        %v4222 = vmax.f32 %v4168, 0.0
        %v4223 = vmax.f32 %v3972, 0.0
        %v4224 = vmax.f32 %v3974, 0.0
        %v4225 = vmax.f32 %v4171, 0.0
        %v4226 = vmax.f32 %v3978, 0.0
        %v4227 = vmax.f32 %v3980, 0.0
        %v4228 = vmax.f32 %v4176, 0.0
        %v4229 = vmax.f32 %v3982, 0.0
        %v4230 = vmax.f32 %v3984, 0.0
        %v4231 = vmax.f32 %v4179, 0.0
        %v4232 = vmax.f32 %v3988, 0.0
        %v4233 = vmax.f32 %v3990, 0.0
        %v4234 = vmax.f32 %v4184, 0.0
        %v4235 = vmax.f32 %v3992, 0.0
        %v4236 = vmax.f32 %v3994, 0.0
        %v4237 = vmax.f32 %v4187, 0.0
        %v4238 = vpack.c.bf16 %v4193, %v4190
        %v4239 = vpack.c.bf16 %v4194, %v4191
        %v4240 = vpack.c.bf16 %v4195, %v4192
        %v4241 = vpack.c.bf16 %v4199, %v4196
        %v4242 = vpack.c.bf16 %v4200, %v4197
        %v4243 = vpack.c.bf16 %v4201, %v4198
        %v4244 = vpack.c.bf16 %v4205, %v4202
        %v4245 = vpack.c.bf16 %v4206, %v4203
        %v4246 = vpack.c.bf16 %v4207, %v4204
        %v4247 = vpack.c.bf16 %v4211, %v4208
        %v4248 = vpack.c.bf16 %v4212, %v4209
        %v4249 = vpack.c.bf16 %v4213, %v4210
        %v4250 = vpack.c.bf16 %v4217, %v4214
        %v4251 = vpack.c.bf16 %v4218, %v4215
        %v4252 = vpack.c.bf16 %v4219, %v4216
        %v4253 = vpack.c.bf16 %v4223, %v4220
        %v4254 = vpack.c.bf16 %v4224, %v4221
        %v4255 = vpack.c.bf16 %v4225, %v4222
        %v4256 = vpack.c.bf16 %v4229, %v4226
        %v4257 = vpack.c.bf16 %v4230, %v4227
        %v4258 = vpack.c.bf16 %v4231, %v4228
        %v4259 = vpack.c.bf16 %v4235, %v4232
        %v4260 = vpack.c.bf16 %v4236, %v4233
        %v4261 = vpack.c.bf16 %v4237, %v4234
        %v4262 = vld [vmem:[%s9] sm:$0xf]
        %v4263 = vld [vmem:[%s9 + $0x4] sm:$0xf]
        %v4264 = vld [vmem:[%s9 + $0x8] sm:$0xf]
        %v4265 = vld [vmem:[%s9 + $0xc] sm:$0xf]
        %v4266 = vld [vmem:[%s9 + $0x10] sm:$0xf]
        %v4267 = vld [vmem:[%s9 + $0x14] sm:$0xf]
        %v4268 = vld [vmem:[%s9 + $0x18] sm:$0xf]
        %v4269 = vld [vmem:[%s9 + $0x1c] sm:$0xf]
        %v4270 = vld [vmem:[%s9 + $0x20] sm:$0xf]
        %v4271 = vld [vmem:[%s9 + $0x24] sm:$0xf]
        %v4272 = vld [vmem:[%s9 + $0x28] sm:$0xf]
        %v4273 = vld [vmem:[%s9 + $0x2c] sm:$0xf]
        %v4274 = vld [vmem:[%s9 + $0x30] sm:$0xf]
        %v4275 = vld [vmem:[%s9 + $0x34] sm:$0xf]
        %v4276 = vld [vmem:[%s9 + $0x38] sm:$0xf]
        %v4277 = vld [vmem:[%s9 + $0x3c] sm:$0xf]
        %v4278 = vld [vmem:[%s9 + $0x40] sm:$0xf]
        %v4279 = vld [vmem:[%s9 + $0x44] sm:$0xf]
        %v4280 = vld [vmem:[%s9 + $0x48] sm:$0xf]
        %v4281 = vld [vmem:[%s9 + $0x4c] sm:$0xf]
        %v4282 = vld [vmem:[%s9 + $0x50] sm:$0xf]
        %v4283 = vld [vmem:[%s9 + $0x54] sm:$0xf]
        %v4284 = vld [vmem:[%s9 + $0x58] sm:$0xf]
        %v4285 = vld [vmem:[%s9 + $0x5c] sm:$0xf]
        %v4286 = vld [vmem:[%s9 + $0x60] sm:$0xf]
        %v4287 = vld [vmem:[%s9 + $0x64] sm:$0xf]
        %v4288 = vld [vmem:[%s9 + $0x68] sm:$0xf]
        %v4289 = vld [vmem:[%s9 + $0x6c] sm:$0xf]
        %v4290 = vld [vmem:[%s9 + $0x70] sm:$0xf]
        %v4291 = vld [vmem:[%s9 + $0x74] sm:$0xf]
        %v4292 = vld [vmem:[%s9 + $0x78] sm:$0xf]
        %v4293 = vld [vmem:[%s9 + $0x7c] sm:$0xf]
        %v4294 = vld [vmem:[%s9 + $0x80] sm:$0xf]
        %v4295 = vld [vmem:[%s9 + $0x84] sm:$0xf]
        %v4296 = vld [vmem:[%s9 + $0x88] sm:$0xf]
        %v4297 = vld [vmem:[%s9 + $0x8c] sm:$0xf]
        %v4298 = vld [vmem:[%s9 + $0x90] sm:$0xf]
        %v4299 = vld [vmem:[%s9 + $0x94] sm:$0xf]
        %v4300 = vld [vmem:[%s9 + $0x98] sm:$0xf]
        %v4301 = vld [vmem:[%s9 + $0x9c] sm:$0xf]
        %v4302 = vld [vmem:[%s9 + $0xa0] sm:$0xf]
        %v4303 = vld [vmem:[%s9 + $0xa4] sm:$0xf]
        %v4304 = vld [vmem:[%s9 + $0xa8] sm:$0xf]
        %v4305 = vld [vmem:[%s9 + $0xac] sm:$0xf]
        %v4306 = vld [vmem:[%s9 + $0xb0] sm:$0xf]
        %v4307 = vld [vmem:[%s9 + $0xb4] sm:$0xf]
        %v4308 = vld [vmem:[%s9 + $0xb8] sm:$0xf]
        %v4309 = vld [vmem:[%s9 + $0xbc] sm:$0xf]
        %v4310 = vld [vmem:[%s10] sm:$0xf]
        %v4311 = vld [vmem:[%s10 + $0x4] sm:$0xf]
        %v4312 = vld [vmem:[%s10 + $0x8] sm:$0xf]
        %v4313 = vld [vmem:[%s10 + $0xc] sm:$0xf]
        %v4314 = vld [vmem:[%s10 + $0x10] sm:$0xf]
        %v4315 = vld [vmem:[%s10 + $0x14] sm:$0xf]
        %v4316 = vld [vmem:[%s10 + $0x18] sm:$0xf]
        %v4317 = vld [vmem:[%s10 + $0x1c] sm:$0xf]
        %v4318 = vld [vmem:[%s10 + $0x20] sm:$0xf]
        %v4319 = vld [vmem:[%s10 + $0x24] sm:$0xf]
        %v4320 = vld [vmem:[%s10 + $0x28] sm:$0xf]
        %v4321 = vld [vmem:[%s10 + $0x2c] sm:$0xf]
        %v4322 = vld [vmem:[%s10 + $0x30] sm:$0xf]
        %v4323 = vld [vmem:[%s10 + $0x34] sm:$0xf]
        %v4324 = vld [vmem:[%s10 + $0x38] sm:$0xf]
        %v4325 = vld [vmem:[%s10 + $0x3c] sm:$0xf]
        %v4326 = vld [vmem:[%s10 + $0x40] sm:$0xf]
        %v4327 = vld [vmem:[%s10 + $0x44] sm:$0xf]
        %v4328 = vld [vmem:[%s10 + $0x48] sm:$0xf]
        %v4329 = vld [vmem:[%s10 + $0x4c] sm:$0xf]
        %v4330 = vld [vmem:[%s10 + $0x50] sm:$0xf]
        %v4331 = vld [vmem:[%s10 + $0x54] sm:$0xf]
        %v4332 = vld [vmem:[%s10 + $0x58] sm:$0xf]
        %v4333 = vld [vmem:[%s10 + $0x5c] sm:$0xf]
        %v4334 = vld [vmem:[%s10 + $0x60] sm:$0xf]
        %v4335 = vld [vmem:[%s10 + $0x64] sm:$0xf]
        %v4336 = vld [vmem:[%s10 + $0x68] sm:$0xf]
        %v4337 = vld [vmem:[%s10 + $0x6c] sm:$0xf]
        %v4338 = vld [vmem:[%s10 + $0x70] sm:$0xf]
        %v4339 = vld [vmem:[%s10 + $0x74] sm:$0xf]
        %v4340 = vld [vmem:[%s10 + $0x78] sm:$0xf]
        %v4341 = vld [vmem:[%s10 + $0x7c] sm:$0xf]
        %v4342 = vld [vmem:[%s10 + $0x80] sm:$0xf]
        %v4343 = vld [vmem:[%s10 + $0x84] sm:$0xf]
        %v4344 = vld [vmem:[%s10 + $0x88] sm:$0xf]
        %v4345 = vld [vmem:[%s10 + $0x8c] sm:$0xf]
        %v4346 = vld [vmem:[%s10 + $0x90] sm:$0xf]
        %v4347 = vld [vmem:[%s10 + $0x94] sm:$0xf]
        %v4348 = vld [vmem:[%s10 + $0x98] sm:$0xf]
        %v4349 = vld [vmem:[%s10 + $0x9c] sm:$0xf]
        %v4350 = vld [vmem:[%s10 + $0xa0] sm:$0xf]
        %v4351 = vld [vmem:[%s10 + $0xa4] sm:$0xf]
        %v4352 = vld [vmem:[%s10 + $0xa8] sm:$0xf]
        %v4353 = vld [vmem:[%s10 + $0xac] sm:$0xf]
        %v4354 = vld [vmem:[%s10 + $0xb0] sm:$0xf]
        %v4355 = vld [vmem:[%s10 + $0xb4] sm:$0xf]
        %v4356 = vld [vmem:[%s10 + $0xb8] sm:$0xf]
        %v4357 = vld [vmem:[%s10 + $0xbc] sm:$0xf]
        %v4406 = vunpack.c.l.b16 %v4310
        %v4407 = vunpack.c.l.b16 %v4311
        %v4408 = vunpack.c.l.b16 %v4312
        %v4409 = vunpack.c.l.b16 %v4313
        %v4410 = vunpack.c.l.b16 %v4314
        %v4411 = vunpack.c.l.b16 %v4315
        %v4412 = vunpack.c.l.b16 %v4316
        %v4413 = vunpack.c.l.b16 %v4317
        %v4414 = vunpack.c.l.b16 %v4318
        %v4415 = vunpack.c.l.b16 %v4319
        %v4416 = vunpack.c.l.b16 %v4320
        %v4417 = vunpack.c.l.b16 %v4321
        %v4418 = vunpack.c.l.b16 %v4322
        %v4419 = vunpack.c.l.b16 %v4323
        %v4420 = vunpack.c.l.b16 %v4324
        %v4421 = vunpack.c.l.b16 %v4325
        %v4422 = vunpack.c.l.b16 %v4326
        %v4423 = vunpack.c.l.b16 %v4327
        %v4424 = vunpack.c.l.b16 %v4328
        %v4425 = vunpack.c.l.b16 %v4329
        %v4426 = vunpack.c.l.b16 %v4330
        %v4427 = vunpack.c.l.b16 %v4331
        %v4428 = vunpack.c.l.b16 %v4332
        %v4429 = vunpack.c.l.b16 %v4333
        %v4430 = vunpack.c.l.b16 %v4334
        %v4431 = vunpack.c.l.b16 %v4335
        %v4432 = vunpack.c.l.b16 %v4336
        %v4433 = vunpack.c.l.b16 %v4337
        %v4434 = vunpack.c.l.b16 %v4338
        %v4435 = vunpack.c.l.b16 %v4339
        %v4436 = vunpack.c.l.b16 %v4340
        %v4437 = vunpack.c.l.b16 %v4341
        %v4438 = vunpack.c.l.b16 %v4342
        %v4439 = vunpack.c.l.b16 %v4343
        %v4440 = vunpack.c.l.b16 %v4344
        %v4441 = vunpack.c.l.b16 %v4345
        %v4442 = vunpack.c.l.b16 %v4346
        %v4443 = vunpack.c.l.b16 %v4347
        %v4444 = vunpack.c.l.b16 %v4348
        %v4445 = vunpack.c.l.b16 %v4349
        %v4446 = vunpack.c.l.b16 %v4350
        %v4447 = vunpack.c.l.b16 %v4351
        %v4448 = vunpack.c.l.b16 %v4352
        %v4449 = vunpack.c.l.b16 %v4353
        %v4450 = vunpack.c.l.b16 %v4354
        %v4451 = vunpack.c.l.b16 %v4355
        %v4452 = vunpack.c.l.b16 %v4356
        %v4453 = vunpack.c.l.b16 %v4357
        %v4454 = vpack.c.b16 %v4407, %v4406
        %v4455 = vpack.c.b16 %v4409, %v4408
        %v4456 = vpack.c.b16 %v4411, %v4410
        %v4457 = vpack.c.b16 %v4413, %v4412
        %v4458 = vpack.c.b16 %v4415, %v4414
        %v4459 = vpack.c.b16 %v4417, %v4416
        %v4460 = vpack.c.b16 %v4419, %v4418
        %v4461 = vpack.c.b16 %v4421, %v4420
        %v4462 = vpack.c.b16 %v4423, %v4422
        %v4463 = vpack.c.b16 %v4425, %v4424
        %v4464 = vpack.c.b16 %v4427, %v4426
        %v4465 = vpack.c.b16 %v4429, %v4428
        %v4466 = vpack.c.b16 %v4431, %v4430
        %v4467 = vpack.c.b16 %v4433, %v4432
        %v4468 = vpack.c.b16 %v4435, %v4434
        %v4469 = vpack.c.b16 %v4437, %v4436
        %v4470 = vpack.c.b16 %v4439, %v4438
        %v4471 = vpack.c.b16 %v4441, %v4440
        %v4472 = vpack.c.b16 %v4443, %v4442
        %v4473 = vpack.c.b16 %v4445, %v4444
        %v4474 = vpack.c.b16 %v4447, %v4446
        %v4475 = vpack.c.b16 %v4449, %v4448
        %v4476 = vpack.c.b16 %v4451, %v4450
        %v4477 = vpack.c.b16 %v4453, %v4452
        %4502 = vmatprep.subr.bf16.mxu0 0
        %4503 = vmatpush1.bf16.msra.mxu0 %v4454
        %4504 = vmatprep.subr.bf16.mxu0 0
        %4505 = vmatpush1.bf16.msra.mxu0 %v4455
        %4506 = vmatprep.subr.bf16.mxu0 0
        %4507 = vmatpush1.bf16.msra.mxu0 %v4456
        %4508 = vmatprep.subr.bf16.mxu0 0
        %4509 = vmatpush1.bf16.msra.mxu0 %v4457
        %4510 = vmatprep.subr.bf16.mxu0 0
        %4511 = vmatpush1.bf16.msra.mxu0 %v4458
        %4512 = vmatprep.subr.bf16.mxu0 0
        %4513 = vmatpush1.bf16.msra.mxu0 %v4459
        %4514 = vmatprep.subr.bf16.mxu0 0
        %4515 = vmatpush1.bf16.msra.mxu0 %v4460
        %4516 = vmatprep.subr.bf16.mxu0 0
        %4517 = vmatpush1.bf16.msra.mxu0 %v4461
        %4518 = vmatprep.subr.bf16.mxu0 0
        %4519 = vmatpush1.bf16.msra.mxu0 %v4462
        %4520 = vmatprep.subr.bf16.mxu0 0
        %4521 = vmatpush1.bf16.msra.mxu0 %v4463
        %4522 = vmatprep.subr.bf16.mxu0 0
        %4523 = vmatpush1.bf16.msra.mxu0 %v4464
        %4524 = vmatprep.subr.bf16.mxu0 0
        %4525 = vmatpush1.bf16.msra.mxu0 %v4465
        %4526 = vmatprep.subr.bf16.mxu0 0
        %4527 = vmatpush1.bf16.msra.mxu0 %v4466
        %4528 = vmatprep.subr.bf16.mxu0 0
        %4529 = vmatpush1.bf16.msra.mxu0 %v4467
        %4530 = vmatprep.subr.bf16.mxu0 0
        %4531 = vmatpush1.bf16.msra.mxu0 %v4468
        %4532 = vmatprep.subr.bf16.mxu0 0
        %4533 = vmatpush1.bf16.msra.mxu0 %v4469
        %4534 = vmatprep.mubr.bf16.mxu0 %v4239
        %4535 = vmatmul.mubr.bf16.gmra.mrb[0].mxu0 %v4238
        %v4536 = vpop.f32.mrb[0].mxu0
        %v4537 = vadd.f32 0.0, %v4536
        %v4538 = vpop.f32.mrb[0].mxu0
        %v4539 = vpop.f32.mrb[0].mxu0
        %v4540 = vadd.f32 0.0, %v4539
        %v4541 = vpop.f32.mrb[0].mxu0
        %4542 = vmatprep.mubr.bf16.mxu0 %v4242
        %4543 = vmatmul.mubr.bf16.gmra.mrb[0].mxu0 %v4241
        %v4544 = vpop.f32.mrb[0].mxu0
        %v4545 = vadd.f32 0.0, %v4544
        %v4546 = vpop.f32.mrb[0].mxu0
        %v4547 = vpop.f32.mrb[0].mxu0
        %v4548 = vadd.f32 0.0, %v4547
        %v4549 = vpop.f32.mrb[0].mxu0
        %4550 = vmatprep.mubr.bf16.mxu0 %v4245
        %4551 = vmatmul.mubr.bf16.gmra.mrb[0].mxu0 %v4244
        %v4552 = vpop.f32.mrb[0].mxu0
        %v4553 = vadd.f32 0.0, %v4552
        %v4554 = vpop.f32.mrb[0].mxu0
        %v4555 = vpop.f32.mrb[0].mxu0
        %v4556 = vadd.f32 0.0, %v4555
        %v4557 = vpop.f32.mrb[0].mxu0
        %4558 = vmatprep.mubr.bf16.mxu0 %v4248
        %4559 = vmatmul.mubr.bf16.gmra.mrb[0].mxu0 %v4247
        %v4560 = vpop.f32.mrb[0].mxu0
        %v4561 = vadd.f32 0.0, %v4560
        %v4562 = vpop.f32.mrb[0].mxu0
        %v4563 = vpop.f32.mrb[0].mxu0
        %v4564 = vadd.f32 0.0, %v4563
        %v4565 = vpop.f32.mrb[0].mxu0
        %4566 = vmatprep.mubr.bf16.mxu0 %v4251
        %4567 = vmatmul.mubr.bf16.gmra.mrb[0].mxu0 %v4250
        %v4568 = vpop.f32.mrb[0].mxu0
        %v4569 = vadd.f32 0.0, %v4568
        %v4570 = vpop.f32.mrb[0].mxu0
        %v4571 = vpop.f32.mrb[0].mxu0
        %v4572 = vadd.f32 0.0, %v4571
        %v4573 = vpop.f32.mrb[0].mxu0
        %4574 = vmatprep.mubr.bf16.mxu0 %v4254
        %4575 = vmatmul.mubr.bf16.gmra.mrb[0].mxu0 %v4253
        %v4576 = vpop.f32.mrb[0].mxu0
        %v4577 = vadd.f32 0.0, %v4576
        %v4578 = vpop.f32.mrb[0].mxu0
        %v4579 = vpop.f32.mrb[0].mxu0
        %v4580 = vadd.f32 0.0, %v4579
        %v4581 = vpop.f32.mrb[0].mxu0
        %4582 = vmatprep.mubr.bf16.mxu0 %v4257
        %4583 = vmatmul.mubr.bf16.gmra.mrb[0].mxu0 %v4256
        %v4584 = vpop.f32.mrb[0].mxu0
        %v4585 = vadd.f32 0.0, %v4584
        %v4586 = vpop.f32.mrb[0].mxu0
        %v4587 = vpop.f32.mrb[0].mxu0
        %v4588 = vadd.f32 0.0, %v4587
        %v4589 = vpop.f32.mrb[0].mxu0
        %4590 = vmatprep.mubr.bf16.mxu0 %v4260
        %4591 = vmatmul.mubr.bf16.gmra.mrb[0].mxu0 %v4259
        %v4592 = vpop.f32.mrb[0].mxu0
        %v4593 = vadd.f32 0.0, %v4592
        %v4594 = vpop.f32.mrb[0].mxu0
        %v4595 = vpop.f32.mrb[0].mxu0
        %v4596 = vadd.f32 0.0, %v4595
        %v4597 = vpop.f32.mrb[0].mxu0
        %4598 = vdwg.mxu0
        %4599 = vmatprep.subr.bf16.mxu0 0
        %4600 = vmatpush1.bf16.msra.mxu0 %v4470
        %4601 = vmatprep.subr.bf16.mxu0 0
        %4602 = vmatpush1.bf16.msra.mxu0 %v4471
        %4603 = vmatprep.subr.bf16.mxu0 0
        %4604 = vmatpush1.bf16.msra.mxu0 %v4472
        %4605 = vmatprep.subr.bf16.mxu0 0
        %4606 = vmatpush1.bf16.msra.mxu0 %v4473
        %4607 = vmatprep.subr.bf16.mxu0 0
        %4608 = vmatpush1.bf16.msra.mxu0 %v4474
        %4609 = vmatprep.subr.bf16.mxu0 0
        %4610 = vmatpush1.bf16.msra.mxu0 %v4475
        %4611 = vmatprep.subr.bf16.mxu0 0
        %4612 = vmatpush1.bf16.msra.mxu0 %v4476
        %4613 = vmatprep.subr.bf16.mxu0 0
        %4614 = vmatpush1.bf16.msra.mxu0 %v4477
        %4615 = vmatprep.subr.bf16.mxu0 0
        %4616 = vmatpush1.bf16.msra.mxu0 0
        %4617 = vmatprep.subr.bf16.mxu0 0
        %4618 = vmatpush1.bf16.msra.mxu0 0
        %4619 = vmatprep.subr.bf16.mxu0 0
        %4620 = vmatpush1.bf16.msra.mxu0 0
        %4621 = vmatprep.subr.bf16.mxu0 0
        %4622 = vmatpush1.bf16.msra.mxu0 0
        %4623 = vmatprep.subr.bf16.mxu0 0
        %4624 = vmatpush1.bf16.msra.mxu0 0
        %4625 = vmatprep.subr.bf16.mxu0 0
        %4626 = vmatpush1.bf16.msra.mxu0 0
        %4627 = vmatprep.subr.bf16.mxu0 0
        %4628 = vmatpush1.bf16.msra.mxu0 0
        %4629 = vmatprep.subr.bf16.mxu0 0
        %4630 = vmatpush1.bf16.msra.mxu0 0
        %4631 = vmatprep.mubr.bf16.mxu0 0
        %4632 = vmatmul.mubr.bf16.gmra.mrb[0].mxu0 %v4240
        %v4633 = vpop.f32.mrb[0].mxu0
        %v4634 = vadd.f32 %v4537, %v4633
        %v4635 = vpop.f32.mrb[0].mxu0
        %v4636 = vpop.f32.mrb[0].mxu0
        %v4637 = vadd.f32 %v4540, %v4636
        %v4638 = vpop.f32.mrb[0].mxu0
        %4639 = vmatprep.mubr.bf16.mxu0 0
        %4640 = vmatmul.mubr.bf16.gmra.mrb[0].mxu0 %v4243
        %v4641 = vpop.f32.mrb[0].mxu0
        %v4642 = vadd.f32 %v4545, %v4641
        %v4643 = vpop.f32.mrb[0].mxu0
        %v4644 = vpop.f32.mrb[0].mxu0
        %v4645 = vadd.f32 %v4548, %v4644
        %v4646 = vpop.f32.mrb[0].mxu0
        %4647 = vmatprep.mubr.bf16.mxu0 0
        %4648 = vmatmul.mubr.bf16.gmra.mrb[0].mxu0 %v4246
        %v4649 = vpop.f32.mrb[0].mxu0
        %v4650 = vadd.f32 %v4553, %v4649
        %v4651 = vpop.f32.mrb[0].mxu0
        %v4652 = vpop.f32.mrb[0].mxu0
        %v4653 = vadd.f32 %v4556, %v4652
        %v4654 = vpop.f32.mrb[0].mxu0
        %4655 = vmatprep.mubr.bf16.mxu0 0
        %4656 = vmatmul.mubr.bf16.gmra.mrb[0].mxu0 %v4249
        %v4657 = vpop.f32.mrb[0].mxu0
        %v4658 = vadd.f32 %v4561, %v4657
        %v4659 = vpop.f32.mrb[0].mxu0
        %v4660 = vpop.f32.mrb[0].mxu0
        %v4661 = vadd.f32 %v4564, %v4660
        %v4662 = vpop.f32.mrb[0].mxu0
        %4663 = vmatprep.mubr.bf16.mxu0 0
        %4664 = vmatmul.mubr.bf16.gmra.mrb[0].mxu0 %v4252
        %v4665 = vpop.f32.mrb[0].mxu0
        %v4666 = vadd.f32 %v4569, %v4665
        %v4667 = vpop.f32.mrb[0].mxu0
        %v4668 = vpop.f32.mrb[0].mxu0
        %v4669 = vadd.f32 %v4572, %v4668
        %v4670 = vpop.f32.mrb[0].mxu0
        %4671 = vmatprep.mubr.bf16.mxu0 0
        %4672 = vmatmul.mubr.bf16.gmra.mrb[0].mxu0 %v4255
        %v4673 = vpop.f32.mrb[0].mxu0
        %v4674 = vadd.f32 %v4577, %v4673
        %v4675 = vpop.f32.mrb[0].mxu0
        %v4676 = vpop.f32.mrb[0].mxu0
        %v4677 = vadd.f32 %v4580, %v4676
        %v4678 = vpop.f32.mrb[0].mxu0
        %4679 = vmatprep.mubr.bf16.mxu0 0
        %4680 = vmatmul.mubr.bf16.gmra.mrb[0].mxu0 %v4258
        %v4681 = vpop.f32.mrb[0].mxu0
        %v4682 = vadd.f32 %v4585, %v4681
        %v4683 = vpop.f32.mrb[0].mxu0
        %v4684 = vpop.f32.mrb[0].mxu0
        %v4685 = vadd.f32 %v4588, %v4684
        %v4686 = vpop.f32.mrb[0].mxu0
        %4687 = vmatprep.mubr.bf16.mxu0 0
        %4688 = vmatmul.mubr.bf16.gmra.mrb[0].mxu0 %v4261
        %v4689 = vpop.f32.mrb[0].mxu0
        %v4690 = vadd.f32 %v4593, %v4689
        %v4691 = vpop.f32.mrb[0].mxu0
        %v4692 = vpop.f32.mrb[0].mxu0
        %v4693 = vadd.f32 %v4596, %v4692
        %v4694 = vpop.f32.mrb[0].mxu0
        %4695 = vdwg.mxu0
        %v4744 = vunpack.c.l.b16 %v4262
        %v4745 = vunpack.c.l.b16 %v4263
        %v4746 = vunpack.c.l.b16 %v4264
        %v4747 = vunpack.c.l.b16 %v4265
        %v4748 = vunpack.c.l.b16 %v4266
        %v4749 = vunpack.c.l.b16 %v4267
        %v4750 = vunpack.c.l.b16 %v4268
        %v4751 = vunpack.c.l.b16 %v4269
        %v4752 = vunpack.c.l.b16 %v4270
        %v4753 = vunpack.c.l.b16 %v4271
        %v4754 = vunpack.c.l.b16 %v4272
        %v4755 = vunpack.c.l.b16 %v4273
        %v4756 = vunpack.c.l.b16 %v4274
        %v4757 = vunpack.c.l.b16 %v4275
        %v4758 = vunpack.c.l.b16 %v4276
        %v4759 = vunpack.c.l.b16 %v4277
        %v4760 = vunpack.c.l.b16 %v4278
        %v4761 = vunpack.c.l.b16 %v4279
        %v4762 = vunpack.c.l.b16 %v4280
        %v4763 = vunpack.c.l.b16 %v4281
        %v4764 = vunpack.c.l.b16 %v4282
        %v4765 = vunpack.c.l.b16 %v4283
        %v4766 = vunpack.c.l.b16 %v4284
        %v4767 = vunpack.c.l.b16 %v4285
        %v4768 = vunpack.c.l.b16 %v4286
        %v4769 = vunpack.c.l.b16 %v4287
        %v4770 = vunpack.c.l.b16 %v4288
        %v4771 = vunpack.c.l.b16 %v4289
        %v4772 = vunpack.c.l.b16 %v4290
        %v4773 = vunpack.c.l.b16 %v4291
        %v4774 = vunpack.c.l.b16 %v4292
        %v4775 = vunpack.c.l.b16 %v4293
        %v4776 = vunpack.c.l.b16 %v4294
        %v4777 = vunpack.c.l.b16 %v4295
        %v4778 = vunpack.c.l.b16 %v4296
        %v4779 = vunpack.c.l.b16 %v4297
        %v4780 = vunpack.c.l.b16 %v4298
        %v4781 = vunpack.c.l.b16 %v4299
        %v4782 = vunpack.c.l.b16 %v4300
        %v4783 = vunpack.c.l.b16 %v4301
        %v4784 = vunpack.c.l.b16 %v4302
        %v4785 = vunpack.c.l.b16 %v4303
        %v4786 = vunpack.c.l.b16 %v4304
        %v4787 = vunpack.c.l.b16 %v4305
        %v4788 = vunpack.c.l.b16 %v4306
        %v4789 = vunpack.c.l.b16 %v4307
        %v4790 = vunpack.c.l.b16 %v4308
        %v4791 = vunpack.c.l.b16 %v4309
        %v4792 = vpack.c.b16 %v4745, %v4744
        %v4793 = vpack.c.b16 %v4747, %v4746
        %v4794 = vpack.c.b16 %v4749, %v4748
        %v4795 = vpack.c.b16 %v4751, %v4750
        %v4796 = vpack.c.b16 %v4753, %v4752
        %v4797 = vpack.c.b16 %v4755, %v4754
        %v4798 = vpack.c.b16 %v4757, %v4756
        %v4799 = vpack.c.b16 %v4759, %v4758
        %v4800 = vpack.c.b16 %v4761, %v4760
        %v4801 = vpack.c.b16 %v4763, %v4762
        %v4802 = vpack.c.b16 %v4765, %v4764
        %v4803 = vpack.c.b16 %v4767, %v4766
        %v4804 = vpack.c.b16 %v4769, %v4768
        %v4805 = vpack.c.b16 %v4771, %v4770
        %v4806 = vpack.c.b16 %v4773, %v4772
        %v4807 = vpack.c.b16 %v4775, %v4774
        %v4808 = vpack.c.b16 %v4777, %v4776
        %v4809 = vpack.c.b16 %v4779, %v4778
        %v4810 = vpack.c.b16 %v4781, %v4780
        %v4811 = vpack.c.b16 %v4783, %v4782
        %v4812 = vpack.c.b16 %v4785, %v4784
        %v4813 = vpack.c.b16 %v4787, %v4786
        %v4814 = vpack.c.b16 %v4789, %v4788
        %v4815 = vpack.c.b16 %v4791, %v4790
        %4840 = vmatprep.subr.bf16.mxu0 0
        %4841 = vmatpush1.bf16.msra.mxu0 %v4792
        %4842 = vmatprep.subr.bf16.mxu0 0
        %4843 = vmatpush1.bf16.msra.mxu0 %v4793
        %4844 = vmatprep.subr.bf16.mxu0 0
        %4845 = vmatpush1.bf16.msra.mxu0 %v4794
        %4846 = vmatprep.subr.bf16.mxu0 0
        %4847 = vmatpush1.bf16.msra.mxu0 %v4795
        %4848 = vmatprep.subr.bf16.mxu0 0
        %4849 = vmatpush1.bf16.msra.mxu0 %v4796
        %4850 = vmatprep.subr.bf16.mxu0 0
        %4851 = vmatpush1.bf16.msra.mxu0 %v4797
        %4852 = vmatprep.subr.bf16.mxu0 0
        %4853 = vmatpush1.bf16.msra.mxu0 %v4798
        %4854 = vmatprep.subr.bf16.mxu0 0
        %4855 = vmatpush1.bf16.msra.mxu0 %v4799
        %4856 = vmatprep.subr.bf16.mxu0 0
        %4857 = vmatpush1.bf16.msra.mxu0 %v4800
        %4858 = vmatprep.subr.bf16.mxu0 0
        %4859 = vmatpush1.bf16.msra.mxu0 %v4801
        %4860 = vmatprep.subr.bf16.mxu0 0
        %4861 = vmatpush1.bf16.msra.mxu0 %v4802
        %4862 = vmatprep.subr.bf16.mxu0 0
        %4863 = vmatpush1.bf16.msra.mxu0 %v4803
        %4864 = vmatprep.subr.bf16.mxu0 0
        %4865 = vmatpush1.bf16.msra.mxu0 %v4804
        %4866 = vmatprep.subr.bf16.mxu0 0
        %4867 = vmatpush1.bf16.msra.mxu0 %v4805
        %4868 = vmatprep.subr.bf16.mxu0 0
        %4869 = vmatpush1.bf16.msra.mxu0 %v4806
        %4870 = vmatprep.subr.bf16.mxu0 0
        %4871 = vmatpush1.bf16.msra.mxu0 %v4807
        %4872 = vmatprep.mubr.bf16.mxu0 %v3090
        %4873 = vmatmul.mubr.bf16.gmra.mrb[0].mxu0 %v3089
        %v4874 = vpop.f32.mrb[0].mxu0
        %v4875 = vadd.f32 %v4634, %v4874
        %v4876 = vpop.f32.mrb[0].mxu0
        %v4877 = vpop.f32.mrb[0].mxu0
        %v4878 = vadd.f32 %v4637, %v4877
        %v4879 = vpop.f32.mrb[0].mxu0
        %4880 = vmatprep.mubr.bf16.mxu0 %v3093
        %4881 = vmatmul.mubr.bf16.gmra.mrb[0].mxu0 %v3092
        %v4882 = vpop.f32.mrb[0].mxu0
        %v4883 = vadd.f32 %v4642, %v4882
        %v4884 = vpop.f32.mrb[0].mxu0
        %v4885 = vpop.f32.mrb[0].mxu0
        %v4886 = vadd.f32 %v4645, %v4885
        %v4887 = vpop.f32.mrb[0].mxu0
        %4888 = vmatprep.mubr.bf16.mxu0 %v3096
        %4889 = vmatmul.mubr.bf16.gmra.mrb[0].mxu0 %v3095
        %v4890 = vpop.f32.mrb[0].mxu0
        %v4891 = vadd.f32 %v4650, %v4890
        %v4892 = vpop.f32.mrb[0].mxu0
        %v4893 = vpop.f32.mrb[0].mxu0
        %v4894 = vadd.f32 %v4653, %v4893
        %v4895 = vpop.f32.mrb[0].mxu0
        %4896 = vmatprep.mubr.bf16.mxu0 %v3099
        %4897 = vmatmul.mubr.bf16.gmra.mrb[0].mxu0 %v3098
        %v4898 = vpop.f32.mrb[0].mxu0
        %v4899 = vadd.f32 %v4658, %v4898
        %v4900 = vpop.f32.mrb[0].mxu0
        %v4901 = vpop.f32.mrb[0].mxu0
        %v4902 = vadd.f32 %v4661, %v4901
        %v4903 = vpop.f32.mrb[0].mxu0
        %4904 = vmatprep.mubr.bf16.mxu0 %v3102
        %4905 = vmatmul.mubr.bf16.gmra.mrb[0].mxu0 %v3101
        %v4906 = vpop.f32.mrb[0].mxu0
        %v4907 = vadd.f32 %v4666, %v4906
        %v4908 = vpop.f32.mrb[0].mxu0
        %v4909 = vpop.f32.mrb[0].mxu0
        %v4910 = vadd.f32 %v4669, %v4909
        %v4911 = vpop.f32.mrb[0].mxu0
        %4912 = vmatprep.mubr.bf16.mxu0 %v3105
        %4913 = vmatmul.mubr.bf16.gmra.mrb[0].mxu0 %v3104
        %v4914 = vpop.f32.mrb[0].mxu0
        %v4915 = vadd.f32 %v4674, %v4914
        %v4916 = vpop.f32.mrb[0].mxu0
        %v4917 = vpop.f32.mrb[0].mxu0
        %v4918 = vadd.f32 %v4677, %v4917
        %v4919 = vpop.f32.mrb[0].mxu0
        %4920 = vmatprep.mubr.bf16.mxu0 %v3108
        %4921 = vmatmul.mubr.bf16.gmra.mrb[0].mxu0 %v3107
        %v4922 = vpop.f32.mrb[0].mxu0
        %v4923 = vadd.f32 %v4682, %v4922
        %v4924 = vpop.f32.mrb[0].mxu0
        %v4925 = vpop.f32.mrb[0].mxu0
        %v4926 = vadd.f32 %v4685, %v4925
        %v4927 = vpop.f32.mrb[0].mxu0
        %4928 = vmatprep.mubr.bf16.mxu0 %v3111
        %4929 = vmatmul.mubr.bf16.gmra.mrb[0].mxu0 %v3110
        %v4930 = vpop.f32.mrb[0].mxu0
        %v4931 = vadd.f32 %v4690, %v4930
        %v4932 = vpop.f32.mrb[0].mxu0
        %v4933 = vpop.f32.mrb[0].mxu0
        %v4934 = vadd.f32 %v4693, %v4933
        %v4935 = vpop.f32.mrb[0].mxu0
        %4936 = vdwg.mxu0
        %4937 = vmatprep.subr.bf16.mxu0 0
        %4938 = vmatpush1.bf16.msra.mxu0 %v4808
        %4939 = vmatprep.subr.bf16.mxu0 0
        %4940 = vmatpush1.bf16.msra.mxu0 %v4809
        %4941 = vmatprep.subr.bf16.mxu0 0
        %4942 = vmatpush1.bf16.msra.mxu0 %v4810
        %4943 = vmatprep.subr.bf16.mxu0 0
        %4944 = vmatpush1.bf16.msra.mxu0 %v4811
        %4945 = vmatprep.subr.bf16.mxu0 0
        %4946 = vmatpush1.bf16.msra.mxu0 %v4812
        %4947 = vmatprep.subr.bf16.mxu0 0
        %4948 = vmatpush1.bf16.msra.mxu0 %v4813
        %4949 = vmatprep.subr.bf16.mxu0 0
        %4950 = vmatpush1.bf16.msra.mxu0 %v4814
        %4951 = vmatprep.subr.bf16.mxu0 0
        %4952 = vmatpush1.bf16.msra.mxu0 %v4815
        %4953 = vmatprep.subr.bf16.mxu0 0
        %4954 = vmatpush1.bf16.msra.mxu0 0
        %4955 = vmatprep.subr.bf16.mxu0 0
        %4956 = vmatpush1.bf16.msra.mxu0 0
        %4957 = vmatprep.subr.bf16.mxu0 0
        %4958 = vmatpush1.bf16.msra.mxu0 0
        %4959 = vmatprep.subr.bf16.mxu0 0
        %4960 = vmatpush1.bf16.msra.mxu0 0
        %4961 = vmatprep.subr.bf16.mxu0 0
        %4962 = vmatpush1.bf16.msra.mxu0 0
        %4963 = vmatprep.subr.bf16.mxu0 0
        %4964 = vmatpush1.bf16.msra.mxu0 0
        %4965 = vmatprep.subr.bf16.mxu0 0
        %4966 = vmatpush1.bf16.msra.mxu0 0
        %4967 = vmatprep.subr.bf16.mxu0 0
        %4968 = vmatpush1.bf16.msra.mxu0 0
        %4969 = vmatprep.mubr.bf16.mxu0 0
        %4970 = vmatmul.mubr.bf16.gmra.mrb[0].mxu0 %v3091
        %v4971 = vpop.f32.mrb[0].mxu0
        %v4972 = vadd.f32 %v4875, %v4971
        %v4973 = vpop.f32.mrb[0].mxu0
        %v4974 = vpop.f32.mrb[0].mxu0
        %v4975 = vadd.f32 %v4878, %v4974
        %v4976 = vpop.f32.mrb[0].mxu0
        %4977 = vmatprep.mubr.bf16.mxu0 0
        %4978 = vmatmul.mubr.bf16.gmra.mrb[0].mxu0 %v3094
        %v4979 = vpop.f32.mrb[0].mxu0
        %v4980 = vadd.f32 %v4883, %v4979
        %v4981 = vpop.f32.mrb[0].mxu0
        %v4982 = vpop.f32.mrb[0].mxu0
        %v4983 = vadd.f32 %v4886, %v4982
        %v4984 = vpop.f32.mrb[0].mxu0
        %4985 = vmatprep.mubr.bf16.mxu0 0
        %4986 = vmatmul.mubr.bf16.gmra.mrb[0].mxu0 %v3097
        %v4987 = vpop.f32.mrb[0].mxu0
        %v4988 = vadd.f32 %v4891, %v4987
        %v4989 = vpop.f32.mrb[0].mxu0
        %v4990 = vpop.f32.mrb[0].mxu0
        %v4991 = vadd.f32 %v4894, %v4990
        %v4992 = vpop.f32.mrb[0].mxu0
        %4993 = vmatprep.mubr.bf16.mxu0 0
        %4994 = vmatmul.mubr.bf16.gmra.mrb[0].mxu0 %v3100
        %v4995 = vpop.f32.mrb[0].mxu0
        %v4996 = vadd.f32 %v4899, %v4995
        %v4997 = vpop.f32.mrb[0].mxu0
        %v4998 = vpop.f32.mrb[0].mxu0
        %v4999 = vadd.f32 %v4902, %v4998
        %v5000 = vpop.f32.mrb[0].mxu0
        %5001 = vmatprep.mubr.bf16.mxu0 0
        %5002 = vmatmul.mubr.bf16.gmra.mrb[0].mxu0 %v3103
        %v5003 = vpop.f32.mrb[0].mxu0
        %v5004 = vadd.f32 %v4907, %v5003
        %v5005 = vpop.f32.mrb[0].mxu0
        %v5006 = vpop.f32.mrb[0].mxu0
        %v5007 = vadd.f32 %v4910, %v5006
        %v5008 = vpop.f32.mrb[0].mxu0
        %5009 = vmatprep.mubr.bf16.mxu0 0
        %5010 = vmatmul.mubr.bf16.gmra.mrb[0].mxu0 %v3106
        %v5011 = vpop.f32.mrb[0].mxu0
        %v5012 = vadd.f32 %v4915, %v5011
        %v5013 = vpop.f32.mrb[0].mxu0
        %v5014 = vpop.f32.mrb[0].mxu0
        %v5015 = vadd.f32 %v4918, %v5014
        %v5016 = vpop.f32.mrb[0].mxu0
        %5017 = vmatprep.mubr.bf16.mxu0 0
        %5018 = vmatmul.mubr.bf16.gmra.mrb[0].mxu0 %v3109
        %v5019 = vpop.f32.mrb[0].mxu0
        %v5020 = vadd.f32 %v4923, %v5019
        %v5021 = vpop.f32.mrb[0].mxu0
        %v5022 = vpop.f32.mrb[0].mxu0
        %v5023 = vadd.f32 %v4926, %v5022
        %v5024 = vpop.f32.mrb[0].mxu0
        %5025 = vmatprep.mubr.bf16.mxu0 0
        %5026 = vmatmul.mubr.bf16.gmra.mrb[0].mxu0 %v3112
        %v5027 = vpop.f32.mrb[0].mxu0
        %v5028 = vadd.f32 %v4931, %v5027
        %v5029 = vpop.f32.mrb[0].mxu0
        %v5030 = vpop.f32.mrb[0].mxu0
        %v5031 = vadd.f32 %v4934, %v5030
        %v5032 = vpop.f32.mrb[0].mxu0
        %5033 = vdwg.mxu0
        %v5034 = vld [vmem:[%s11] sm:$0x1]
        %v5036 = vlaneseq
        %v5037 = vshrl.u32 %v5036, 7
        %v5038 = vsub.s32 0, %v5037
        %v5039 = vrot.slane %v5034, %v5038
        %v5041 = vadd.f32 %v4972, %v5039
        %v5042 = vadd.f32 %v4975, %v5039
        %v5043 = vadd.f32 %v4980, %v5039
        %v5044 = vadd.f32 %v4983, %v5039
        %v5045 = vadd.f32 %v4988, %v5039
        %v5046 = vadd.f32 %v4991, %v5039
        %v5047 = vadd.f32 %v4996, %v5039
        %v5048 = vadd.f32 %v4999, %v5039
        %v5049 = vadd.f32 %v5004, %v5039
        %v5050 = vadd.f32 %v5007, %v5039
        %v5051 = vadd.f32 %v5012, %v5039
        %v5052 = vadd.f32 %v5015, %v5039
        %v5053 = vadd.f32 %v5020, %v5039
        %v5054 = vadd.f32 %v5023, %v5039
        %v5055 = vadd.f32 %v5028, %v5039
        %v5056 = vadd.f32 %v5031, %v5039
        %vm5057 = vcmask 15360
        %5058 = vst.msk [vmem:[%s452] sm:$0xff] %vm5057, %v5041
        %5059 = vst.msk [vmem:[%s452 + $0x8] sm:$0xff] %vm5057, %v5042
        %5060 = vst.msk [vmem:[%s452 + $0x10] sm:$0xff] %vm5057, %v5043
        %5061 = vst.msk [vmem:[%s452 + $0x18] sm:$0xff] %vm5057, %v5044
        %5062 = vst.msk [vmem:[%s452 + $0x20] sm:$0xff] %vm5057, %v5045
        %5063 = vst.msk [vmem:[%s452 + $0x28] sm:$0xff] %vm5057, %v5046
        %5064 = vst.msk [vmem:[%s452 + $0x30] sm:$0xff] %vm5057, %v5047
        %5065 = vst.msk [vmem:[%s452 + $0x38] sm:$0xff] %vm5057, %v5048
        %5066 = vst.msk [vmem:[%s452 + $0x40] sm:$0xff] %vm5057, %v5049
        %5067 = vst.msk [vmem:[%s452 + $0x48] sm:$0xff] %vm5057, %v5050
        %5068 = vst.msk [vmem:[%s452 + $0x50] sm:$0xff] %vm5057, %v5051
        %5069 = vst.msk [vmem:[%s452 + $0x58] sm:$0xff] %vm5057, %v5052
        %5070 = vst.msk [vmem:[%s452 + $0x60] sm:$0xff] %vm5057, %v5053
        %5071 = vst.msk [vmem:[%s452 + $0x68] sm:$0xff] %vm5057, %v5054
        %5072 = vst.msk [vmem:[%s452 + $0x70] sm:$0xff] %vm5057, %v5055
        %5073 = vst.msk [vmem:[%s452 + $0x78] sm:$0xff] %vm5057, %v5056
        %s5074 = smul.u32 16, %s24
        %p5075 = scmp.lt.s32.totalorder %s5074, 31
        %s5076 = scalar_select %p5075, %s5074, 31
        %s5077 = smul.addr %s5076, 8
        %s5078 = scalar_lea.vmem %s12, %s5077
        // Predicated region
        $region73: #{criticos_gemelos_forward.1} parent=67 // pred_check
          %p5079 = pneg %p304
        $region74: #{criticos_gemelos_forward.1} parent=67 // pred_check_branch
          %5081 = sbr.rel (%p5079) target = $region76
        $region75: #{criticos_gemelos_forward.1} parent=67 // pred_region
          %s5082 = smul.u32 16, %s24
        $region76: #{criticos_gemelos_forward.1} parent=67 // pred_fallthru
          _
      $region68: #{criticos_gemelos_forward.1} parent=5 // pred_fallthru
        _
      %p5083 = scmp.le.s32.totalorder 2, %s19
      // Predicated region
      $region77: #{criticos_gemelos_forward.1} parent=5 // pred_check
        %p5084 = pneg %p5083
      $region78: #{criticos_gemelos_forward.1} parent=5 // pred_check_branch
        %5086 = sbr.rel (%p5084) target = $region80
      $region79: #{criticos_gemelos_forward.1} parent=5 // pred_region
        %s5087 = ssub.s32 %s19, 2
        // Predicated region
        $region81: #{criticos_gemelos_forward.1} parent=79 // pred_check
          %p5088 = pneg %p310
        $region82: #{criticos_gemelos_forward.1} parent=79 // pred_check_branch
          %5090 = sbr.rel (%p5088) target = $region84
        $region83: #{criticos_gemelos_forward.1} parent=79 // pred_region
          %s5091 = smul.u32 16, %s25
          %p5092 = scmp.lt.s32.totalorder %s5091, 31
          %s5093 = scalar_select %p5092, %s5091, 31
          %s5094 = smul.addr %s5093, 8
          %s5095 = scalar_lea.vmem %s12, %s5094
        $region84: #{criticos_gemelos_forward.1} parent=79 // pred_fallthru
          _
      $region80: #{criticos_gemelos_forward.1} parent=5 // pred_fallthru
        _
    $region6: #{criticos_gemelos_forward.1} parent=1 // loop_footer
      %s23 = sadd.s32 1, %s19
    $region7: #{criticos_gemelos_forward.1} parent=1 // loop_footer_branch
      %18 = sbr.rel target = $region3
    $region8: #{criticos_gemelos_forward.1} parent=1 // loop_exit
      _
    %5096 = vsyncpa [#allocation3], 1
    %s5097 = scalar_lea.sflag [#allocation3], 1
    %5098 = vsyncpa %s5097, 1

</llo_original>
